<compile_context>
chip_gen: v5e
topology: v5e:2x2
jax: 0.10.0
libtpu: 0.0.40
codegen_flags: <defaults>
</compile_context>

<pallas_src>
import functools
import math

import jax
import jax.numpy as jnp
from jax.experimental import pallas as pl
from jax.experimental.pallas import tpu as pltpu

_INV_SQRT2 = 1.0 / math.sqrt(2.0)
_LANE = 128
_MAX_TILE = 16384           # upper bound on the flattened-spatial tile (lanes)


def _gelu(x):
    # exact (erf) GELU — matches torch.nn.functional.gelu default
    return 0.5 * x * (1.0 + jax.lax.erf(x * _INV_SQRT2))


def _round_up(x, m):
    return (x + m - 1) // m * m


@functools.lru_cache(maxsize=None)
def _vmem_budget_bytes():
    """Per-generation VMEM budget (v7x: 64 MiB physical, v5e/v6e: 128 MiB)."""
    cap = 64 * 1024 * 1024
    try:
        info = pltpu.get_tpu_info()
        cap = int(getattr(info, "vmem_capacity_bytes", cap) or cap)
    except Exception:
        pass
    return (cap * 3) // 4          # leave headroom for compiler scratch


def _spatial_tile(s, channels, n_streams, itemsize=4):
    """Pick (tile, padded_extent) for the flattened spatial axis.

    Keeps the double-buffered pipeline working set under ~half the per-gen
    VMEM budget and caps the tile at _MAX_TILE.  Prefers a tile that divides
    the 128-rounded extent exactly (no extra pad); otherwise pads the extent
    to a multiple of the capped tile.
    """
    per_elem = n_streams * 2 * channels * itemsize      # 2 = double buffering
    cap = (_vmem_budget_bytes() // 2) // per_elem
    cap = max(_LANE, min(_MAX_TILE, (cap // _LANE) * _LANE))
    s128 = _round_up(s, _LANE)
    if s128 <= cap:
        return s128, s128
    n = s128 // _LANE
    best = 0
    for d in range(cap // _LANE, 0, -1):                # trace-time Python only
        if n % d == 0:
            best = d * _LANE
            break
    if best >= 4 * _LANE:
        return best, s128
    return cap, _round_up(s, cap)


def _pad_spatial(x, s_pad):
    """Zero-pad the last axis of a (B, C, S) array to s_pad."""
    s = x.shape[-1]
    if s_pad == s:
        return x
    return jnp.pad(x, ((0, 0), (0, 0), (0, s_pad - s)))


def _compiler_params(semantics):
    return pltpu.CompilerParams(dimension_semantics=semantics,
                                vmem_limit_bytes=_vmem_budget_bytes())


# -----------------------------------------------------------------------------
# Kernel 1: input projection  y = W @ x + b      (x: (Cin, TS) channels-first)
# -----------------------------------------------------------------------------
def _proj_kernel(x_ref, w_ref, b_ref, o_ref):
    y = jnp.dot(w_ref[...], x_ref[0].astype(jnp.float32),
                preferred_element_type=jnp.float32)
    o_ref[0] = (y + b_ref[...]).astype(o_ref.dtype)


def input_proj(x, w, b, *, out_dtype=jnp.float32):
    """x: (B, Cin, S) -> (B, Cout, S_pad)."""
    bsz, cin, s = x.shape
    cout = w.shape[0]
    ts, s_pad = _spatial_tile(s, max(cin, cout), n_streams=2,
                              itemsize=jnp.dtype(out_dtype).itemsize)
    x = _pad_spatial(x, s_pad)
    return pl.pallas_call(
        _proj_kernel,
        out_shape=jax.ShapeDtypeStruct((bsz, cout, s_pad), out_dtype),
        grid=(bsz, s_pad // ts),
        in_specs=[
            pl.BlockSpec((1, cin, ts), lambda bb, t: (bb, 0, t)),
            pl.BlockSpec((cout, cin), lambda bb, t: (0, 0)),
            pl.BlockSpec((cout, 1), lambda bb, t: (0, 0)),
        ],
        out_specs=pl.BlockSpec((1, cout, ts), lambda bb, t: (bb, 0, t)),
        compiler_params=_compiler_params(("parallel", "parallel")),
    )(x, w, b)


# -----------------------------------------------------------------------------
# Kernel 2: fused FNO layer pointwise chain (conv folded into MLP.conv1)
#   h = gelu(w1@x + b1) ; y = w2@h + b2 + fourier ; (gelu)
# -----------------------------------------------------------------------------
def _fno_layer_kernel(x_ref, f_ref, w1_ref, b1_ref, w2_ref, b2_ref, o_ref, *,
                      final_gelu):
    x = x_ref[0].astype(jnp.float32)                  # (C, TS), stays in VMEM
    h = jnp.dot(w1_ref[...], x, preferred_element_type=jnp.float32) + b1_ref[...]
    h = _gelu(h)
    y = jnp.dot(w2_ref[...], h, preferred_element_type=jnp.float32) + b2_ref[...]
    y = y + f_ref[0].astype(jnp.float32)
    if final_gelu:
        y = _gelu(y)
    o_ref[0] = y.astype(o_ref.dtype)


def fused_fno_layer(x, f, w1, b1, w2, b2, *, final_gelu, out_dtype=jnp.float32):
    """x, f: (B, C, S) channels-first flattened activations -> (B, C, S)."""
    bsz, c, s = x.shape
    ts, s_pad = _spatial_tile(s, c, n_streams=3,
                              itemsize=jnp.dtype(out_dtype).itemsize)
    x = _pad_spatial(x, s_pad)
    f = _pad_spatial(f, s_pad)
    xspec = pl.BlockSpec((1, c, ts), lambda bb, t: (bb, 0, t))
    wspec = pl.BlockSpec((c, c), lambda bb, t: (0, 0))
    bspec = pl.BlockSpec((c, 1), lambda bb, t: (0, 0))
    kernel = functools.partial(_fno_layer_kernel, final_gelu=final_gelu)
    out = pl.pallas_call(
        kernel,
        out_shape=jax.ShapeDtypeStruct((bsz, c, s_pad), out_dtype),
        grid=(bsz, s_pad // ts),
        in_specs=[xspec, xspec, wspec, bspec, wspec, bspec],
        out_specs=xspec,
        compiler_params=_compiler_params(("parallel", "parallel")),
    )(x, f, w1, b1, w2, b2)
    return out[:, :, :s]


# -----------------------------------------------------------------------------
# Kernel 3: fused output head  y = w2 @ gelu(w1 @ x + b1) + b2
# -----------------------------------------------------------------------------
def _head_kernel(x_ref, w1_ref, b1_ref, w2_ref, b2_ref, o_ref):
    h = jnp.dot(w1_ref[...], x_ref[0].astype(jnp.float32),
                preferred_element_type=jnp.float32) + b1_ref[...]
    h = _gelu(h)
    y = jnp.dot(w2_ref[...], h, preferred_element_type=jnp.float32) + b2_ref[...]
    o_ref[0] = y.astype(o_ref.dtype)


def output_head(x, w1, b1, w2, b2):
    """x: (B, C, S) -> (B, Cout, S_pad) float32."""
    bsz, c, s = x.shape
    cout = w2.shape[0]
    ts, s_pad = _spatial_tile(s, c, n_streams=2,
                              itemsize=jnp.dtype(x.dtype).itemsize)
    x = _pad_spatial(x, s_pad)
    return pl.pallas_call(
        _head_kernel,
        out_shape=jax.ShapeDtypeStruct((bsz, cout, s_pad), jnp.float32),
        grid=(bsz, s_pad // ts),
        in_specs=[
            pl.BlockSpec((1, c, ts), lambda bb, t: (bb, 0, t)),
            pl.BlockSpec((c, c), lambda bb, t: (0, 0)),
            pl.BlockSpec((c, 1), lambda bb, t: (0, 0)),
            pl.BlockSpec((cout, c), lambda bb, t: (0, 0)),
            pl.BlockSpec((cout, 1), lambda bb, t: (0, 0)),
        ],
        out_specs=pl.BlockSpec((1, cout, ts), lambda bb, t: (bb, 0, t)),
        compiler_params=_compiler_params(("parallel", "parallel")),
    )(x, w1, b1, w2, b2)


# -----------------------------------------------------------------------------
# Kernel 4: spectral channel mixing, lane-dense layout (modes on lanes).
#   out[b, o, m] = sum_i x[b, i, m] * w[i, o, m]  (complex, 4-multiply form)
# -----------------------------------------------------------------------------
def _spectral_kernel(xr_ref, xi_ref, wr_ref, wi_ref, or_ref, oi_ref):
    xr = xr_ref[0][:, None, :]        # (Ci, 1, M2p) — broadcast over Co
    xi = xi_ref[0][:, None, :]
    wr = wr_ref[...]                  # (Ci, Co, M2p)
    wi = wi_ref[...]
    # VPU FMAs; contraction over Ci is a sum of vreg tiles (leading axis).
    or_ref[0] = jnp.sum(xr * wr - xi * wi, axis=0).astype(or_ref.dtype)
    oi_ref[0] = jnp.sum(xr * wi + xi * wr, axis=0).astype(oi_ref.dtype)


def fourier_conv2d(x, wr, wi, modes_x, modes_y):
    """FourierConv2d.forward.

    x: (B, Ci, H, W).
    wr / wi: (Ci, Co, 2*M) real/imag weights, the last axis is the flattened
    (low modes, high modes) block, M = modes_x*modes_y, (px, py) row-major.
    """
    bsz, ci, h, wdt = x.shape
    co = wr.shape[1]
    m = modes_x * modes_y
    m2 = 2 * m
    m2p = _round_up(m2, _LANE)
    wf = wdt // 2 + 1

    # TODO(synk): rfft2/irfft2 have no Pallas primitive; done with jnp.fft here.
    x_fft = jnp.fft.rfft2(x.astype(jnp.float32))                  # (B, Ci, H, Wf)
    low = x_fft[:, :, :modes_x, :modes_y].reshape(bsz, ci, m)
    high = x_fft[:, :, h - modes_x:, :modes_y].reshape(bsz, ci, m)
    xm = jnp.concatenate([low, high], axis=-1)                    # (B, Ci, 2M)
    xr = _pad_spatial(jnp.real(xm).astype(jnp.float32), m2p)
    xi = _pad_spatial(jnp.imag(xm).astype(jnp.float32), m2p)
    if m2p != m2:
        wr = jnp.pad(wr, ((0, 0), (0, 0), (0, m2p - m2)))
        wi = jnp.pad(wi, ((0, 0), (0, 0), (0, m2p - m2)))

    xspec = pl.BlockSpec((1, ci, m2p), lambda bb: (bb, 0, 0))
    wspec = pl.BlockSpec((ci, co, m2p), lambda bb: (0, 0, 0))
    ospec = pl.BlockSpec((1, co, m2p), lambda bb: (bb, 0, 0))
    out_r, out_i = pl.pallas_call(
        _spectral_kernel,
        out_shape=(jax.ShapeDtypeStruct((bsz, co, m2p), jnp.float32),
                   jax.ShapeDtypeStruct((bsz, co, m2p), jnp.float32)),
        grid=(bsz,),
        in_specs=[xspec, xspec, wspec, wspec],
        out_specs=(ospec, ospec),
        compiler_params=_compiler_params(("parallel",)),
    )(xr, xi, wr, wi)

    out = jax.lax.complex(out_r[:, :, :m2], out_i[:, :, :m2])     # (B, Co, 2M)
    low_o = out[:, :, :m].reshape(bsz, co, modes_x, modes_y)
    high_o = out[:, :, m:].reshape(bsz, co, modes_x, modes_y)
    # Assemble out_fft with a single concatenate (no scatter .at[].set()s).
    pad_y = ((0, 0), (0, 0), (0, 0), (0, wf - modes_y))
    mid = jnp.zeros((bsz, co, h - 2 * modes_x, wf), dtype=out.dtype)
    out_fft = jnp.concatenate(
        [jnp.pad(low_o, pad_y), mid, jnp.pad(high_o, pad_y)], axis=2)
    return jnp.fft.irfft2(out_fft, s=(h, wdt))


# -----------------------------------------------------------------------------
# FNO2d forward
# -----------------------------------------------------------------------------
def fno2d_forward(x, params, *, modes_x, modes_y, num_layers, padding=9,
                  act_dtype=jnp.float32):
    bsz, _, h, wdt = x.shape
    width = params["in_w"].shape[0]

    # get_grid
    gx = jnp.broadcast_to(
        jnp.linspace(0.0, 1.0, h, dtype=jnp.float32).reshape(1, 1, h, 1),
        (bsz, 1, h, wdt))
    gy = jnp.broadcast_to(
        jnp.linspace(0.0, 1.0, wdt, dtype=jnp.float32).reshape(1, 1, 1, wdt),
        (bsz, 1, h, wdt))
    x = jnp.concatenate([x.astype(jnp.float32), gx, gy], axis=1)  # (B, 3, H, W)

    s0 = h * wdt
    x = input_proj(x.reshape(bsz, 3, s0), params["in_w"], params["in_b"],
                   out_dtype=act_dtype)[:, :, :s0]
    x = x.reshape(bsz, width, h, wdt)
    x = jnp.pad(x, ((0, 0), (0, 0), (0, padding), (0, padding)))
    hp, wp = h + padding, wdt + padding
    sp = hp * wp

    for i in range(num_layers):
        # conv_layers[i] folded into MLP.conv1:  W' = m1w@cw, b' = m1w@cb + m1b
        w1 = params["m1w"][i] @ params["cw"][i]
        b1 = params["m1w"][i] @ params["cb"][i] + params["m1b"][i]
        f = fourier_conv2d(x, params["fw_r"][i], params["fw_i"][i],
                           modes_x, modes_y)
        y = fused_fno_layer(
            x.reshape(bsz, width, sp),
            f.astype(act_dtype).reshape(bsz, width, sp),
            w1, b1, params["m2w"][i], params["m2b"][i],
            final_gelu=(i < num_layers - 1), out_dtype=act_dtype)
        x = y.reshape(bsz, width, hp, wp)

    x = x[..., :h, :wdt]                                          # drop padding
    x = output_head(x.reshape(bsz, width, s0),
                    params["o1w"], params["o1b"],
                    params["o2w"], params["o2b"])[:, :, :s0]
    return x.reshape(bsz, 1, h, wdt)


# -----------------------------------------------------------------------------
# Deterministic parameter init (shapes per module __init__; values synthetic)
# -----------------------------------------------------------------------------
def init_params(key, modes_x, modes_y, width, num_layers):
    def conv_init(k, cin, cout):
        k1, k2 = jax.random.split(k)
        bound = 1.0 / math.sqrt(cin)
        w = jax.random.uniform(k1, (cout, cin), jnp.float32, -bound, bound)
        b = jax.random.uniform(k2, (cout, 1), jnp.float32, -bound, bound)
        return w, b

    m = modes_x * modes_y

    def fourier_init(k, cin, cout):
        # torch: scale * rand(cin, cout, mx, my, cfloat) for low & high.
        # Stored lane-dense as (cin, cout, 2M) real/imag (low cols, then high).
        ks = jax.random.split(k, 4)
        scale = 1.0 / (cin * cout)

        def one(kr, ki):
            wr = scale * jax.random.uniform(
                kr, (cin, cout, modes_x, modes_y), jnp.float32)
            wi = scale * jax.random.uniform(
                ki, (cin, cout, modes_x, modes_y), jnp.float32)
            return wr.reshape(cin, cout, m), wi.reshape(cin, cout, m)

        lr, li = one(ks[0], ks[1])
        hr, hi = one(ks[2], ks[3])
        return (jnp.concatenate([lr, hr], axis=-1),
                jnp.concatenate([li, hi], axis=-1))

    keys = jax.random.split(key, 6 + 5 * num_layers)
    p = {}
    p["in_w"], p["in_b"] = conv_init(keys[0], 3, width)
    p["o1w"], p["o1b"] = conv_init(keys[1], width, width)
    p["o2w"], p["o2b"] = conv_init(keys[2], width, 1)
    p["fw_r"], p["fw_i"] = [], []
    p["cw"], p["cb"] = [], []
    p["m1w"], p["m1b"], p["m2w"], p["m2b"] = [], [], [], []
    for i in range(num_layers):
        base = 6 + 5 * i
        fr, fi = fourier_init(keys[base], width, width)
        p["fw_r"].append(fr)
        p["fw_i"].append(fi)
        w, b = conv_init(keys[base + 1], width, width)
        p["cw"].append(w); p["cb"].append(b)
        w, b = conv_init(keys[base + 2], width, width)
        p["m1w"].append(w); p["m1b"].append(b)
        w, b = conv_init(keys[base + 3], width, width)
        p["m2w"].append(w); p["m2b"].append(b)
    return p


if __name__ == "__main__":
    MODES_X, MODES_Y, WIDTH, NUM_LAYERS = 4, 4, 16, 4
    B, H, W = 2, 16, 16

    key = jax.random.PRNGKey(0)
    kx, kp = jax.random.split(key)
    x = jax.random.normal(kx, (B, 1, H, W), jnp.float32)
    params = init_params(kp, MODES_X, MODES_Y, WIDTH, NUM_LAYERS)

    fwd = jax.jit(
        functools.partial(
            fno2d_forward,
            modes_x=MODES_X,
            modes_y=MODES_Y,
            num_layers=NUM_LAYERS,
            padding=9,
        )
    )
    out = jax.block_until_ready(fwd(x, params))
    assert out.shape == (B, 1, H, W), out.shape
    assert bool(jnp.all(jnp.isfinite(out)))
    print("KERNEL_OK")
</pallas_src>

<mosaic_0001>
module attributes {stable_mosaic.version = 11 : i64} {
  func.func @_proj_kernel(%arg0: i32, %arg1: i32, %arg2: memref<1x3x256xf32, #tpu.memory_space<vmem>>, %arg3: memref<16x3xf32, #tpu.memory_space<vmem>>, %arg4: memref<16x1xf32, #tpu.memory_space<vmem>>, %arg5: memref<1x16x256xf32, #tpu.memory_space<vmem>>) attributes {dimension_semantics = [#tpu.dimension_semantics<parallel>, #tpu.dimension_semantics<parallel>], iteration_bounds = array<i64: 2, 1>, scalar_prefetch = 0 : i64, scratch_operands = 0 : i64, tpu.core_type = #tpu.core_type<tc>, window_params = [{transform_indices = @transform_0, window_bounds = array<i64: 1, 3, 256>}, {pipeline_mode = #tpu.pipeline_mode<synchronous>, transform_indices = @transform_1, window_bounds = array<i64: 16, 3>}, {pipeline_mode = #tpu.pipeline_mode<synchronous>, transform_indices = @transform_2, window_bounds = array<i64: 16, 1>}, {transform_indices = @transform_3, window_bounds = array<i64: 1, 16, 256>}]} {
    %c0 = arith.constant 0 : index
    %c0_0 = arith.constant 0 : index
    %0 = vector.load %arg3[%c0, %c0_0] : memref<16x3xf32, #tpu.memory_space<vmem>>, vector<16x3xf32>
    %c0_1 = arith.constant 0 : index
    %c0_2 = arith.constant 0 : index
    %c0_3 = arith.constant 0 : index
    %1 = vector.load %arg2[%c0_1, %c0_2, %c0_3] : memref<1x3x256xf32, #tpu.memory_space<vmem>>, vector<1x3x256xf32>
    %2 = vector.shape_cast %1 : vector<1x3x256xf32> to vector<3x256xf32>
    %cst = arith.constant dense<0.000000e+00> : vector<16x256xf32>
    %3 = tpu.matmul %0, %2, %cst {dimension_numbers = #tpu.dot_dimension_numbers<[1], [0], [0], [1], [0, 0, 1, 1], [], []>} : vector<16x3xf32>, vector<3x256xf32>, vector<16x256xf32> -> vector<16x256xf32>
    %c0_4 = arith.constant 0 : index
    %c0_5 = arith.constant 0 : index
    %4 = vector.load %arg4[%c0_4, %c0_5] : memref<16x1xf32, #tpu.memory_space<vmem>>, vector<16x1xf32>
    %5 = vector.broadcast %4 : vector<16x1xf32> to vector<16x256xf32>
    %6 = arith.addf %3, %5 : vector<16x256xf32>
    %c0_6 = arith.constant 0 : index
    %c0_7 = arith.constant 0 : index
    %c0_8 = arith.constant 0 : index
    %7 = vector.load %arg5[%c0_6, %c0_7, %c0_8] : memref<1x16x256xf32, #tpu.memory_space<vmem>>, vector<1x16x256xf32>
    %8 = vector.shape_cast %7 : vector<1x16x256xf32> to vector<16x256xf32>
    %9 = vector.shape_cast %6 : vector<16x256xf32> to vector<1x16x256xf32>
    tpu.vector_store %arg5[%c0_6, %c0_7, %c0_8], %9 {strides = array<i32>} : memref<1x16x256xf32, #tpu.memory_space<vmem>>, vector<1x16x256xf32>,
    return
  }
  func.func @transform_0(%arg0: i32, %arg1: i32) -> (i32, i32, i32) {
    %c0_i32 = arith.constant 0 : i32
    %c0_i32_0 = arith.constant 0 : i32
    return %arg0, %c0_i32, %arg1 : i32, i32, i32
  }
  func.func @transform_1(%arg0: i32, %arg1: i32) -> (i32, i32) {
    %c0_i32 = arith.constant 0 : i32
    %c0_i32_0 = arith.constant 0 : i32
    %c0_i32_1 = arith.constant 0 : i32
    return %c0_i32, %c0_i32_0 : i32, i32
  }
  func.func @transform_2(%arg0: i32, %arg1: i32) -> (i32, i32) {
    %c0_i32 = arith.constant 0 : i32
    %c0_i32_0 = arith.constant 0 : i32
    %c0_i32_1 = arith.constant 0 : i32
    return %c0_i32, %c0_i32_0 : i32, i32
  }
  func.func @transform_3(%arg0: i32, %arg1: i32) -> (i32, i32, i32) {
    %c0_i32 = arith.constant 0 : i32
    %c0_i32_0 = arith.constant 0 : i32
    return %arg0, %c0_i32, %arg1 : i32, i32, i32
  }
}

module attributes {stable_mosaic.version = 11 : i64} {
  func.func @_spectral_kernel(%arg0: i32, %arg1: memref<1x16x128xf32, #tpu.memory_space<vmem>>, %arg2: memref<1x16x128xf32, #tpu.memory_space<vmem>>, %arg3: memref<16x16x128xf32, #tpu.memory_space<vmem>>, %arg4: memref<16x16x128xf32, #tpu.memory_space<vmem>>, %arg5: memref<1x16x128xf32, #tpu.memory_space<vmem>>, %arg6: memref<1x16x128xf32, #tpu.memory_space<vmem>>) attributes {dimension_semantics = [#tpu.dimension_semantics<parallel>], iteration_bounds = array<i64: 2>, scalar_prefetch = 0 : i64, scratch_operands = 0 : i64, tpu.core_type = #tpu.core_type<tc>, window_params = [{transform_indices = @transform_0, window_bounds = array<i64: 1, 16, 128>}, {transform_indices = @transform_1, window_bounds = array<i64: 1, 16, 128>}, {pipeline_mode = #tpu.pipeline_mode<synchronous>, transform_indices = @transform_2, window_bounds = array<i64: 16, 16, 128>}, {pipeline_mode = #tpu.pipeline_mode<synchronous>, transform_indices = @transform_3, window_bounds = array<i64: 16, 16, 128>}, {transform_indices = @transform_4, window_bounds = array<i64: 1, 16, 128>}, {transform_indices = @transform_5, window_bounds = array<i64: 1, 16, 128>}]} {
    %c0 = arith.constant 0 : index
    %c0_0 = arith.constant 0 : index
    %c0_1 = arith.constant 0 : index
    %0 = vector.load %arg1[%c0, %c0_0, %c0_1] : memref<1x16x128xf32, #tpu.memory_space<vmem>>, vector<1x16x128xf32>
    %1 = vector.shape_cast %0 : vector<1x16x128xf32> to vector<16x128xf32>
    %2 = vector.shape_cast %1 : vector<16x128xf32> to vector<16x1x128xf32>
    %c0_2 = arith.constant 0 : index
    %c0_3 = arith.constant 0 : index
    %c0_4 = arith.constant 0 : index
    %3 = vector.load %arg2[%c0_2, %c0_3, %c0_4] : memref<1x16x128xf32, #tpu.memory_space<vmem>>, vector<1x16x128xf32>
    %4 = vector.shape_cast %3 : vector<1x16x128xf32> to vector<16x128xf32>
    %5 = vector.shape_cast %4 : vector<16x128xf32> to vector<16x1x128xf32>
    %c0_5 = arith.constant 0 : index
    %c0_6 = arith.constant 0 : index
    %c0_7 = arith.constant 0 : index
    %6 = vector.load %arg3[%c0_5, %c0_6, %c0_7] : memref<16x16x128xf32, #tpu.memory_space<vmem>>, vector<16x16x128xf32>
    %c0_8 = arith.constant 0 : index
    %c0_9 = arith.constant 0 : index
    %c0_10 = arith.constant 0 : index
    %7 = vector.load %arg4[%c0_8, %c0_9, %c0_10] : memref<16x16x128xf32, #tpu.memory_space<vmem>>, vector<16x16x128xf32>
    %8 = vector.broadcast %2 : vector<16x1x128xf32> to vector<16x16x128xf32>
    %9 = arith.mulf %8, %6 : vector<16x16x128xf32>
    %10 = vector.broadcast %5 : vector<16x1x128xf32> to vector<16x16x128xf32>
    %11 = arith.mulf %10, %7 : vector<16x16x128xf32>
    %12 = arith.subf %9, %11 : vector<16x16x128xf32>
    %cst = arith.constant dense<0.000000e+00> : vector<16x128xf32>
    %13 = vector.multi_reduction <add>, %12, %cst [0] : vector<16x16x128xf32> to vector<16x128xf32>
    %c0_11 = arith.constant 0 : index
    %c0_12 = arith.constant 0 : index
    %c0_13 = arith.constant 0 : index
    %14 = vector.load %arg5[%c0_11, %c0_12, %c0_13] : memref<1x16x128xf32, #tpu.memory_space<vmem>>, vector<1x16x128xf32>
    %15 = vector.shape_cast %14 : vector<1x16x128xf32> to vector<16x128xf32>
    %16 = vector.shape_cast %13 : vector<16x128xf32> to vector<1x16x128xf32>
    tpu.vector_store %arg5[%c0_11, %c0_12, %c0_13], %16 {strides = array<i32>} : memref<1x16x128xf32, #tpu.memory_space<vmem>>, vector<1x16x128xf32>,
    %17 = vector.broadcast %2 : vector<16x1x128xf32> to vector<16x16x128xf32>
    %18 = arith.mulf %17, %7 : vector<16x16x128xf32>
    %19 = vector.broadcast %5 : vector<16x1x128xf32> to vector<16x16x128xf32>
    %20 = arith.mulf %19, %6 : vector<16x16x128xf32>
    %21 = arith.addf %18, %20 : vector<16x16x128xf32>
    %cst_14 = arith.constant dense<0.000000e+00> : vector<16x128xf32>
    %22 = vector.multi_reduction <add>, %21, %cst_14 [0] : vector<16x16x128xf32> to vector<16x128xf32>
    %c0_15 = arith.constant 0 : index
    %c0_16 = arith.constant 0 : index
    %c0_17 = arith.constant 0 : index
    %23 = vector.load %arg6[%c0_15, %c0_16, %c0_17] : memref<1x16x128xf32, #tpu.memory_space<vmem>>, vector<1x16x128xf32>
    %24 = vector.shape_cast %23 : vector<1x16x128xf32> to vector<16x128xf32>
    %25 = vector.shape_cast %22 : vector<16x128xf32> to vector<1x16x128xf32>
    tpu.vector_store %arg6[%c0_15, %c0_16, %c0_17], %25 {strides = array<i32>} : memref<1x16x128xf32, #tpu.memory_space<vmem>>, vector<1x16x128xf32>,
    return
  }
  func.func @transform_0(%arg0: i32) -> (i32, i32, i32) {
    %c0_i32 = arith.constant 0 : i32
    %c0_i32_0 = arith.constant 0 : i32
    %c0_i32_1 = arith.constant 0 : i32
    return %arg0, %c0_i32, %c0_i32_0 : i32, i32, i32
  }
  func.func @transform_1(%arg0: i32) -> (i32, i32, i32) {
    %c0_i32 = arith.constant 0 : i32
    %c0_i32_0 = arith.constant 0 : i32
    %c0_i32_1 = arith.constant 0 : i32
    return %arg0, %c0_i32, %c0_i32_0 : i32, i32, i32
  }
  func.func @transform_2(%arg0: i32) -> (i32, i32, i32) {
    %c0_i32 = arith.constant 0 : i32
    %c0_i32_0 = arith.constant 0 : i32
    %c0_i32_1 = arith.constant 0 : i32
    %c0_i32_2 = arith.constant 0 : i32
    return %c0_i32, %c0_i32_0, %c0_i32_1 : i32, i32, i32
  }
  func.func @transform_3(%arg0: i32) -> (i32, i32, i32) {
    %c0_i32 = arith.constant 0 : i32
    %c0_i32_0 = arith.constant 0 : i32
    %c0_i32_1 = arith.constant 0 : i32
    %c0_i32_2 = arith.constant 0 : i32
    return %c0_i32, %c0_i32_0, %c0_i32_1 : i32, i32, i32
  }
  func.func @transform_4(%arg0: i32) -> (i32, i32, i32) {
    %c0_i32 = arith.constant 0 : i32
    %c0_i32_0 = arith.constant 0 : i32
    %c0_i32_1 = arith.constant 0 : i32
    return %arg0, %c0_i32, %c0_i32_0 : i32, i32, i32
  }
  func.func @transform_5(%arg0: i32) -> (i32, i32, i32) {
    %c0_i32 = arith.constant 0 : i32
    %c0_i32_0 = arith.constant 0 : i32
    %c0_i32_1 = arith.constant 0 : i32
    return %arg0, %c0_i32, %c0_i32_0 : i32, i32, i32
  }
}

module attributes {stable_mosaic.version = 11 : i64} {
  func.func @_fno_layer_kernel(%arg0: i32, %arg1: i32, %arg2: memref<1x16x640xf32, #tpu.memory_space<vmem>>, %arg3: memref<1x16x640xf32, #tpu.memory_space<vmem>>, %arg4: memref<16x16xf32, #tpu.memory_space<vmem>>, %arg5: memref<16x1xf32, #tpu.memory_space<vmem>>, %arg6: memref<16x16xf32, #tpu.memory_space<vmem>>, %arg7: memref<16x1xf32, #tpu.memory_space<vmem>>, %arg8: memref<1x16x640xf32, #tpu.memory_space<vmem>>) attributes {dimension_semantics = [#tpu.dimension_semantics<parallel>, #tpu.dimension_semantics<parallel>], iteration_bounds = array<i64: 2, 1>, scalar_prefetch = 0 : i64, scratch_operands = 0 : i64, tpu.core_type = #tpu.core_type<tc>, window_params = [{transform_indices = @transform_0, window_bounds = array<i64: 1, 16, 640>}, {transform_indices = @transform_1, window_bounds = array<i64: 1, 16, 640>}, {pipeline_mode = #tpu.pipeline_mode<synchronous>, transform_indices = @transform_2, window_bounds = array<i64: 16, 16>}, {pipeline_mode = #tpu.pipeline_mode<synchronous>, transform_indices = @transform_3, window_bounds = array<i64: 16, 1>}, {pipeline_mode = #tpu.pipeline_mode<synchronous>, transform_indices = @transform_4, window_bounds = array<i64: 16, 16>}, {pipeline_mode = #tpu.pipeline_mode<synchronous>, transform_indices = @transform_5, window_bounds = array<i64: 16, 1>}, {transform_indices = @transform_6, window_bounds = array<i64: 1, 16, 640>}]} {
    %c0 = arith.constant 0 : index
    %c0_0 = arith.constant 0 : index
    %c0_1 = arith.constant 0 : index
    %0 = vector.load %arg2[%c0, %c0_0, %c0_1] : memref<1x16x640xf32, #tpu.memory_space<vmem>>, vector<1x16x640xf32>
    %1 = vector.shape_cast %0 : vector<1x16x640xf32> to vector<16x640xf32>
    %c0_2 = arith.constant 0 : index
    %c0_3 = arith.constant 0 : index
    %2 = vector.load %arg4[%c0_2, %c0_3] : memref<16x16xf32, #tpu.memory_space<vmem>>, vector<16x16xf32>
    %cst = arith.constant dense<0.000000e+00> : vector<16x640xf32>
    %3 = tpu.matmul %2, %1, %cst {dimension_numbers = #tpu.dot_dimension_numbers<[1], [0], [0], [1], [0, 0, 1, 1], [], []>} : vector<16x16xf32>, vector<16x640xf32>, vector<16x640xf32> -> vector<16x640xf32>
    %c0_4 = arith.constant 0 : index
    %c0_5 = arith.constant 0 : index
    %4 = vector.load %arg5[%c0_4, %c0_5] : memref<16x1xf32, #tpu.memory_space<vmem>>, vector<16x1xf32>
    %5 = vector.broadcast %4 : vector<16x1xf32> to vector<16x640xf32>
    %6 = arith.addf %3, %5 : vector<16x640xf32>
    %cst_6 = arith.constant 5.000000e-01 : f32
    %7 = vector.broadcast %cst_6 : f32 to vector<16x640xf32>
    %8 = arith.mulf %7, %6 : vector<16x640xf32>
    %cst_7 = arith.constant 0.707106769 : f32
    %9 = vector.broadcast %cst_7 : f32 to vector<16x640xf32>
    %10 = arith.mulf %6, %9 : vector<16x640xf32>
    %11 = math.erf %10 : vector<16x640xf32>
    %cst_8 = arith.constant 1.000000e+00 : f32
    %12 = vector.broadcast %cst_8 : f32 to vector<16x640xf32>
    %13 = arith.addf %12, %11 : vector<16x640xf32>
    %14 = arith.mulf %8, %13 : vector<16x640xf32>
    %c0_9 = arith.constant 0 : index
    %c0_10 = arith.constant 0 : index
    %15 = vector.load %arg6[%c0_9, %c0_10] : memref<16x16xf32, #tpu.memory_space<vmem>>, vector<16x16xf32>
    %cst_11 = arith.constant dense<0.000000e+00> : vector<16x640xf32>
    %16 = tpu.matmul %15, %14, %cst_11 {dimension_numbers = #tpu.dot_dimension_numbers<[1], [0], [0], [1], [0, 0, 1, 1], [], []>} : vector<16x16xf32>, vector<16x640xf32>, vector<16x640xf32> -> vector<16x640xf32>
    %c0_12 = arith.constant 0 : index
    %c0_13 = arith.constant 0 : index
    %17 = vector.load %arg7[%c0_12, %c0_13] : memref<16x1xf32, #tpu.memory_space<vmem>>, vector<16x1xf32>
    %18 = vector.broadcast %17 : vector<16x1xf32> to vector<16x640xf32>
    %19 = arith.addf %16, %18 : vector<16x640xf32>
    %c0_14 = arith.constant 0 : index
    %c0_15 = arith.constant 0 : index
    %c0_16 = arith.constant 0 : index
    %20 = vector.load %arg3[%c0_14, %c0_15, %c0_16] : memref<1x16x640xf32, #tpu.memory_space<vmem>>, vector<1x16x640xf32>
    %21 = vector.shape_cast %20 : vector<1x16x640xf32> to vector<16x640xf32>
    %22 = arith.addf %19, %21 : vector<16x640xf32>
    %cst_17 = arith.constant 5.000000e-01 : f32
    %23 = vector.broadcast %cst_17 : f32 to vector<16x640xf32>
    %24 = arith.mulf %23, %22 : vector<16x640xf32>
    %cst_18 = arith.constant 0.707106769 : f32
    %25 = vector.broadcast %cst_18 : f32 to vector<16x640xf32>
    %26 = arith.mulf %22, %25 : vector<16x640xf32>
    %27 = math.erf %26 : vector<16x640xf32>
    %cst_19 = arith.constant 1.000000e+00 : f32
    %28 = vector.broadcast %cst_19 : f32 to vector<16x640xf32>
    %29 = arith.addf %28, %27 : vector<16x640xf32>
    %30 = arith.mulf %24, %29 : vector<16x640xf32>
    %c0_20 = arith.constant 0 : index
    %c0_21 = arith.constant 0 : index
    %c0_22 = arith.constant 0 : index
    %31 = vector.load %arg8[%c0_20, %c0_21, %c0_22] : memref<1x16x640xf32, #tpu.memory_space<vmem>>, vector<1x16x640xf32>
    %32 = vector.shape_cast %31 : vector<1x16x640xf32> to vector<16x640xf32>
    %33 = vector.shape_cast %30 : vector<16x640xf32> to vector<1x16x640xf32>
    tpu.vector_store %arg8[%c0_20, %c0_21, %c0_22], %33 {strides = array<i32>} : memref<1x16x640xf32, #tpu.memory_space<vmem>>, vector<1x16x640xf32>,
    return
  }
  func.func @transform_0(%arg0: i32, %arg1: i32) -> (i32, i32, i32) {
    %c0_i32 = arith.constant 0 : i32
    %c0_i32_0 = arith.constant 0 : i32
    return %arg0, %c0_i32, %arg1 : i32, i32, i32
  }
  func.func @transform_1(%arg0: i32, %arg1: i32) -> (i32, i32, i32) {
    %c0_i32 = arith.constant 0 : i32
    %c0_i32_0 = arith.constant 0 : i32
    return %arg0, %c0_i32, %arg1 : i32, i32, i32
  }
  func.func @transform_2(%arg0: i32, %arg1: i32) -> (i32, i32) {
    %c0_i32 = arith.constant 0 : i32
    %c0_i32_0 = arith.constant 0 : i32
    %c0_i32_1 = arith.constant 0 : i32
    return %c0_i32, %c0_i32_0 : i32, i32
  }
  func.func @transform_3(%arg0: i32, %arg1: i32) -> (i32, i32) {
    %c0_i32 = arith.constant 0 : i32
    %c0_i32_0 = arith.constant 0 : i32
    %c0_i32_1 = arith.constant 0 : i32
    return %c0_i32, %c0_i32_0 : i32, i32
  }
  func.func @transform_4(%arg0: i32, %arg1: i32) -> (i32, i32) {
    %c0_i32 = arith.constant 0 : i32
    %c0_i32_0 = arith.constant 0 : i32
    %c0_i32_1 = arith.constant 0 : i32
    return %c0_i32, %c0_i32_0 : i32, i32
  }
  func.func @transform_5(%arg0: i32, %arg1: i32) -> (i32, i32) {
    %c0_i32 = arith.constant 0 : i32
    %c0_i32_0 = arith.constant 0 : i32
    %c0_i32_1 = arith.constant 0 : i32
    return %c0_i32, %c0_i32_0 : i32, i32
  }
  func.func @transform_6(%arg0: i32, %arg1: i32) -> (i32, i32, i32) {
    %c0_i32 = arith.constant 0 : i32
    %c0_i32_0 = arith.constant 0 : i32
    return %arg0, %c0_i32, %arg1 : i32, i32, i32
  }
}

module attributes {stable_mosaic.version = 11 : i64} {
  func.func @_fno_layer_kernel(%arg0: i32, %arg1: i32, %arg2: memref<1x16x640xf32, #tpu.memory_space<vmem>>, %arg3: memref<1x16x640xf32, #tpu.memory_space<vmem>>, %arg4: memref<16x16xf32, #tpu.memory_space<vmem>>, %arg5: memref<16x1xf32, #tpu.memory_space<vmem>>, %arg6: memref<16x16xf32, #tpu.memory_space<vmem>>, %arg7: memref<16x1xf32, #tpu.memory_space<vmem>>, %arg8: memref<1x16x640xf32, #tpu.memory_space<vmem>>) attributes {dimension_semantics = [#tpu.dimension_semantics<parallel>, #tpu.dimension_semantics<parallel>], iteration_bounds = array<i64: 2, 1>, scalar_prefetch = 0 : i64, scratch_operands = 0 : i64, tpu.core_type = #tpu.core_type<tc>, window_params = [{transform_indices = @transform_0, window_bounds = array<i64: 1, 16, 640>}, {transform_indices = @transform_1, window_bounds = array<i64: 1, 16, 640>}, {pipeline_mode = #tpu.pipeline_mode<synchronous>, transform_indices = @transform_2, window_bounds = array<i64: 16, 16>}, {pipeline_mode = #tpu.pipeline_mode<synchronous>, transform_indices = @transform_3, window_bounds = array<i64: 16, 1>}, {pipeline_mode = #tpu.pipeline_mode<synchronous>, transform_indices = @transform_4, window_bounds = array<i64: 16, 16>}, {pipeline_mode = #tpu.pipeline_mode<synchronous>, transform_indices = @transform_5, window_bounds = array<i64: 16, 1>}, {transform_indices = @transform_6, window_bounds = array<i64: 1, 16, 640>}]} {
    %c0 = arith.constant 0 : index
    %c0_0 = arith.constant 0 : index
    %c0_1 = arith.constant 0 : index
    %0 = vector.load %arg2[%c0, %c0_0, %c0_1] : memref<1x16x640xf32, #tpu.memory_space<vmem>>, vector<1x16x640xf32>
    %1 = vector.shape_cast %0 : vector<1x16x640xf32> to vector<16x640xf32>
    %c0_2 = arith.constant 0 : index
    %c0_3 = arith.constant 0 : index
    %2 = vector.load %arg4[%c0_2, %c0_3] : memref<16x16xf32, #tpu.memory_space<vmem>>, vector<16x16xf32>
    %cst = arith.constant dense<0.000000e+00> : vector<16x640xf32>
    %3 = tpu.matmul %2, %1, %cst {dimension_numbers = #tpu.dot_dimension_numbers<[1], [0], [0], [1], [0, 0, 1, 1], [], []>} : vector<16x16xf32>, vector<16x640xf32>, vector<16x640xf32> -> vector<16x640xf32>
    %c0_4 = arith.constant 0 : index
    %c0_5 = arith.constant 0 : index
    %4 = vector.load %arg5[%c0_4, %c0_5] : memref<16x1xf32, #tpu.memory_space<vmem>>, vector<16x1xf32>
    %5 = vector.broadcast %4 : vector<16x1xf32> to vector<16x640xf32>
    %6 = arith.addf %3, %5 : vector<16x640xf32>
    %cst_6 = arith.constant 5.000000e-01 : f32
    %7 = vector.broadcast %cst_6 : f32 to vector<16x640xf32>
    %8 = arith.mulf %7, %6 : vector<16x640xf32>
    %cst_7 = arith.constant 0.707106769 : f32
    %9 = vector.broadcast %cst_7 : f32 to vector<16x640xf32>
    %10 = arith.mulf %6, %9 : vector<16x640xf32>
    %11 = math.erf %10 : vector<16x640xf32>
    %cst_8 = arith.constant 1.000000e+00 : f32
    %12 = vector.broadcast %cst_8 : f32 to vector<16x640xf32>
    %13 = arith.addf %12, %11 : vector<16x640xf32>
    %14 = arith.mulf %8, %13 : vector<16x640xf32>
    %c0_9 = arith.constant 0 : index
    %c0_10 = arith.constant 0 : index
    %15 = vector.load %arg6[%c0_9, %c0_10] : memref<16x16xf32, #tpu.memory_space<vmem>>, vector<16x16xf32>
    %cst_11 = arith.constant dense<0.000000e+00> : vector<16x640xf32>
    %16 = tpu.matmul %15, %14, %cst_11 {dimension_numbers = #tpu.dot_dimension_numbers<[1], [0], [0], [1], [0, 0, 1, 1], [], []>} : vector<16x16xf32>, vector<16x640xf32>, vector<16x640xf32> -> vector<16x640xf32>
    %c0_12 = arith.constant 0 : index
    %c0_13 = arith.constant 0 : index
    %17 = vector.load %arg7[%c0_12, %c0_13] : memref<16x1xf32, #tpu.memory_space<vmem>>, vector<16x1xf32>
    %18 = vector.broadcast %17 : vector<16x1xf32> to vector<16x640xf32>
    %19 = arith.addf %16, %18 : vector<16x640xf32>
    %c0_14 = arith.constant 0 : index
    %c0_15 = arith.constant 0 : index
    %c0_16 = arith.constant 0 : index
    %20 = vector.load %arg3[%c0_14, %c0_15, %c0_16] : memref<1x16x640xf32, #tpu.memory_space<vmem>>, vector<1x16x640xf32>
    %21 = vector.shape_cast %20 : vector<1x16x640xf32> to vector<16x640xf32>
    %22 = arith.addf %19, %21 : vector<16x640xf32>
    %c0_17 = arith.constant 0 : index
    %c0_18 = arith.constant 0 : index
    %c0_19 = arith.constant 0 : index
    %23 = vector.load %arg8[%c0_17, %c0_18, %c0_19] : memref<1x16x640xf32, #tpu.memory_space<vmem>>, vector<1x16x640xf32>
    %24 = vector.shape_cast %23 : vector<1x16x640xf32> to vector<16x640xf32>
    %25 = vector.shape_cast %22 : vector<16x640xf32> to vector<1x16x640xf32>
    tpu.vector_store %arg8[%c0_17, %c0_18, %c0_19], %25 {strides = array<i32>} : memref<1x16x640xf32, #tpu.memory_space<vmem>>, vector<1x16x640xf32>,
    return
  }
  func.func @transform_0(%arg0: i32, %arg1: i32) -> (i32, i32, i32) {
    %c0_i32 = arith.constant 0 : i32
    %c0_i32_0 = arith.constant 0 : i32
    return %arg0, %c0_i32, %arg1 : i32, i32, i32
  }
  func.func @transform_1(%arg0: i32, %arg1: i32) -> (i32, i32, i32) {
    %c0_i32 = arith.constant 0 : i32
    %c0_i32_0 = arith.constant 0 : i32
    return %arg0, %c0_i32, %arg1 : i32, i32, i32
  }
  func.func @transform_2(%arg0: i32, %arg1: i32) -> (i32, i32) {
    %c0_i32 = arith.constant 0 : i32
    %c0_i32_0 = arith.constant 0 : i32
    %c0_i32_1 = arith.constant 0 : i32
    return %c0_i32, %c0_i32_0 : i32, i32
  }
  func.func @transform_3(%arg0: i32, %arg1: i32) -> (i32, i32) {
    %c0_i32 = arith.constant 0 : i32
    %c0_i32_0 = arith.constant 0 : i32
    %c0_i32_1 = arith.constant 0 : i32
    return %c0_i32, %c0_i32_0 : i32, i32
  }
  func.func @transform_4(%arg0: i32, %arg1: i32) -> (i32, i32) {
    %c0_i32 = arith.constant 0 : i32
    %c0_i32_0 = arith.constant 0 : i32
    %c0_i32_1 = arith.constant 0 : i32
    return %c0_i32, %c0_i32_0 : i32, i32
  }
  func.func @transform_5(%arg0: i32, %arg1: i32) -> (i32, i32) {
    %c0_i32 = arith.constant 0 : i32
    %c0_i32_0 = arith.constant 0 : i32
    %c0_i32_1 = arith.constant 0 : i32
    return %c0_i32, %c0_i32_0 : i32, i32
  }
  func.func @transform_6(%arg0: i32, %arg1: i32) -> (i32, i32, i32) {
    %c0_i32 = arith.constant 0 : i32
    %c0_i32_0 = arith.constant 0 : i32
    return %arg0, %c0_i32, %arg1 : i32, i32, i32
  }
}

module attributes {stable_mosaic.version = 11 : i64} {
  func.func @_head_kernel(%arg0: i32, %arg1: i32, %arg2: memref<1x16x256xf32, #tpu.memory_space<vmem>>, %arg3: memref<16x16xf32, #tpu.memory_space<vmem>>, %arg4: memref<16x1xf32, #tpu.memory_space<vmem>>, %arg5: memref<1x16xf32, #tpu.memory_space<vmem>>, %arg6: memref<1x1xf32, #tpu.memory_space<vmem>>, %arg7: memref<1x1x256xf32, #tpu.memory_space<vmem>>) attributes {dimension_semantics = [#tpu.dimension_semantics<parallel>, #tpu.dimension_semantics<parallel>], iteration_bounds = array<i64: 2, 1>, scalar_prefetch = 0 : i64, scratch_operands = 0 : i64, tpu.core_type = #tpu.core_type<tc>, window_params = [{transform_indices = @transform_0, window_bounds = array<i64: 1, 16, 256>}, {pipeline_mode = #tpu.pipeline_mode<synchronous>, transform_indices = @transform_1, window_bounds = array<i64: 16, 16>}, {pipeline_mode = #tpu.pipeline_mode<synchronous>, transform_indices = @transform_2, window_bounds = array<i64: 16, 1>}, {pipeline_mode = #tpu.pipeline_mode<synchronous>, transform_indices = @transform_3, window_bounds = array<i64: 1, 16>}, {pipeline_mode = #tpu.pipeline_mode<synchronous>, transform_indices = @transform_4, window_bounds = array<i64: 1, 1>}, {transform_indices = @transform_5, window_bounds = array<i64: 1, 1, 256>}]} {
    %c0 = arith.constant 0 : index
    %c0_0 = arith.constant 0 : index
    %0 = vector.load %arg3[%c0, %c0_0] : memref<16x16xf32, #tpu.memory_space<vmem>>, vector<16x16xf32>
    %c0_1 = arith.constant 0 : index
    %c0_2 = arith.constant 0 : index
    %c0_3 = arith.constant 0 : index
    %1 = vector.load %arg2[%c0_1, %c0_2, %c0_3] : memref<1x16x256xf32, #tpu.memory_space<vmem>>, vector<1x16x256xf32>
    %2 = vector.shape_cast %1 : vector<1x16x256xf32> to vector<16x256xf32>
    %cst = arith.constant dense<0.000000e+00> : vector<16x256xf32>
    %3 = tpu.matmul %0, %2, %cst {dimension_numbers = #tpu.dot_dimension_numbers<[1], [0], [0], [1], [0, 0, 1, 1], [], []>} : vector<16x16xf32>, vector<16x256xf32>, vector<16x256xf32> -> vector<16x256xf32>
    %c0_4 = arith.constant 0 : index
    %c0_5 = arith.constant 0 : index
    %4 = vector.load %arg4[%c0_4, %c0_5] : memref<16x1xf32, #tpu.memory_space<vmem>>, vector<16x1xf32>
    %5 = vector.broadcast %4 : vector<16x1xf32> to vector<16x256xf32>
    %6 = arith.addf %3, %5 : vector<16x256xf32>
    %cst_6 = arith.constant 5.000000e-01 : f32
    %7 = vector.broadcast %cst_6 : f32 to vector<16x256xf32>
    %8 = arith.mulf %7, %6 : vector<16x256xf32>
    %cst_7 = arith.constant 0.707106769 : f32
    %9 = vector.broadcast %cst_7 : f32 to vector<16x256xf32>
    %10 = arith.mulf %6, %9 : vector<16x256xf32>
    %11 = math.erf %10 : vector<16x256xf32>
    %cst_8 = arith.constant 1.000000e+00 : f32
    %12 = vector.broadcast %cst_8 : f32 to vector<16x256xf32>
    %13 = arith.addf %12, %11 : vector<16x256xf32>
    %14 = arith.mulf %8, %13 : vector<16x256xf32>
    %c0_9 = arith.constant 0 : index
    %c0_10 = arith.constant 0 : index
    %15 = vector.load %arg5[%c0_9, %c0_10] : memref<1x16xf32, #tpu.memory_space<vmem>>, vector<1x16xf32>
    %cst_11 = arith.constant dense<0.000000e+00> : vector<1x256xf32>
    %16 = tpu.matmul %15, %14, %cst_11 {dimension_numbers = #tpu.dot_dimension_numbers<[1], [0], [0], [1], [0, 0, 1, 1], [], []>} : vector<1x16xf32>, vector<16x256xf32>, vector<1x256xf32> -> vector<1x256xf32>
    %c0_12 = arith.constant 0 : index
    %c0_13 = arith.constant 0 : index
    %17 = vector.load %arg6[%c0_12, %c0_13] : memref<1x1xf32, #tpu.memory_space<vmem>>, vector<1x1xf32>
    %18 = vector.broadcast %17 : vector<1x1xf32> to vector<1x256xf32>
    %19 = arith.addf %16, %18 : vector<1x256xf32>
    %c0_14 = arith.constant 0 : index
    %c0_15 = arith.constant 0 : index
    %c0_16 = arith.constant 0 : index
    %20 = vector.load %arg7[%c0_14, %c0_15, %c0_16] : memref<1x1x256xf32, #tpu.memory_space<vmem>>, vector<1x1x256xf32>
    %21 = vector.shape_cast %20 : vector<1x1x256xf32> to vector<1x256xf32>
    %22 = vector.shape_cast %19 : vector<1x256xf32> to vector<1x1x256xf32>
    tpu.vector_store %arg7[%c0_14, %c0_15, %c0_16], %22 {strides = array<i32>} : memref<1x1x256xf32, #tpu.memory_space<vmem>>, vector<1x1x256xf32>,
    return
  }
  func.func @transform_0(%arg0: i32, %arg1: i32) -> (i32, i32, i32) {
    %c0_i32 = arith.constant 0 : i32
    %c0_i32_0 = arith.constant 0 : i32
    return %arg0, %c0_i32, %arg1 : i32, i32, i32
  }
  func.func @transform_1(%arg0: i32, %arg1: i32) -> (i32, i32) {
    %c0_i32 = arith.constant 0 : i32
    %c0_i32_0 = arith.constant 0 : i32
    %c0_i32_1 = arith.constant 0 : i32
    return %c0_i32, %c0_i32_0 : i32, i32
  }
  func.func @transform_2(%arg0: i32, %arg1: i32) -> (i32, i32) {
    %c0_i32 = arith.constant 0 : i32
    %c0_i32_0 = arith.constant 0 : i32
    %c0_i32_1 = arith.constant 0 : i32
    return %c0_i32, %c0_i32_0 : i32, i32
  }
  func.func @transform_3(%arg0: i32, %arg1: i32) -> (i32, i32) {
    %c0_i32 = arith.constant 0 : i32
    %c0_i32_0 = arith.constant 0 : i32
    %c0_i32_1 = arith.constant 0 : i32
    return %c0_i32, %c0_i32_0 : i32, i32
  }
  func.func @transform_4(%arg0: i32, %arg1: i32) -> (i32, i32) {
    %c0_i32 = arith.constant 0 : i32
    %c0_i32_0 = arith.constant 0 : i32
    %c0_i32_1 = arith.constant 0 : i32
    return %c0_i32, %c0_i32_0 : i32, i32
  }
  func.func @transform_5(%arg0: i32, %arg1: i32) -> (i32, i32, i32) {
    %c0_i32 = arith.constant 0 : i32
    %c0_i32_0 = arith.constant 0 : i32
    return %arg0, %c0_i32, %arg1 : i32, i32, i32
  }
}

</mosaic_0001>

<llo_original>
// kernel: fno2d_forward.10
$region0: #{fno2d_forward.10}
  #allocation0 [shape = 'u32[]', space=smem, size = 0x4, offset = 0x4, fixed_abs, tag = 'smem constant byte address 0x4 - core index']
  #allocation1 [shape = 'u32[72,128]{1,0:T(1,128)}', space=vmem, size = 0x9000, scoped, tag = 'internal scratch']
  %s0 = inlined_call_operand.vmem [shape: f32[2,3,256], index: 0, kind: input, shape index: {}]
  %s1 = inlined_call_operand.vmem [shape: f32[16,3], index: 1, kind: input, shape index: {}]
  %s2 = inlined_call_operand.vmem [shape: f32[16,1], index: 2, kind: input, shape index: {}]
  %s3 = inlined_call_operand.vmem [shape: f32[2,16,256], index: 3, kind: output, shape index: {}]
  %s4 = sld [smem:[#allocation0]]
  $region45: #{fno2d_forward.10} parent=0
    _
  %s6 = ssub.s32 1, %s4
  %s7 = scalar_select 0, %s6, %s4
  loop: start=0, step=1, limit=4
  $region2: #{fno2d_forward.10} parent=0 // loop_pre_header
    _
  $region3: #{fno2d_forward.10} parent=0 // loop_header
    %s9 = sphi 0, %s13
    %p10 = scmp.ge.s32.totalorder %s9, 4
    %s16 = sphi 0, %s28
    %s17 = sphi 0, %s24
    %s18 = sphi 0, %s16
    %s19 = sphi 0, %s17
    %s20 = sphi 0, %s18
    %s21 = sphi 0, %s19
    %s33 = sphi 0, %s35
    %s36 = sphi 0, %s33
    %s37 = sphi 0, %s36
    %s53 = sphi 0, %s37
    %s57 = sphi 0, %s57
    %s59 = sphi 0, %s57
    %s60 = sphi 0, %s59
    %s74 = sphi 0, %s60
    %s78 = sphi 0, %s78
    %s80 = sphi 0, %s78
    %s81 = sphi 0, %s80
    %s95 = sphi 0, %s81
    %s103 = sphi 0, %s105
    %s106 = sphi 0, %s103
    %s107 = sphi 0, %s106
    %s123 = sphi 0, %s107
  $region4: #{fno2d_forward.10} parent=0 // loop_header_branch
    %12 = sbr.rel (%p10) target = $region8
  $region5: #{fno2d_forward.10} parent=0 // loop_body
    %s14 = ssub.s32 %s9, 1
    %s15 = ssub.s32 %s9, 2
    %s22 = sadd.s32 1, %s17
    %p23 = scmp.ge.s32.totalorder %s22, 1
    %s24 = scalar_select %p23, 0, %s22
    %s25 = sadd.s32 1, %s16
    %s26 = scalar_select %p23, %s25, %s16
    %p27 = scmp.ge.s32.totalorder %s26, 2
    %s28 = scalar_select %p27, 0, %s26
    %s29 = ssub.s32 %s16, %s28
    %s30 = ssub.s32 %s17, %s24
    %s31 = sor.u32 %s29, %s30
    %p32 = scmp.eq.s32.totalorder %s31, 0
    %s34 = sadd.s32 %s33, 1
    %s35 = scalar_select %p32, %s33, %s34
    %p38 = pneg %p32
    %p39 = scmp.eq.s32.totalorder %s9, 1
    %p40 = por %p38, %p39
    %p41 = scmp.ne.s32.totalorder %s33, %s36
    %p42 = scmp.eq.s32.totalorder %s9, 0
    %p43 = por %p41, %p42
    %p44 = scmp.ne.s32.totalorder %s33, %s36
    %p45 = scmp.eq.s32.totalorder %s14, 1
    %p46 = por %p44, %p45
    %p47 = scmp.ne.s32.totalorder %s36, %s37
    %p48 = scmp.eq.s32.totalorder %s14, 0
    %p49 = por %p47, %p48
    %p50 = scmp.ne.s32.totalorder %s36, %s37
    %p51 = scmp.eq.s32.totalorder %s15, 1
    %p52 = por %p50, %p51
    %p54 = scmp.ne.s32.totalorder %s37, %s53
    %p55 = scmp.eq.s32.totalorder %s15, 0
    %p56 = por %p54, %p55
    %s58 = sadd.s32 %s57, 1
    %p61 = scmp.eq.s32.totalorder %s9, 1
    %p62 = scmp.ne.s32.totalorder %s57, %s59
    %p63 = scmp.eq.s32.totalorder %s9, 0
    %p64 = por %p62, %p63
    %p65 = scmp.ne.s32.totalorder %s57, %s59
    %p66 = scmp.eq.s32.totalorder %s14, 1
    %p67 = por %p65, %p66
    %p68 = scmp.ne.s32.totalorder %s59, %s60
    %p69 = scmp.eq.s32.totalorder %s14, 0
    %p70 = por %p68, %p69
    %p71 = scmp.ne.s32.totalorder %s59, %s60
    %p72 = scmp.eq.s32.totalorder %s15, 1
    %p73 = por %p71, %p72
    %p75 = scmp.ne.s32.totalorder %s60, %s74
    %p76 = scmp.eq.s32.totalorder %s15, 0
    %p77 = por %p75, %p76
    %s79 = sadd.s32 %s78, 1
    %p82 = scmp.eq.s32.totalorder %s9, 1
    %p83 = scmp.ne.s32.totalorder %s78, %s80
    %p84 = scmp.eq.s32.totalorder %s9, 0
    %p85 = por %p83, %p84
    %p86 = scmp.ne.s32.totalorder %s78, %s80
    %p87 = scmp.eq.s32.totalorder %s14, 1
    %p88 = por %p86, %p87
    %p89 = scmp.ne.s32.totalorder %s80, %s81
    %p90 = scmp.eq.s32.totalorder %s14, 0
    %p91 = por %p89, %p90
    %p92 = scmp.ne.s32.totalorder %s80, %s81
    %p93 = scmp.eq.s32.totalorder %s15, 1
    %p94 = por %p92, %p93
    %p96 = scmp.ne.s32.totalorder %s81, %s95
    %p97 = scmp.eq.s32.totalorder %s15, 0
    %p98 = por %p96, %p97
    %s99 = ssub.s32 %s16, %s28
    %s100 = ssub.s32 %s17, %s24
    %s101 = sor.u32 %s99, %s100
    %p102 = scmp.eq.s32.totalorder %s101, 0
    %s104 = sadd.s32 %s103, 1
    %s105 = scalar_select %p102, %s103, %s104
    %p108 = pneg %p102
    %p109 = scmp.eq.s32.totalorder %s9, 1
    %p110 = por %p108, %p109
    %p111 = scmp.ne.s32.totalorder %s103, %s106
    %p112 = scmp.eq.s32.totalorder %s9, 0
    %p113 = por %p111, %p112
    %p114 = scmp.ne.s32.totalorder %s103, %s106
    %p115 = scmp.eq.s32.totalorder %s14, 1
    %p116 = por %p114, %p115
    %p117 = scmp.ne.s32.totalorder %s106, %s107
    %p118 = scmp.eq.s32.totalorder %s14, 0
    %p119 = por %p117, %p118
    %p120 = scmp.ne.s32.totalorder %s106, %s107
    %p121 = scmp.eq.s32.totalorder %s15, 1
    %p122 = por %p120, %p121
    %p124 = scmp.ne.s32.totalorder %s107, %s123
    %p125 = scmp.eq.s32.totalorder %s15, 0
    %p126 = por %p124, %p125
    %p127 = scmp.le.s32.totalorder 1, %s9
    %p128 = scmp.lt.s32.totalorder %s9, 3
    %p129 = pnand %p127, %p128
    %p130 = pneg %p129
    // Predicated region
    $region9: #{fno2d_forward.10} parent=5 // pred_check
      _
    $region10: #{fno2d_forward.10} parent=5 // pred_check_branch
      %132 = sbr.rel (%p129) target = $region12
    $region11: #{fno2d_forward.10} parent=5 // pred_region
      %s133 = ssub.s32 %s9, 1
      // Predicated region
      $region13: #{fno2d_forward.10} parent=11 // pred_check
        %p134 = pneg %p70
      $region14: #{fno2d_forward.10} parent=11 // pred_check_branch
        %136 = sbr.rel (%p134) target = $region16
      $region15: #{fno2d_forward.10} parent=11 // pred_region
        _
      $region16: #{fno2d_forward.10} parent=11 // pred_fallthru
        _
      // Predicated region
      $region17: #{fno2d_forward.10} parent=11 // pred_check
        %p137 = pneg %p91
      $region18: #{fno2d_forward.10} parent=11 // pred_check_branch
        %139 = sbr.rel (%p137) target = $region20
      $region19: #{fno2d_forward.10} parent=11 // pred_region
        _
      $region20: #{fno2d_forward.10} parent=11 // pred_fallthru
        _
    $region12: #{fno2d_forward.10} parent=5 // pred_fallthru
      _
    %p140 = scmp.lt.s32.totalorder %s9, 2
    // Predicated region
    $region21: #{fno2d_forward.10} parent=5 // pred_check
      %p141 = pneg %p140
    $region22: #{fno2d_forward.10} parent=5 // pred_check_branch
      %143 = sbr.rel (%p141) target = $region24
    $region23: #{fno2d_forward.10} parent=5 // pred_region
      // Predicated region
      $region25: #{fno2d_forward.10} parent=23 // pred_check
        %p144 = pneg %p43
      $region26: #{fno2d_forward.10} parent=23 // pred_check_branch
        %146 = sbr.rel (%p144) target = $region28
      $region27: #{fno2d_forward.10} parent=23 // pred_region
        %s147 = smul.u32 2, %s17
        %p148 = scmp.lt.s32.totalorder %s16, 1
        %s149 = scalar_select %p148, %s16, 1
        %p150 = scmp.lt.s32.totalorder %s147, 1
        %s151 = scalar_select %p150, %s147, 1
        %s152 = smul.addr %s149, 2
        %s153 = sadd.s32 %s151, %s152
        %s154 = smul.addr %s153, 4
        %s155 = scalar_lea.vmem %s0, %s154
        %s156 = smul.u32 2, %s17
      $region28: #{fno2d_forward.10} parent=23 // pred_fallthru
        _
    $region24: #{fno2d_forward.10} parent=5 // pred_fallthru
      _
    %p157 = scmp.le.s32.totalorder 1, %s9
    %p158 = scmp.lt.s32.totalorder %s9, 3
    %p159 = pnand %p157, %p158
    %p160 = pneg %p159
    // Predicated region
    $region29: #{fno2d_forward.10} parent=5 // pred_check
      _
    $region30: #{fno2d_forward.10} parent=5 // pred_check_branch
      %162 = sbr.rel (%p159) target = $region32
    $region31: #{fno2d_forward.10} parent=5 // pred_region
      %s163 = ssub.s32 %s9, 1
      %s164 = smul.u32 2, %s19
      %p165 = scmp.lt.s32.totalorder %s18, 1
      %s166 = scalar_select %p165, %s18, 1
      %p167 = scmp.lt.s32.totalorder %s164, 1
      %s168 = scalar_select %p167, %s164, 1
      %s169 = smul.addr %s166, 2
      %s170 = sadd.s32 %s168, %s169
      %s171 = smul.addr %s170, 4
      %s172 = scalar_lea.vmem %s0, %s171
      %p173 = pneg %p49
      %p174 = pneg %p46
      %p175 = pneg %p70
      %p176 = pneg %p67
      %p177 = pneg %p91
      %p178 = pneg %p88
      %p179 = pneg %p119
      %p180 = pneg %p116
      %s181 = smul.u32 2, %s19
      %p182 = scmp.lt.s32.totalorder %s18, 1
      %s183 = scalar_select %p182, %s18, 1
      %p184 = scmp.lt.s32.totalorder %s181, 1
      %s185 = scalar_select %p184, %s181, 1
      %s186 = smul.addr %s183, 4
      %s187 = sadd.s32 %s185, %s186
      %s188 = smul.addr %s187, 8
      %s189 = scalar_lea.vmem %s3, %s188
      %s190 = smul.u32 2, %s19
      %p191 = scmp.lt.s32.totalorder %s18, 1
      %s192 = scalar_select %p191, %s18, 1
      %p193 = scmp.lt.s32.totalorder %s190, 1
      %s194 = scalar_select %p193, %s190, 1
      %s195 = smul.addr %s192, 2
      %s196 = sadd.s32 %s194, %s195
      %s197 = smul.addr %s196, 4
      %s198 = scalar_lea.vmem %s0, %s197
      %s199 = smul.u32 2, %s19
      %s200 = smul.u32 2, %s19
      %p201 = scmp.lt.s32.totalorder %s18, 1
      %s202 = scalar_select %p201, %s18, 1
      %p203 = scmp.lt.s32.totalorder %s200, 1
      %s204 = scalar_select %p203, %s200, 1
      %s205 = smul.addr %s202, 4
      %s206 = sadd.s32 %s204, %s205
      %s207 = smul.addr %s206, 8
      %s208 = scalar_lea.vmem %s3, %s207
      %s209 = smul.u32 2, %s19
      %v210 = vld [vmem:[%s1] sm:$0xff]
      %v211 = vld [vmem:[%s1 + $0x8] sm:$0xff]
      %v212 = vld [vmem:[%s198] sm:$0x77]
      %v213 = vld [vmem:[%s2] sm:$0xff]
      %v214 = vld [vmem:[%s2 + $0x8] sm:$0xff]
      %216 = vset.pattern.permute.xlu0 0
      %217 = vperm.xlu0 %216, %v213
      %v218 = vpop.permute.xlu0 %217
      %221 = vset.pattern.permute.xlu0 0
      %222 = vperm.xlu0 %221, %v214
      %v223 = vpop.permute.xlu0 %222
      %226 = vst [vmem:[#allocation1] ss:$2 sm:$0xff] %v212
      %v227 = vld.sshfl [vmem:[#allocation1] sm:$0xff pattern:$0x75316420]
      %v228 = vld.sshfl [vmem:[#allocation1 + $0x8] sm:$0xff pattern:$0x75316420]
      %vm229 = vcmask 23552
      %v231 = vsel %vm229, %v210, 0
      %v234 = vsel %vm229, %v211, 0
      %vm236 = vcmask 1042432
      %v237 = vsel %vm236, %v227, 0
      %v239 = vsel %vm236, %v228, 0
      %241 = vmatpush.msra.mxu0 0.0
      %242 = vmatpush.msra.mxu0 0.0
      %243 = vmatpush.msra.mxu0 0.0
      %244 = vmatpush.msra.mxu0 0.0
      %245 = vmatpush.msra.mxu0 0.0
      %246 = vmatpush.msra.mxu0 0.0
      %247 = vmatpush.msra.mxu0 0.0
      %248 = vmatpush.msra.mxu0 0.0
      %249 = vmatpush.msra.mxu0 0.0
      %250 = vmatpush.msra.mxu0 0.0
      %251 = vmatpush.msra.mxu0 0.0
      %252 = vmatpush.msra.mxu0 0.0
      %253 = vmatpush.msra.mxu0 0.0
      %254 = vmatpush.msra.mxu0 0.0
      %255 = vmatpush.msra.mxu0 0.0
      %256 = vmatpush.msra.mxu0 %v237
      %257 = vmatmul.f32.gmra.mxu0 %v231
      %v258 = vpop.f32.mrf.mxu0
      %v259 = vadd.f32 %v218, %v258
      %260 = vmatmul.f32.gmra.mxu0 %v234
      %v261 = vpop.f32.mrf.mxu0
      %v262 = vadd.f32 %v223, %v261
      %263 = vdwg.mxu0
      %264 = vmatpush.msra.mxu0 0.0
      %265 = vmatpush.msra.mxu0 0.0
      %266 = vmatpush.msra.mxu0 0.0
      %267 = vmatpush.msra.mxu0 0.0
      %268 = vmatpush.msra.mxu0 0.0
      %269 = vmatpush.msra.mxu0 0.0
      %270 = vmatpush.msra.mxu0 0.0
      %271 = vmatpush.msra.mxu0 0.0
      %272 = vmatpush.msra.mxu0 0.0
      %273 = vmatpush.msra.mxu0 0.0
      %274 = vmatpush.msra.mxu0 0.0
      %275 = vmatpush.msra.mxu0 0.0
      %276 = vmatpush.msra.mxu0 0.0
      %277 = vmatpush.msra.mxu0 0.0
      %278 = vmatpush.msra.mxu0 0.0
      %279 = vmatpush.msra.mxu0 %v239
      %280 = vmatmul.f32.gmra.mxu0 %v231
      %v281 = vpop.f32.mrf.mxu0
      %v282 = vadd.f32 %v218, %v281
      %283 = vmatmul.f32.gmra.mxu0 %v234
      %v284 = vpop.f32.mrf.mxu0
      %v285 = vadd.f32 %v223, %v284
      %286 = vdwg.mxu0
      %287 = vst [vmem:[%s208] sm:$0xff] %v259
      %288 = vst [vmem:[%s208 + $0x8] sm:$0xff] %v282
      %289 = vst [vmem:[%s208 + $0x10] sm:$0xff] %v262
      %290 = vst [vmem:[%s208 + $0x18] sm:$0xff] %v285
      %s291 = smul.u32 2, %s19
      %p292 = scmp.lt.s32.totalorder %s18, 1
      %s293 = scalar_select %p292, %s18, 1
      %p294 = scmp.lt.s32.totalorder %s291, 1
      %s295 = scalar_select %p294, %s291, 1
      %s296 = smul.addr %s293, 4
      %s297 = sadd.s32 %s295, %s296
      %s298 = smul.addr %s297, 8
      %s299 = scalar_lea.vmem %s3, %s298
      // Predicated region
      $region33: #{fno2d_forward.10} parent=31 // pred_check
        %p300 = pneg %p116
      $region34: #{fno2d_forward.10} parent=31 // pred_check_branch
        %302 = sbr.rel (%p300) target = $region36
      $region35: #{fno2d_forward.10} parent=31 // pred_region
        %s303 = smul.u32 2, %s19
      $region36: #{fno2d_forward.10} parent=31 // pred_fallthru
        _
    $region32: #{fno2d_forward.10} parent=5 // pred_fallthru
      _
    %p304 = scmp.le.s32.totalorder 2, %s9
    // Predicated region
    $region37: #{fno2d_forward.10} parent=5 // pred_check
      %p305 = pneg %p304
    $region38: #{fno2d_forward.10} parent=5 // pred_check_branch
      %307 = sbr.rel (%p305) target = $region40
    $region39: #{fno2d_forward.10} parent=5 // pred_region
      %s308 = ssub.s32 %s9, 2
      // Predicated region
      $region41: #{fno2d_forward.10} parent=39 // pred_check
        %p309 = pneg %p122
      $region42: #{fno2d_forward.10} parent=39 // pred_check_branch
        %311 = sbr.rel (%p309) target = $region44
      $region43: #{fno2d_forward.10} parent=39 // pred_region
        %s312 = smul.u32 2, %s21
        %p313 = scmp.lt.s32.totalorder %s20, 1
        %s314 = scalar_select %p313, %s20, 1
        %p315 = scmp.lt.s32.totalorder %s312, 1
        %s316 = scalar_select %p315, %s312, 1
        %s317 = smul.addr %s314, 4
        %s318 = sadd.s32 %s316, %s317
        %s319 = smul.addr %s318, 8
        %s320 = scalar_lea.vmem %s3, %s319
      $region44: #{fno2d_forward.10} parent=39 // pred_fallthru
        _
    $region40: #{fno2d_forward.10} parent=5 // pred_fallthru
      _
  $region6: #{fno2d_forward.10} parent=0 // loop_footer
    %s13 = sadd.s32 1, %s9
  $region7: #{fno2d_forward.10} parent=0 // loop_footer_branch
    %8 = sbr.rel target = $region3
  $region8: #{fno2d_forward.10} parent=0 // loop_exit
    _

// kernel: fno2d_forward.11
$region0: #{fno2d_forward.11}
  #allocation0 [shape = 'u32[]', space=smem, size = 0x4, offset = 0x4, fixed_abs, tag = 'smem constant byte address 0x4 - core index']
  #allocation1 [shape = 'u32[72,128]{1,0:T(1,128)}', space=vmem, size = 0x9000, scoped, tag = 'internal scratch']
  %s0 = inlined_call_operand.vmem [shape: f32[2,16,128], index: 0, kind: input, shape index: {}]
  %s1 = inlined_call_operand.vmem [shape: f32[2,16,128], index: 1, kind: input, shape index: {}]
  %s2 = inlined_call_operand.vmem [shape: f32[16,16,128], index: 2, kind: input, shape index: {}]
  %s3 = inlined_call_operand.vmem [shape: f32[16,16,128], index: 3, kind: input, shape index: {}]
  %s4 = inlined_call_operand.vmem [shape: f32[2,16,128], index: 4, kind: output, shape index: {0}]
  %s5 = inlined_call_operand.vmem [shape: f32[2,16,128], index: 5, kind: output, shape index: {1}]
  %6 = xla_tuple %s4, %s5
  %s7 = sld [smem:[#allocation0]]
  $region57: #{fno2d_forward.11} parent=0
    _
  %s9 = ssub.s32 1, %s7
  %s10 = scalar_select 0, %s9, %s7
  loop: start=0, step=1, limit=4
  $region2: #{fno2d_forward.11} parent=0 // loop_pre_header
    _
  $region3: #{fno2d_forward.11} parent=0 // loop_header
    %s12 = sphi 0, %s16
    %p13 = scmp.ge.s32.totalorder %s12, 4
    %s22 = sphi 0, %s24
    %s25 = sphi 0, %s22
    %s26 = sphi 0, %s25
    %s42 = sphi 0, %s26
    %s48 = sphi 0, %s50
    %s51 = sphi 0, %s48
    %s52 = sphi 0, %s51
    %s68 = sphi 0, %s52
    %s72 = sphi 0, %s72
    %s74 = sphi 0, %s72
    %s75 = sphi 0, %s74
    %s89 = sphi 0, %s75
    %s93 = sphi 0, %s93
    %s95 = sphi 0, %s93
    %s96 = sphi 0, %s95
    %s110 = sphi 0, %s96
    %s116 = sphi 0, %s118
    %s119 = sphi 0, %s116
    %s120 = sphi 0, %s119
    %s136 = sphi 0, %s120
    %s142 = sphi 0, %s144
    %s145 = sphi 0, %s142
    %s146 = sphi 0, %s145
    %s162 = sphi 0, %s146
  $region4: #{fno2d_forward.11} parent=0 // loop_header_branch
    %15 = sbr.rel (%p13) target = $region8
  $region5: #{fno2d_forward.11} parent=0 // loop_body
    %s17 = ssub.s32 %s12, 1
    %s18 = ssub.s32 %s12, 2
    %s19 = sadd.s32 %s12, 1
    %s20 = ssub.s32 %s12, %s19
    %p21 = scmp.eq.s32.totalorder %s20, 0
    %s23 = sadd.s32 %s22, 1
    %s24 = scalar_select %p21, %s22, %s23
    %p27 = pneg %p21
    %p28 = scmp.eq.s32.totalorder %s12, 1
    %p29 = por %p27, %p28
    %p30 = scmp.ne.s32.totalorder %s22, %s25
    %p31 = scmp.eq.s32.totalorder %s12, 0
    %p32 = por %p30, %p31
    %p33 = scmp.ne.s32.totalorder %s22, %s25
    %p34 = scmp.eq.s32.totalorder %s17, 1
    %p35 = por %p33, %p34
    %p36 = scmp.ne.s32.totalorder %s25, %s26
    %p37 = scmp.eq.s32.totalorder %s17, 0
    %p38 = por %p36, %p37
    %p39 = scmp.ne.s32.totalorder %s25, %s26
    %p40 = scmp.eq.s32.totalorder %s18, 1
    %p41 = por %p39, %p40
    %p43 = scmp.ne.s32.totalorder %s26, %s42
    %p44 = scmp.eq.s32.totalorder %s18, 0
    %p45 = por %p43, %p44
    %s46 = ssub.s32 %s12, %s19
    %p47 = scmp.eq.s32.totalorder %s46, 0
    %s49 = sadd.s32 %s48, 1
    %s50 = scalar_select %p47, %s48, %s49
    %p53 = pneg %p47
    %p54 = scmp.eq.s32.totalorder %s12, 1
    %p55 = por %p53, %p54
    %p56 = scmp.ne.s32.totalorder %s48, %s51
    %p57 = scmp.eq.s32.totalorder %s12, 0
    %p58 = por %p56, %p57
    %p59 = scmp.ne.s32.totalorder %s48, %s51
    %p60 = scmp.eq.s32.totalorder %s17, 1
    %p61 = por %p59, %p60
    %p62 = scmp.ne.s32.totalorder %s51, %s52
    %p63 = scmp.eq.s32.totalorder %s17, 0
    %p64 = por %p62, %p63
    %p65 = scmp.ne.s32.totalorder %s51, %s52
    %p66 = scmp.eq.s32.totalorder %s18, 1
    %p67 = por %p65, %p66
    %p69 = scmp.ne.s32.totalorder %s52, %s68
    %p70 = scmp.eq.s32.totalorder %s18, 0
    %p71 = por %p69, %p70
    %s73 = sadd.s32 %s72, 1
    %p76 = scmp.eq.s32.totalorder %s12, 1
    %p77 = scmp.ne.s32.totalorder %s72, %s74
    %p78 = scmp.eq.s32.totalorder %s12, 0
    %p79 = por %p77, %p78
    %p80 = scmp.ne.s32.totalorder %s72, %s74
    %p81 = scmp.eq.s32.totalorder %s17, 1
    %p82 = por %p80, %p81
    %p83 = scmp.ne.s32.totalorder %s74, %s75
    %p84 = scmp.eq.s32.totalorder %s17, 0
    %p85 = por %p83, %p84
    %p86 = scmp.ne.s32.totalorder %s74, %s75
    %p87 = scmp.eq.s32.totalorder %s18, 1
    %p88 = por %p86, %p87
    %p90 = scmp.ne.s32.totalorder %s75, %s89
    %p91 = scmp.eq.s32.totalorder %s18, 0
    %p92 = por %p90, %p91
    %s94 = sadd.s32 %s93, 1
    %p97 = scmp.eq.s32.totalorder %s12, 1
    %p98 = scmp.ne.s32.totalorder %s93, %s95
    %p99 = scmp.eq.s32.totalorder %s12, 0
    %p100 = por %p98, %p99
    %p101 = scmp.ne.s32.totalorder %s93, %s95
    %p102 = scmp.eq.s32.totalorder %s17, 1
    %p103 = por %p101, %p102
    %p104 = scmp.ne.s32.totalorder %s95, %s96
    %p105 = scmp.eq.s32.totalorder %s17, 0
    %p106 = por %p104, %p105
    %p107 = scmp.ne.s32.totalorder %s95, %s96
    %p108 = scmp.eq.s32.totalorder %s18, 1
    %p109 = por %p107, %p108
    %p111 = scmp.ne.s32.totalorder %s96, %s110
    %p112 = scmp.eq.s32.totalorder %s18, 0
    %p113 = por %p111, %p112
    %s114 = ssub.s32 %s12, %s19
    %p115 = scmp.eq.s32.totalorder %s114, 0
    %s117 = sadd.s32 %s116, 1
    %s118 = scalar_select %p115, %s116, %s117
    %p121 = pneg %p115
    %p122 = scmp.eq.s32.totalorder %s12, 1
    %p123 = por %p121, %p122
    %p124 = scmp.ne.s32.totalorder %s116, %s119
    %p125 = scmp.eq.s32.totalorder %s12, 0
    %p126 = por %p124, %p125
    %p127 = scmp.ne.s32.totalorder %s116, %s119
    %p128 = scmp.eq.s32.totalorder %s17, 1
    %p129 = por %p127, %p128
    %p130 = scmp.ne.s32.totalorder %s119, %s120
    %p131 = scmp.eq.s32.totalorder %s17, 0
    %p132 = por %p130, %p131
    %p133 = scmp.ne.s32.totalorder %s119, %s120
    %p134 = scmp.eq.s32.totalorder %s18, 1
    %p135 = por %p133, %p134
    %p137 = scmp.ne.s32.totalorder %s120, %s136
    %p138 = scmp.eq.s32.totalorder %s18, 0
    %p139 = por %p137, %p138
    %s140 = ssub.s32 %s12, %s19
    %p141 = scmp.eq.s32.totalorder %s140, 0
    %s143 = sadd.s32 %s142, 1
    %s144 = scalar_select %p141, %s142, %s143
    %p147 = pneg %p141
    %p148 = scmp.eq.s32.totalorder %s12, 1
    %p149 = por %p147, %p148
    %p150 = scmp.ne.s32.totalorder %s142, %s145
    %p151 = scmp.eq.s32.totalorder %s12, 0
    %p152 = por %p150, %p151
    %p153 = scmp.ne.s32.totalorder %s142, %s145
    %p154 = scmp.eq.s32.totalorder %s17, 1
    %p155 = por %p153, %p154
    %p156 = scmp.ne.s32.totalorder %s145, %s146
    %p157 = scmp.eq.s32.totalorder %s17, 0
    %p158 = por %p156, %p157
    %p159 = scmp.ne.s32.totalorder %s145, %s146
    %p160 = scmp.eq.s32.totalorder %s18, 1
    %p161 = por %p159, %p160
    %p163 = scmp.ne.s32.totalorder %s146, %s162
    %p164 = scmp.eq.s32.totalorder %s18, 0
    %p165 = por %p163, %p164
    %p166 = scmp.le.s32.totalorder 1, %s12
    %p167 = scmp.lt.s32.totalorder %s12, 3
    %p168 = pnand %p166, %p167
    %p169 = pneg %p168
    // Predicated region
    $region9: #{fno2d_forward.11} parent=5 // pred_check
      _
    $region10: #{fno2d_forward.11} parent=5 // pred_check_branch
      %171 = sbr.rel (%p168) target = $region12
    $region11: #{fno2d_forward.11} parent=5 // pred_region
      %s172 = ssub.s32 %s12, 1
      // Predicated region
      $region13: #{fno2d_forward.11} parent=11 // pred_check
        %p173 = pneg %p85
      $region14: #{fno2d_forward.11} parent=11 // pred_check_branch
        %175 = sbr.rel (%p173) target = $region16
      $region15: #{fno2d_forward.11} parent=11 // pred_region
        _
      $region16: #{fno2d_forward.11} parent=11 // pred_fallthru
        _
      // Predicated region
      $region17: #{fno2d_forward.11} parent=11 // pred_check
        %p176 = pneg %p106
      $region18: #{fno2d_forward.11} parent=11 // pred_check_branch
        %178 = sbr.rel (%p176) target = $region20
      $region19: #{fno2d_forward.11} parent=11 // pred_region
        _
      $region20: #{fno2d_forward.11} parent=11 // pred_fallthru
        _
    $region12: #{fno2d_forward.11} parent=5 // pred_fallthru
      _
    %p179 = scmp.lt.s32.totalorder %s12, 2
    // Predicated region
    $region21: #{fno2d_forward.11} parent=5 // pred_check
      %p180 = pneg %p179
    $region22: #{fno2d_forward.11} parent=5 // pred_check_branch
      %182 = sbr.rel (%p180) target = $region24
    $region23: #{fno2d_forward.11} parent=5 // pred_region
      // Predicated region
      $region25: #{fno2d_forward.11} parent=23 // pred_check
        %p183 = pneg %p32
      $region26: #{fno2d_forward.11} parent=23 // pred_check_branch
        %185 = sbr.rel (%p183) target = $region28
      $region27: #{fno2d_forward.11} parent=23 // pred_region
        %p186 = scmp.lt.s32.totalorder %s12, 1
        %s187 = scalar_select %p186, %s12, 1
        %s188 = smul.addr %s187, 2
        %s189 = smul.addr %s188, 8
        %s190 = scalar_lea.vmem %s0, %s189
      $region28: #{fno2d_forward.11} parent=23 // pred_fallthru
        _
      // Predicated region
      $region29: #{fno2d_forward.11} parent=23 // pred_check
        %p191 = pneg %p58
      $region30: #{fno2d_forward.11} parent=23 // pred_check_branch
        %193 = sbr.rel (%p191) target = $region32
      $region31: #{fno2d_forward.11} parent=23 // pred_region
        %p194 = scmp.lt.s32.totalorder %s12, 1
        %s195 = scalar_select %p194, %s12, 1
        %s196 = smul.addr %s195, 2
        %s197 = smul.addr %s196, 8
        %s198 = scalar_lea.vmem %s1, %s197
      $region32: #{fno2d_forward.11} parent=23 // pred_fallthru
        _
    $region24: #{fno2d_forward.11} parent=5 // pred_fallthru
      _
    %p199 = scmp.le.s32.totalorder 1, %s12
    %p200 = scmp.lt.s32.totalorder %s12, 3
    %p201 = pnand %p199, %p200
    %p202 = pneg %p201
    // Predicated region
    $region33: #{fno2d_forward.11} parent=5 // pred_check
      _
    $region34: #{fno2d_forward.11} parent=5 // pred_check_branch
      %204 = sbr.rel (%p201) target = $region36
    $region35: #{fno2d_forward.11} parent=5 // pred_region
      %s205 = ssub.s32 %s12, 1
      %p206 = scmp.lt.s32.totalorder %s17, 1
      %s207 = scalar_select %p206, %s17, 1
      %s208 = smul.addr %s207, 2
      %s209 = smul.addr %s208, 8
      %s210 = scalar_lea.vmem %s0, %s209
      %p211 = pneg %p38
      %p212 = pneg %p35
      %p213 = scmp.lt.s32.totalorder %s17, 1
      %s214 = scalar_select %p213, %s17, 1
      %s215 = smul.addr %s214, 2
      %s216 = smul.addr %s215, 8
      %s217 = scalar_lea.vmem %s1, %s216
      %p218 = pneg %p64
      %p219 = pneg %p61
      %p220 = pneg %p85
      %p221 = pneg %p82
      %p222 = pneg %p106
      %p223 = pneg %p103
      %p224 = pneg %p132
      %p225 = pneg %p129
      %p226 = scmp.lt.s32.totalorder %s17, 1
      %s227 = scalar_select %p226, %s17, 1
      %s228 = smul.addr %s227, 2
      %s229 = smul.addr %s228, 8
      %s230 = scalar_lea.vmem %s4, %s229
      %p231 = pneg %p158
      %p232 = pneg %p155
      %p233 = scmp.lt.s32.totalorder %s17, 1
      %s234 = scalar_select %p233, %s17, 1
      %s235 = smul.addr %s234, 2
      %s236 = smul.addr %s235, 8
      %s237 = scalar_lea.vmem %s5, %s236
      %p238 = scmp.lt.s32.totalorder %s17, 1
      %s239 = scalar_select %p238, %s17, 1
      %s240 = smul.addr %s239, 2
      %s241 = smul.addr %s240, 8
      %s242 = scalar_lea.vmem %s0, %s241
      %p243 = scmp.lt.s32.totalorder %s17, 1
      %s244 = scalar_select %p243, %s17, 1
      %s245 = smul.addr %s244, 2
      %s246 = smul.addr %s245, 8
      %s247 = scalar_lea.vmem %s1, %s246
      %p248 = scmp.lt.s32.totalorder %s17, 1
      %s249 = scalar_select %p248, %s17, 1
      %s250 = smul.addr %s249, 2
      %s251 = smul.addr %s250, 8
      %s252 = scalar_lea.vmem %s4, %s251
      %p253 = scmp.lt.s32.totalorder %s17, 1
      %s254 = scalar_select %p253, %s17, 1
      %s255 = smul.addr %s254, 2
      %s256 = smul.addr %s255, 8
      %s257 = scalar_lea.vmem %s5, %s256
      %v258 = vld [vmem:[%s242] sm:$0xff]
      %v259 = vld [vmem:[%s242 + $0x8] sm:$0xff]
      %v262 = vrot.slane %v258, 1
      %v263 = vrot.slane %v258, 2
      %v264 = vrot.slane %v258, 3
      %v265 = vrot.slane %v258, 4
      %v266 = vrot.slane %v258, 5
      %v267 = vrot.slane %v258, 6
      %v268 = vrot.slane %v258, 7
      %v269 = vrot.slane %v259, 1
      %v270 = vrot.slane %v259, 2
      %v271 = vrot.slane %v259, 3
      %v272 = vrot.slane %v259, 4
      %v273 = vrot.slane %v259, 5
      %v274 = vrot.slane %v259, 6
      %v275 = vrot.slane %v259, 7
      %v276 = vld [vmem:[%s247] sm:$0xff]
      %v277 = vld [vmem:[%s247 + $0x8] sm:$0xff]
      %v280 = vrot.slane %v276, 1
      %v281 = vrot.slane %v276, 2
      %v282 = vrot.slane %v276, 3
      %v283 = vrot.slane %v276, 4
      %v284 = vrot.slane %v276, 5
      %v285 = vrot.slane %v276, 6
      %v286 = vrot.slane %v276, 7
      %v287 = vrot.slane %v277, 1
      %v288 = vrot.slane %v277, 2
      %v289 = vrot.slane %v277, 3
      %v290 = vrot.slane %v277, 4
      %v291 = vrot.slane %v277, 5
      %v292 = vrot.slane %v277, 6
      %v293 = vrot.slane %v277, 7
      %v294 = vld [vmem:[%s2] sm:$0xff]
      %v295 = vld [vmem:[%s2 + $0x8] sm:$0xff]
      %v296 = vld [vmem:[%s2 + $0x10] sm:$0xff]
      %v297 = vld [vmem:[%s2 + $0x18] sm:$0xff]
      %v298 = vld [vmem:[%s2 + $0x20] sm:$0xff]
      %v299 = vld [vmem:[%s2 + $0x28] sm:$0xff]
      %v300 = vld [vmem:[%s2 + $0x30] sm:$0xff]
      %v301 = vld [vmem:[%s2 + $0x38] sm:$0xff]
      %v302 = vld [vmem:[%s2 + $0x40] sm:$0xff]
      %v303 = vld [vmem:[%s2 + $0x48] sm:$0xff]
      %v304 = vld [vmem:[%s2 + $0x50] sm:$0xff]
      %v305 = vld [vmem:[%s2 + $0x58] sm:$0xff]
      %v306 = vld [vmem:[%s2 + $0x60] sm:$0xff]
      %v307 = vld [vmem:[%s2 + $0x68] sm:$0xff]
      %v308 = vld [vmem:[%s2 + $0x70] sm:$0xff]
      %v309 = vld [vmem:[%s2 + $0x78] sm:$0xff]
      %v310 = vld [vmem:[%s2 + $0x80] sm:$0xff]
      %v311 = vld [vmem:[%s2 + $0x88] sm:$0xff]
      %v312 = vld [vmem:[%s2 + $0x90] sm:$0xff]
      %v313 = vld [vmem:[%s2 + $0x98] sm:$0xff]
      %v314 = vld [vmem:[%s2 + $0xa0] sm:$0xff]
      %v315 = vld [vmem:[%s2 + $0xa8] sm:$0xff]
      %v316 = vld [vmem:[%s2 + $0xb0] sm:$0xff]
      %v317 = vld [vmem:[%s2 + $0xb8] sm:$0xff]
      %v318 = vld [vmem:[%s2 + $0xc0] sm:$0xff]
      %v319 = vld [vmem:[%s2 + $0xc8] sm:$0xff]
      %v320 = vld [vmem:[%s2 + $0xd0] sm:$0xff]
      %v321 = vld [vmem:[%s2 + $0xd8] sm:$0xff]
      %v322 = vld [vmem:[%s2 + $0xe0] sm:$0xff]
      %v323 = vld [vmem:[%s2 + $0xe8] sm:$0xff]
      %v324 = vld [vmem:[%s2 + $0xf0] sm:$0xff]
      %v325 = vld [vmem:[%s2 + $0xf8] sm:$0xff]
      %v326 = vld [vmem:[%s3] sm:$0xff]
      %v327 = vld [vmem:[%s3 + $0x8] sm:$0xff]
      %v328 = vld [vmem:[%s3 + $0x10] sm:$0xff]
      %v329 = vld [vmem:[%s3 + $0x18] sm:$0xff]
      %v330 = vld [vmem:[%s3 + $0x20] sm:$0xff]
      %v331 = vld [vmem:[%s3 + $0x28] sm:$0xff]
      %v332 = vld [vmem:[%s3 + $0x30] sm:$0xff]
      %v333 = vld [vmem:[%s3 + $0x38] sm:$0xff]
      %v334 = vld [vmem:[%s3 + $0x40] sm:$0xff]
      %v335 = vld [vmem:[%s3 + $0x48] sm:$0xff]
      %v336 = vld [vmem:[%s3 + $0x50] sm:$0xff]
      %v337 = vld [vmem:[%s3 + $0x58] sm:$0xff]
      %v338 = vld [vmem:[%s3 + $0x60] sm:$0xff]
      %v339 = vld [vmem:[%s3 + $0x68] sm:$0xff]
      %v340 = vld [vmem:[%s3 + $0x70] sm:$0xff]
      %v341 = vld [vmem:[%s3 + $0x78] sm:$0xff]
      %v342 = vld [vmem:[%s3 + $0x80] sm:$0xff]
      %v343 = vld [vmem:[%s3 + $0x88] sm:$0xff]
      %v344 = vld [vmem:[%s3 + $0x90] sm:$0xff]
      %v345 = vld [vmem:[%s3 + $0x98] sm:$0xff]
      %v346 = vld [vmem:[%s3 + $0xa0] sm:$0xff]
      %v347 = vld [vmem:[%s3 + $0xa8] sm:$0xff]
      %v348 = vld [vmem:[%s3 + $0xb0] sm:$0xff]
      %v349 = vld [vmem:[%s3 + $0xb8] sm:$0xff]
      %v350 = vld [vmem:[%s3 + $0xc0] sm:$0xff]
      %v351 = vld [vmem:[%s3 + $0xc8] sm:$0xff]
      %v352 = vld [vmem:[%s3 + $0xd0] sm:$0xff]
      %v353 = vld [vmem:[%s3 + $0xd8] sm:$0xff]
      %v354 = vld [vmem:[%s3 + $0xe0] sm:$0xff]
      %v355 = vld [vmem:[%s3 + $0xe8] sm:$0xff]
      %v356 = vld [vmem:[%s3 + $0xf0] sm:$0xff]
      %v357 = vld [vmem:[%s3 + $0xf8] sm:$0xff]
      %v358 = vperm.slane %v258, 0
      %v359 = vperm.slane %v262, 0
      %v360 = vperm.slane %v263, 0
      %v361 = vperm.slane %v264, 0
      %v362 = vperm.slane %v265, 0
      %v363 = vperm.slane %v266, 0
      %v364 = vperm.slane %v267, 0
      %v365 = vperm.slane %v268, 0
      %v366 = vperm.slane %v259, 0
      %v367 = vperm.slane %v269, 0
      %v368 = vperm.slane %v270, 0
      %v369 = vperm.slane %v271, 0
      %v370 = vperm.slane %v272, 0
      %v371 = vperm.slane %v273, 0
      %v372 = vperm.slane %v274, 0
      %v373 = vperm.slane %v275, 0
      %v390 = vmul.f32 %v358, %v294
      %v391 = vmul.f32 %v358, %v295
      %v392 = vmul.f32 %v359, %v296
      %v393 = vmul.f32 %v359, %v297
      %v394 = vmul.f32 %v360, %v298
      %v395 = vmul.f32 %v360, %v299
      %v396 = vmul.f32 %v361, %v300
      %v397 = vmul.f32 %v361, %v301
      %v398 = vmul.f32 %v362, %v302
      %v399 = vmul.f32 %v362, %v303
      %v400 = vmul.f32 %v363, %v304
      %v401 = vmul.f32 %v363, %v305
      %v402 = vmul.f32 %v364, %v306
      %v403 = vmul.f32 %v364, %v307
      %v404 = vmul.f32 %v365, %v308
      %v405 = vmul.f32 %v365, %v309
      %v406 = vmul.f32 %v366, %v310
      %v407 = vmul.f32 %v366, %v311
      %v408 = vmul.f32 %v367, %v312
      %v409 = vmul.f32 %v367, %v313
      %v410 = vmul.f32 %v368, %v314
      %v411 = vmul.f32 %v368, %v315
      %v412 = vmul.f32 %v369, %v316
      %v413 = vmul.f32 %v369, %v317
      %v414 = vmul.f32 %v370, %v318
      %v415 = vmul.f32 %v370, %v319
      %v416 = vmul.f32 %v371, %v320
      %v417 = vmul.f32 %v371, %v321
      %v418 = vmul.f32 %v372, %v322
      %v419 = vmul.f32 %v372, %v323
      %v420 = vmul.f32 %v373, %v324
      %v421 = vmul.f32 %v373, %v325
      %v422 = vperm.slane %v276, 0
      %v423 = vperm.slane %v280, 0
      %v424 = vperm.slane %v281, 0
      %v425 = vperm.slane %v282, 0
      %v426 = vperm.slane %v283, 0
      %v427 = vperm.slane %v284, 0
      %v428 = vperm.slane %v285, 0
      %v429 = vperm.slane %v286, 0
      %v430 = vperm.slane %v277, 0
      %v431 = vperm.slane %v287, 0
      %v432 = vperm.slane %v288, 0
      %v433 = vperm.slane %v289, 0
      %v434 = vperm.slane %v290, 0
      %v435 = vperm.slane %v291, 0
      %v436 = vperm.slane %v292, 0
      %v437 = vperm.slane %v293, 0
      %v454 = vmul.f32 %v422, %v326
      %v455 = vmul.f32 %v422, %v327
      %v456 = vmul.f32 %v423, %v328
      %v457 = vmul.f32 %v423, %v329
      %v458 = vmul.f32 %v424, %v330
      %v459 = vmul.f32 %v424, %v331
      %v460 = vmul.f32 %v425, %v332
      %v461 = vmul.f32 %v425, %v333
      %v462 = vmul.f32 %v426, %v334
      %v463 = vmul.f32 %v426, %v335
      %v464 = vmul.f32 %v427, %v336
      %v465 = vmul.f32 %v427, %v337
      %v466 = vmul.f32 %v428, %v338
      %v467 = vmul.f32 %v428, %v339
      %v468 = vmul.f32 %v429, %v340
      %v469 = vmul.f32 %v429, %v341
      %v470 = vmul.f32 %v430, %v342
      %v471 = vmul.f32 %v430, %v343
      %v472 = vmul.f32 %v431, %v344
      %v473 = vmul.f32 %v431, %v345
      %v474 = vmul.f32 %v432, %v346
      %v475 = vmul.f32 %v432, %v347
      %v476 = vmul.f32 %v433, %v348
      %v477 = vmul.f32 %v433, %v349
      %v478 = vmul.f32 %v434, %v350
      %v479 = vmul.f32 %v434, %v351
      %v480 = vmul.f32 %v435, %v352
      %v481 = vmul.f32 %v435, %v353
      %v482 = vmul.f32 %v436, %v354
      %v483 = vmul.f32 %v436, %v355
      %v484 = vmul.f32 %v437, %v356
      %v485 = vmul.f32 %v437, %v357
      %v486 = vsub.f32 %v390, %v454
      %v487 = vsub.f32 %v391, %v455
      %v488 = vsub.f32 %v392, %v456
      %v489 = vsub.f32 %v393, %v457
      %v490 = vsub.f32 %v394, %v458
      %v491 = vsub.f32 %v395, %v459
      %v492 = vsub.f32 %v396, %v460
      %v493 = vsub.f32 %v397, %v461
      %v494 = vsub.f32 %v398, %v462
      %v495 = vsub.f32 %v399, %v463
      %v496 = vsub.f32 %v400, %v464
      %v497 = vsub.f32 %v401, %v465
      %v498 = vsub.f32 %v402, %v466
      %v499 = vsub.f32 %v403, %v467
      %v500 = vsub.f32 %v404, %v468
      %v501 = vsub.f32 %v405, %v469
      %v502 = vsub.f32 %v406, %v470
      %v503 = vsub.f32 %v407, %v471
      %v504 = vsub.f32 %v408, %v472
      %v505 = vsub.f32 %v409, %v473
      %v506 = vsub.f32 %v410, %v474
      %v507 = vsub.f32 %v411, %v475
      %v508 = vsub.f32 %v412, %v476
      %v509 = vsub.f32 %v413, %v477
      %v510 = vsub.f32 %v414, %v478
      %v511 = vsub.f32 %v415, %v479
      %v512 = vsub.f32 %v416, %v480
      %v513 = vsub.f32 %v417, %v481
      %v514 = vsub.f32 %v418, %v482
      %v515 = vsub.f32 %v419, %v483
      %v516 = vsub.f32 %v420, %v484
      %v517 = vsub.f32 %v421, %v485
      %v518 = vadd.f32 %v486, %v488
      %v519 = vadd.f32 %v518, %v490
      %v520 = vadd.f32 %v519, %v492
      %v521 = vadd.f32 %v520, %v494
      %v522 = vadd.f32 %v521, %v496
      %v523 = vadd.f32 %v522, %v498
      %v524 = vadd.f32 %v523, %v500
      %v525 = vadd.f32 %v524, %v502
      %v526 = vadd.f32 %v525, %v504
      %v527 = vadd.f32 %v526, %v506
      %v528 = vadd.f32 %v527, %v508
      %v529 = vadd.f32 %v528, %v510
      %v530 = vadd.f32 %v529, %v512
      %v531 = vadd.f32 %v530, %v514
      %v532 = vadd.f32 %v531, %v516
      %v533 = vadd.f32 %v487, %v489
      %v534 = vadd.f32 %v533, %v491
      %v535 = vadd.f32 %v534, %v493
      %v536 = vadd.f32 %v535, %v495
      %v537 = vadd.f32 %v536, %v497
      %v538 = vadd.f32 %v537, %v499
      %v539 = vadd.f32 %v538, %v501
      %v540 = vadd.f32 %v539, %v503
      %v541 = vadd.f32 %v540, %v505
      %v542 = vadd.f32 %v541, %v507
      %v543 = vadd.f32 %v542, %v509
      %v544 = vadd.f32 %v543, %v511
      %v545 = vadd.f32 %v544, %v513
      %v546 = vadd.f32 %v545, %v515
      %v547 = vadd.f32 %v546, %v517
      %548 = vst [vmem:[%s252] sm:$0xff] %v532
      %549 = vst [vmem:[%s252 + $0x8] sm:$0xff] %v547
      %v550 = vmul.f32 %v358, %v326
      %v551 = vmul.f32 %v358, %v327
      %v552 = vmul.f32 %v359, %v328
      %v553 = vmul.f32 %v359, %v329
      %v554 = vmul.f32 %v360, %v330
      %v555 = vmul.f32 %v360, %v331
      %v556 = vmul.f32 %v361, %v332
      %v557 = vmul.f32 %v361, %v333
      %v558 = vmul.f32 %v362, %v334
      %v559 = vmul.f32 %v362, %v335
      %v560 = vmul.f32 %v363, %v336
      %v561 = vmul.f32 %v363, %v337
      %v562 = vmul.f32 %v364, %v338
      %v563 = vmul.f32 %v364, %v339
      %v564 = vmul.f32 %v365, %v340
      %v565 = vmul.f32 %v365, %v341
      %v566 = vmul.f32 %v366, %v342
      %v567 = vmul.f32 %v366, %v343
      %v568 = vmul.f32 %v367, %v344
      %v569 = vmul.f32 %v367, %v345
      %v570 = vmul.f32 %v368, %v346
      %v571 = vmul.f32 %v368, %v347
      %v572 = vmul.f32 %v369, %v348
      %v573 = vmul.f32 %v369, %v349
      %v574 = vmul.f32 %v370, %v350
      %v575 = vmul.f32 %v370, %v351
      %v576 = vmul.f32 %v371, %v352
      %v577 = vmul.f32 %v371, %v353
      %v578 = vmul.f32 %v372, %v354
      %v579 = vmul.f32 %v372, %v355
      %v580 = vmul.f32 %v373, %v356
      %v581 = vmul.f32 %v373, %v357
      %v582 = vmul.f32 %v422, %v294
      %v583 = vmul.f32 %v422, %v295
      %v584 = vmul.f32 %v423, %v296
      %v585 = vmul.f32 %v423, %v297
      %v586 = vmul.f32 %v424, %v298
      %v587 = vmul.f32 %v424, %v299
      %v588 = vmul.f32 %v425, %v300
      %v589 = vmul.f32 %v425, %v301
      %v590 = vmul.f32 %v426, %v302
      %v591 = vmul.f32 %v426, %v303
      %v592 = vmul.f32 %v427, %v304
      %v593 = vmul.f32 %v427, %v305
      %v594 = vmul.f32 %v428, %v306
      %v595 = vmul.f32 %v428, %v307
      %v596 = vmul.f32 %v429, %v308
      %v597 = vmul.f32 %v429, %v309
      %v598 = vmul.f32 %v430, %v310
      %v599 = vmul.f32 %v430, %v311
      %v600 = vmul.f32 %v431, %v312
      %v601 = vmul.f32 %v431, %v313
      %v602 = vmul.f32 %v432, %v314
      %v603 = vmul.f32 %v432, %v315
      %v604 = vmul.f32 %v433, %v316
      %v605 = vmul.f32 %v433, %v317
      %v606 = vmul.f32 %v434, %v318
      %v607 = vmul.f32 %v434, %v319
      %v608 = vmul.f32 %v435, %v320
      %v609 = vmul.f32 %v435, %v321
      %v610 = vmul.f32 %v436, %v322
      %v611 = vmul.f32 %v436, %v323
      %v612 = vmul.f32 %v437, %v324
      %v613 = vmul.f32 %v437, %v325
      %v614 = vadd.f32 %v550, %v582
      %v615 = vadd.f32 %v551, %v583
      %v616 = vadd.f32 %v552, %v584
      %v617 = vadd.f32 %v553, %v585
      %v618 = vadd.f32 %v554, %v586
      %v619 = vadd.f32 %v555, %v587
      %v620 = vadd.f32 %v556, %v588
      %v621 = vadd.f32 %v557, %v589
      %v622 = vadd.f32 %v558, %v590
      %v623 = vadd.f32 %v559, %v591
      %v624 = vadd.f32 %v560, %v592
      %v625 = vadd.f32 %v561, %v593
      %v626 = vadd.f32 %v562, %v594
      %v627 = vadd.f32 %v563, %v595
      %v628 = vadd.f32 %v564, %v596
      %v629 = vadd.f32 %v565, %v597
      %v630 = vadd.f32 %v566, %v598
      %v631 = vadd.f32 %v567, %v599
      %v632 = vadd.f32 %v568, %v600
      %v633 = vadd.f32 %v569, %v601
      %v634 = vadd.f32 %v570, %v602
      %v635 = vadd.f32 %v571, %v603
      %v636 = vadd.f32 %v572, %v604
      %v637 = vadd.f32 %v573, %v605
      %v638 = vadd.f32 %v574, %v606
      %v639 = vadd.f32 %v575, %v607
      %v640 = vadd.f32 %v576, %v608
      %v641 = vadd.f32 %v577, %v609
      %v642 = vadd.f32 %v578, %v610
      %v643 = vadd.f32 %v579, %v611
      %v644 = vadd.f32 %v580, %v612
      %v645 = vadd.f32 %v581, %v613
      %v646 = vadd.f32 %v614, %v616
      %v647 = vadd.f32 %v646, %v618
      %v648 = vadd.f32 %v647, %v620
      %v649 = vadd.f32 %v648, %v622
      %v650 = vadd.f32 %v649, %v624
      %v651 = vadd.f32 %v650, %v626
      %v652 = vadd.f32 %v651, %v628
      %v653 = vadd.f32 %v652, %v630
      %v654 = vadd.f32 %v653, %v632
      %v655 = vadd.f32 %v654, %v634
      %v656 = vadd.f32 %v655, %v636
      %v657 = vadd.f32 %v656, %v638
      %v658 = vadd.f32 %v657, %v640
      %v659 = vadd.f32 %v658, %v642
      %v660 = vadd.f32 %v659, %v644
      %v661 = vadd.f32 %v615, %v617
      %v662 = vadd.f32 %v661, %v619
      %v663 = vadd.f32 %v662, %v621
      %v664 = vadd.f32 %v663, %v623
      %v665 = vadd.f32 %v664, %v625
      %v666 = vadd.f32 %v665, %v627
      %v667 = vadd.f32 %v666, %v629
      %v668 = vadd.f32 %v667, %v631
      %v669 = vadd.f32 %v668, %v633
      %v670 = vadd.f32 %v669, %v635
      %v671 = vadd.f32 %v670, %v637
      %v672 = vadd.f32 %v671, %v639
      %v673 = vadd.f32 %v672, %v641
      %v674 = vadd.f32 %v673, %v643
      %v675 = vadd.f32 %v674, %v645
      %676 = vst [vmem:[%s257] sm:$0xff] %v660
      %677 = vst [vmem:[%s257 + $0x8] sm:$0xff] %v675
      %p678 = scmp.lt.s32.totalorder %s17, 1
      %s679 = scalar_select %p678, %s17, 1
      %s680 = smul.addr %s679, 2
      %s681 = smul.addr %s680, 8
      %s682 = scalar_lea.vmem %s4, %s681
      %p683 = scmp.lt.s32.totalorder %s17, 1
      %s684 = scalar_select %p683, %s17, 1
      %s685 = smul.addr %s684, 2
      %s686 = smul.addr %s685, 8
      %s687 = scalar_lea.vmem %s5, %s686
      // Predicated region
      $region37: #{fno2d_forward.11} parent=35 // pred_check
        %p688 = pneg %p129
      $region38: #{fno2d_forward.11} parent=35 // pred_check_branch
        %690 = sbr.rel (%p688) target = $region40
      $region39: #{fno2d_forward.11} parent=35 // pred_region
        _
      $region40: #{fno2d_forward.11} parent=35 // pred_fallthru
        _
      // Predicated region
      $region41: #{fno2d_forward.11} parent=35 // pred_check
        %p691 = pneg %p155
      $region42: #{fno2d_forward.11} parent=35 // pred_check_branch
        %693 = sbr.rel (%p691) target = $region44
      $region43: #{fno2d_forward.11} parent=35 // pred_region
        _
      $region44: #{fno2d_forward.11} parent=35 // pred_fallthru
        _
    $region36: #{fno2d_forward.11} parent=5 // pred_fallthru
      _
    %p694 = scmp.le.s32.totalorder 2, %s12
    // Predicated region
    $region45: #{fno2d_forward.11} parent=5 // pred_check
      %p695 = pneg %p694
    $region46: #{fno2d_forward.11} parent=5 // pred_check_branch
      %697 = sbr.rel (%p695) target = $region48
    $region47: #{fno2d_forward.11} parent=5 // pred_region
      %s698 = ssub.s32 %s12, 2
      // Predicated region
      $region49: #{fno2d_forward.11} parent=47 // pred_check
        %p699 = pneg %p135
      $region50: #{fno2d_forward.11} parent=47 // pred_check_branch
        %701 = sbr.rel (%p699) target = $region52
      $region51: #{fno2d_forward.11} parent=47 // pred_region
        %p702 = scmp.lt.s32.totalorder %s18, 1
        %s703 = scalar_select %p702, %s18, 1
        %s704 = smul.addr %s703, 2
        %s705 = smul.addr %s704, 8
        %s706 = scalar_lea.vmem %s4, %s705
      $region52: #{fno2d_forward.11} parent=47 // pred_fallthru
        _
      // Predicated region
      $region53: #{fno2d_forward.11} parent=47 // pred_check
        %p707 = pneg %p161
      $region54: #{fno2d_forward.11} parent=47 // pred_check_branch
        %709 = sbr.rel (%p707) target = $region56
      $region55: #{fno2d_forward.11} parent=47 // pred_region
        %p710 = scmp.lt.s32.totalorder %s18, 1
        %s711 = scalar_select %p710, %s18, 1
        %s712 = smul.addr %s711, 2
        %s713 = smul.addr %s712, 8
        %s714 = scalar_lea.vmem %s5, %s713
      $region56: #{fno2d_forward.11} parent=47 // pred_fallthru
        _
    $region48: #{fno2d_forward.11} parent=5 // pred_fallthru
      _
  $region6: #{fno2d_forward.11} parent=0 // loop_footer
    %s16 = sadd.s32 1, %s12
  $region7: #{fno2d_forward.11} parent=0 // loop_footer_branch
    %11 = sbr.rel target = $region3
  $region8: #{fno2d_forward.11} parent=0 // loop_exit
    _

// kernel: reverse.8
$region0: #{reverse.8}
  #allocation0 [shape = 's32[1]{0}', space=sflag, size = 0x4, scoped, tag = 'scoped memory for reverse.8']
  %s0 = inlined_call_operand.vmem [shape: f32[2,16,25,12], index: 0, kind: input, shape index: {}]
  %s1 = inlined_call_operand.vmem [shape: f32[2,16,25,12], index: 1, kind: output, shape index: {}]
  %s2 = scalar_lea.vmem %s0, 176
  %v3 = vld [vmem:[%s2] sm:$0xff]
  %4 = vst [vmem:[%s1] sm:$0xff] %v3
  %s5 = scalar_lea.vmem %s0, 368
  %v6 = vld [vmem:[%s5] sm:$0xff]
  %s7 = scalar_lea.vmem %s1, 192
  %8 = vst [vmem:[%s7] sm:$0xff] %v6
  %s9 = scalar_lea.vmem %s0, 160
  %v10 = vld [vmem:[%s9] sm:$0xff]
  %s11 = scalar_lea.vmem %s1, 16
  %12 = vst [vmem:[%s11] sm:$0xff] %v10
  %s13 = scalar_lea.vmem %s0, 352
  %v14 = vld [vmem:[%s13] sm:$0xff]
  %s15 = scalar_lea.vmem %s1, 208
  %16 = vst [vmem:[%s15] sm:$0xff] %v14
  %s17 = scalar_lea.vmem %s0, 144
  %v18 = vld [vmem:[%s17] sm:$0xff]
  %s19 = scalar_lea.vmem %s1, 32
  %20 = vst [vmem:[%s19] sm:$0xff] %v18
  %s21 = scalar_lea.vmem %s0, 336
  %v22 = vld [vmem:[%s21] sm:$0xff]
  %s23 = scalar_lea.vmem %s1, 224
  %24 = vst [vmem:[%s23] sm:$0xff] %v22
  %s25 = scalar_lea.vmem %s0, 128
  %v26 = vld [vmem:[%s25] sm:$0xff]
  %s27 = scalar_lea.vmem %s1, 48
  %28 = vst [vmem:[%s27] sm:$0xff] %v26
  %s29 = scalar_lea.vmem %s0, 320
  %v30 = vld [vmem:[%s29] sm:$0xff]
  %s31 = scalar_lea.vmem %s1, 240
  %32 = vst [vmem:[%s31] sm:$0xff] %v30
  %s33 = scalar_lea.vmem %s0, 112
  %v34 = vld [vmem:[%s33] sm:$0xff]
  %s35 = scalar_lea.vmem %s1, 64
  %36 = vst [vmem:[%s35] sm:$0xff] %v34
  %s37 = scalar_lea.vmem %s0, 304
  %v38 = vld [vmem:[%s37] sm:$0xff]
  %s39 = scalar_lea.vmem %s1, 256
  %40 = vst [vmem:[%s39] sm:$0xff] %v38
  %s41 = scalar_lea.vmem %s0, 96
  %v42 = vld [vmem:[%s41] sm:$0xff]
  %s43 = scalar_lea.vmem %s1, 80
  %44 = vst [vmem:[%s43] sm:$0xff] %v42
  %s45 = scalar_lea.vmem %s0, 288
  %v46 = vld [vmem:[%s45] sm:$0xff]
  %s47 = scalar_lea.vmem %s1, 272
  %48 = vst [vmem:[%s47] sm:$0xff] %v46
  %s49 = scalar_lea.vmem %s0, 80
  %v50 = vld [vmem:[%s49] sm:$0xff]
  %s51 = scalar_lea.vmem %s1, 96
  %52 = vst [vmem:[%s51] sm:$0xff] %v50
  %s53 = scalar_lea.vmem %s0, 272
  %v54 = vld [vmem:[%s53] sm:$0xff]
  %s55 = scalar_lea.vmem %s1, 288
  %56 = vst [vmem:[%s55] sm:$0xff] %v54
  %s57 = scalar_lea.vmem %s0, 64
  %v58 = vld [vmem:[%s57] sm:$0xff]
  %s59 = scalar_lea.vmem %s1, 112
  %60 = vst [vmem:[%s59] sm:$0xff] %v58
  %s61 = scalar_lea.vmem %s0, 256
  %v62 = vld [vmem:[%s61] sm:$0xff]
  %s63 = scalar_lea.vmem %s1, 304
  %64 = vst [vmem:[%s63] sm:$0xff] %v62
  %s65 = scalar_lea.vmem %s0, 48
  %v66 = vld [vmem:[%s65] sm:$0xff]
  %s67 = scalar_lea.vmem %s1, 128
  %68 = vst [vmem:[%s67] sm:$0xff] %v66
  %s69 = scalar_lea.vmem %s0, 240
  %v70 = vld [vmem:[%s69] sm:$0xff]
  %s71 = scalar_lea.vmem %s1, 320
  %72 = vst [vmem:[%s71] sm:$0xff] %v70
  %s73 = scalar_lea.vmem %s0, 32
  %v74 = vld [vmem:[%s73] sm:$0xff]
  %s75 = scalar_lea.vmem %s1, 144
  %76 = vst [vmem:[%s75] sm:$0xff] %v74
  %s77 = scalar_lea.vmem %s0, 224
  %v78 = vld [vmem:[%s77] sm:$0xff]
  %s79 = scalar_lea.vmem %s1, 336
  %80 = vst [vmem:[%s79] sm:$0xff] %v78
  %s81 = scalar_lea.vmem %s0, 16
  %v82 = vld [vmem:[%s81] sm:$0xff]
  %s83 = scalar_lea.vmem %s1, 160
  %84 = vst [vmem:[%s83] sm:$0xff] %v82
  %s85 = scalar_lea.vmem %s0, 208
  %v86 = vld [vmem:[%s85] sm:$0xff]
  %s87 = scalar_lea.vmem %s1, 352
  %88 = vst [vmem:[%s87] sm:$0xff] %v86
  %v89 = vld [vmem:[%s0] sm:$0xff]
  %s90 = scalar_lea.vmem %s1, 176
  %91 = vst [vmem:[%s90] sm:$0xff] %v89
  %s92 = scalar_lea.vmem %s0, 192
  %v93 = vld [vmem:[%s92] sm:$0xff]
  %s94 = scalar_lea.vmem %s1, 368
  %95 = vst [vmem:[%s94] sm:$0xff] %v93
  %s96 = scalar_lea.vmem %s0, 184
  %v97 = vld [vmem:[%s96] sm:$0xff]
  %s98 = scalar_lea.vmem %s1, 8
  %99 = vst [vmem:[%s98] sm:$0xff] %v97
  %s100 = scalar_lea.vmem %s0, 376
  %v101 = vld [vmem:[%s100] sm:$0xff]
  %s102 = scalar_lea.vmem %s1, 200
  %103 = vst [vmem:[%s102] sm:$0xff] %v101
  %s104 = scalar_lea.vmem %s0, 168
  %v105 = vld [vmem:[%s104] sm:$0xff]
  %s106 = scalar_lea.vmem %s1, 24
  %107 = vst [vmem:[%s106] sm:$0xff] %v105
  %s108 = scalar_lea.vmem %s0, 360
  %v109 = vld [vmem:[%s108] sm:$0xff]
  %s110 = scalar_lea.vmem %s1, 216
  %111 = vst [vmem:[%s110] sm:$0xff] %v109
  %s112 = scalar_lea.vmem %s0, 152
  %v113 = vld [vmem:[%s112] sm:$0xff]
  %s114 = scalar_lea.vmem %s1, 40
  %115 = vst [vmem:[%s114] sm:$0xff] %v113
  %s116 = scalar_lea.vmem %s0, 344
  %v117 = vld [vmem:[%s116] sm:$0xff]
  %s118 = scalar_lea.vmem %s1, 232
  %119 = vst [vmem:[%s118] sm:$0xff] %v117
  %s120 = scalar_lea.vmem %s0, 136
  %v121 = vld [vmem:[%s120] sm:$0xff]
  %s122 = scalar_lea.vmem %s1, 56
  %123 = vst [vmem:[%s122] sm:$0xff] %v121
  %s124 = scalar_lea.vmem %s0, 328
  %v125 = vld [vmem:[%s124] sm:$0xff]
  %s126 = scalar_lea.vmem %s1, 248
  %127 = vst [vmem:[%s126] sm:$0xff] %v125
  %s128 = scalar_lea.vmem %s0, 120
  %v129 = vld [vmem:[%s128] sm:$0xff]
  %s130 = scalar_lea.vmem %s1, 72
  %131 = vst [vmem:[%s130] sm:$0xff] %v129
  %s132 = scalar_lea.vmem %s0, 312
  %v133 = vld [vmem:[%s132] sm:$0xff]
  %s134 = scalar_lea.vmem %s1, 264
  %135 = vst [vmem:[%s134] sm:$0xff] %v133
  %s136 = scalar_lea.vmem %s0, 104
  %v137 = vld [vmem:[%s136] sm:$0xff]
  %s138 = scalar_lea.vmem %s1, 88
  %139 = vst [vmem:[%s138] sm:$0xff] %v137
  %s140 = scalar_lea.vmem %s0, 296
  %v141 = vld [vmem:[%s140] sm:$0xff]
  %s142 = scalar_lea.vmem %s1, 280
  %143 = vst [vmem:[%s142] sm:$0xff] %v141
  %s144 = scalar_lea.vmem %s0, 88
  %v145 = vld [vmem:[%s144] sm:$0xff]
  %s146 = scalar_lea.vmem %s1, 104
  %147 = vst [vmem:[%s146] sm:$0xff] %v145
  %s148 = scalar_lea.vmem %s0, 280
  %v149 = vld [vmem:[%s148] sm:$0xff]
  %s150 = scalar_lea.vmem %s1, 296
  %151 = vst [vmem:[%s150] sm:$0xff] %v149
  %s152 = scalar_lea.vmem %s0, 72
  %v153 = vld [vmem:[%s152] sm:$0xff]
  %s154 = scalar_lea.vmem %s1, 120
  %155 = vst [vmem:[%s154] sm:$0xff] %v153
  %s156 = scalar_lea.vmem %s0, 264
  %v157 = vld [vmem:[%s156] sm:$0xff]
  %s158 = scalar_lea.vmem %s1, 312
  %159 = vst [vmem:[%s158] sm:$0xff] %v157
  %s160 = scalar_lea.vmem %s0, 56
  %v161 = vld [vmem:[%s160] sm:$0xff]
  %s162 = scalar_lea.vmem %s1, 136
  %163 = vst [vmem:[%s162] sm:$0xff] %v161
  %s164 = scalar_lea.vmem %s0, 248
  %v165 = vld [vmem:[%s164] sm:$0xff]
  %s166 = scalar_lea.vmem %s1, 328
  %167 = vst [vmem:[%s166] sm:$0xff] %v165
  %s168 = scalar_lea.vmem %s0, 40
  %v169 = vld [vmem:[%s168] sm:$0xff]
  %s170 = scalar_lea.vmem %s1, 152
  %171 = vst [vmem:[%s170] sm:$0xff] %v169
  %s172 = scalar_lea.vmem %s0, 232
  %v173 = vld [vmem:[%s172] sm:$0xff]
  %s174 = scalar_lea.vmem %s1, 344
  %175 = vst [vmem:[%s174] sm:$0xff] %v173
  %s176 = scalar_lea.vmem %s0, 24
  %v177 = vld [vmem:[%s176] sm:$0xff]
  %s178 = scalar_lea.vmem %s1, 168
  %179 = vst [vmem:[%s178] sm:$0xff] %v177
  %s180 = scalar_lea.vmem %s0, 216
  %v181 = vld [vmem:[%s180] sm:$0xff]
  %s182 = scalar_lea.vmem %s1, 360
  %183 = vst [vmem:[%s182] sm:$0xff] %v181
  %s184 = scalar_lea.vmem %s0, 8
  %v185 = vld [vmem:[%s184] sm:$0xff]
  %s186 = scalar_lea.vmem %s1, 184
  %187 = vst [vmem:[%s186] sm:$0xff] %v185
  %s188 = scalar_lea.vmem %s0, 200
  %v189 = vld [vmem:[%s188] sm:$0xff]
  %s190 = scalar_lea.vmem %s1, 376
  %191 = vst [vmem:[%s190] sm:$0xff] %v189

// kernel: fno2d_forward.12
$region0: #{fno2d_forward.12}
  #allocation0 [shape = 'u32[]', space=smem, size = 0x4, offset = 0x4, fixed_abs, tag = 'smem constant byte address 0x4 - core index']
  #allocation1 [shape = 'u32[72,128]{1,0:T(1,128)}', space=vmem, size = 0x9000, scoped, tag = 'internal scratch']
  %s0 = inlined_call_operand.vmem [shape: f32[2,16,640], index: 0, kind: input, shape index: {}]
  %s1 = inlined_call_operand.vmem [shape: f32[2,16,640], index: 1, kind: input, shape index: {}]
  %s2 = inlined_call_operand.vmem [shape: f32[16,16], index: 2, kind: input, shape index: {}]
  %s3 = inlined_call_operand.vmem [shape: f32[16,1], index: 3, kind: input, shape index: {}]
  %s4 = inlined_call_operand.vmem [shape: f32[16,16], index: 4, kind: input, shape index: {}]
  %s5 = inlined_call_operand.vmem [shape: f32[16,1], index: 5, kind: input, shape index: {}]
  %s6 = inlined_call_operand.vmem [shape: f32[2,16,640], index: 6, kind: output, shape index: {}]
  %s7 = sld [smem:[#allocation0]]
  $region57: #{fno2d_forward.12} parent=0
    _
  %s9 = ssub.s32 1, %s7
  %s10 = scalar_select 0, %s9, %s7
  loop: start=0, step=1, limit=4
  $region2: #{fno2d_forward.12} parent=0 // loop_pre_header
    _
  $region3: #{fno2d_forward.12} parent=0 // loop_header
    %s12 = sphi 0, %s16
    %p13 = scmp.ge.s32.totalorder %s12, 4
    %s19 = sphi 0, %s31
    %s20 = sphi 0, %s27
    %s21 = sphi 0, %s19
    %s22 = sphi 0, %s20
    %s23 = sphi 0, %s21
    %s24 = sphi 0, %s22
    %s36 = sphi 0, %s38
    %s39 = sphi 0, %s36
    %s40 = sphi 0, %s39
    %s56 = sphi 0, %s40
    %s64 = sphi 0, %s66
    %s67 = sphi 0, %s64
    %s68 = sphi 0, %s67
    %s84 = sphi 0, %s68
    %s88 = sphi 0, %s88
    %s90 = sphi 0, %s88
    %s91 = sphi 0, %s90
    %s105 = sphi 0, %s91
    %s109 = sphi 0, %s109
    %s111 = sphi 0, %s109
    %s112 = sphi 0, %s111
    %s126 = sphi 0, %s112
    %s130 = sphi 0, %s130
    %s132 = sphi 0, %s130
    %s133 = sphi 0, %s132
    %s147 = sphi 0, %s133
    %s151 = sphi 0, %s151
    %s153 = sphi 0, %s151
    %s154 = sphi 0, %s153
    %s168 = sphi 0, %s154
    %s176 = sphi 0, %s178
    %s179 = sphi 0, %s176
    %s180 = sphi 0, %s179
    %s196 = sphi 0, %s180
  $region4: #{fno2d_forward.12} parent=0 // loop_header_branch
    %15 = sbr.rel (%p13) target = $region8
  $region5: #{fno2d_forward.12} parent=0 // loop_body
    %s17 = ssub.s32 %s12, 1
    %s18 = ssub.s32 %s12, 2
    %s25 = sadd.s32 1, %s20
    %p26 = scmp.ge.s32.totalorder %s25, 1
    %s27 = scalar_select %p26, 0, %s25
    %s28 = sadd.s32 1, %s19
    %s29 = scalar_select %p26, %s28, %s19
    %p30 = scmp.ge.s32.totalorder %s29, 2
    %s31 = scalar_select %p30, 0, %s29
    %s32 = ssub.s32 %s19, %s31
    %s33 = ssub.s32 %s20, %s27
    %s34 = sor.u32 %s32, %s33
    %p35 = scmp.eq.s32.totalorder %s34, 0
    %s37 = sadd.s32 %s36, 1
    %s38 = scalar_select %p35, %s36, %s37
    %p41 = pneg %p35
    %p42 = scmp.eq.s32.totalorder %s12, 1
    %p43 = por %p41, %p42
    %p44 = scmp.ne.s32.totalorder %s36, %s39
    %p45 = scmp.eq.s32.totalorder %s12, 0
    %p46 = por %p44, %p45
    %p47 = scmp.ne.s32.totalorder %s36, %s39
    %p48 = scmp.eq.s32.totalorder %s17, 1
    %p49 = por %p47, %p48
    %p50 = scmp.ne.s32.totalorder %s39, %s40
    %p51 = scmp.eq.s32.totalorder %s17, 0
    %p52 = por %p50, %p51
    %p53 = scmp.ne.s32.totalorder %s39, %s40
    %p54 = scmp.eq.s32.totalorder %s18, 1
    %p55 = por %p53, %p54
    %p57 = scmp.ne.s32.totalorder %s40, %s56
    %p58 = scmp.eq.s32.totalorder %s18, 0
    %p59 = por %p57, %p58
    %s60 = ssub.s32 %s19, %s31
    %s61 = ssub.s32 %s20, %s27
    %s62 = sor.u32 %s60, %s61
    %p63 = scmp.eq.s32.totalorder %s62, 0
    %s65 = sadd.s32 %s64, 1
    %s66 = scalar_select %p63, %s64, %s65
    %p69 = pneg %p63
    %p70 = scmp.eq.s32.totalorder %s12, 1
    %p71 = por %p69, %p70
    %p72 = scmp.ne.s32.totalorder %s64, %s67
    %p73 = scmp.eq.s32.totalorder %s12, 0
    %p74 = por %p72, %p73
    %p75 = scmp.ne.s32.totalorder %s64, %s67
    %p76 = scmp.eq.s32.totalorder %s17, 1
    %p77 = por %p75, %p76
    %p78 = scmp.ne.s32.totalorder %s67, %s68
    %p79 = scmp.eq.s32.totalorder %s17, 0
    %p80 = por %p78, %p79
    %p81 = scmp.ne.s32.totalorder %s67, %s68
    %p82 = scmp.eq.s32.totalorder %s18, 1
    %p83 = por %p81, %p82
    %p85 = scmp.ne.s32.totalorder %s68, %s84
    %p86 = scmp.eq.s32.totalorder %s18, 0
    %p87 = por %p85, %p86
    %s89 = sadd.s32 %s88, 1
    %p92 = scmp.eq.s32.totalorder %s12, 1
    %p93 = scmp.ne.s32.totalorder %s88, %s90
    %p94 = scmp.eq.s32.totalorder %s12, 0
    %p95 = por %p93, %p94
    %p96 = scmp.ne.s32.totalorder %s88, %s90
    %p97 = scmp.eq.s32.totalorder %s17, 1
    %p98 = por %p96, %p97
    %p99 = scmp.ne.s32.totalorder %s90, %s91
    %p100 = scmp.eq.s32.totalorder %s17, 0
    %p101 = por %p99, %p100
    %p102 = scmp.ne.s32.totalorder %s90, %s91
    %p103 = scmp.eq.s32.totalorder %s18, 1
    %p104 = por %p102, %p103
    %p106 = scmp.ne.s32.totalorder %s91, %s105
    %p107 = scmp.eq.s32.totalorder %s18, 0
    %p108 = por %p106, %p107
    %s110 = sadd.s32 %s109, 1
    %p113 = scmp.eq.s32.totalorder %s12, 1
    %p114 = scmp.ne.s32.totalorder %s109, %s111
    %p115 = scmp.eq.s32.totalorder %s12, 0
    %p116 = por %p114, %p115
    %p117 = scmp.ne.s32.totalorder %s109, %s111
    %p118 = scmp.eq.s32.totalorder %s17, 1
    %p119 = por %p117, %p118
    %p120 = scmp.ne.s32.totalorder %s111, %s112
    %p121 = scmp.eq.s32.totalorder %s17, 0
    %p122 = por %p120, %p121
    %p123 = scmp.ne.s32.totalorder %s111, %s112
    %p124 = scmp.eq.s32.totalorder %s18, 1
    %p125 = por %p123, %p124
    %p127 = scmp.ne.s32.totalorder %s112, %s126
    %p128 = scmp.eq.s32.totalorder %s18, 0
    %p129 = por %p127, %p128
    %s131 = sadd.s32 %s130, 1
    %p134 = scmp.eq.s32.totalorder %s12, 1
    %p135 = scmp.ne.s32.totalorder %s130, %s132
    %p136 = scmp.eq.s32.totalorder %s12, 0
    %p137 = por %p135, %p136
    %p138 = scmp.ne.s32.totalorder %s130, %s132
    %p139 = scmp.eq.s32.totalorder %s17, 1
    %p140 = por %p138, %p139
    %p141 = scmp.ne.s32.totalorder %s132, %s133
    %p142 = scmp.eq.s32.totalorder %s17, 0
    %p143 = por %p141, %p142
    %p144 = scmp.ne.s32.totalorder %s132, %s133
    %p145 = scmp.eq.s32.totalorder %s18, 1
    %p146 = por %p144, %p145
    %p148 = scmp.ne.s32.totalorder %s133, %s147
    %p149 = scmp.eq.s32.totalorder %s18, 0
    %p150 = por %p148, %p149
    %s152 = sadd.s32 %s151, 1
    %p155 = scmp.eq.s32.totalorder %s12, 1
    %p156 = scmp.ne.s32.totalorder %s151, %s153
    %p157 = scmp.eq.s32.totalorder %s12, 0
    %p158 = por %p156, %p157
    %p159 = scmp.ne.s32.totalorder %s151, %s153
    %p160 = scmp.eq.s32.totalorder %s17, 1
    %p161 = por %p159, %p160
    %p162 = scmp.ne.s32.totalorder %s153, %s154
    %p163 = scmp.eq.s32.totalorder %s17, 0
    %p164 = por %p162, %p163
    %p165 = scmp.ne.s32.totalorder %s153, %s154
    %p166 = scmp.eq.s32.totalorder %s18, 1
    %p167 = por %p165, %p166
    %p169 = scmp.ne.s32.totalorder %s154, %s168
    %p170 = scmp.eq.s32.totalorder %s18, 0
    %p171 = por %p169, %p170
    %s172 = ssub.s32 %s19, %s31
    %s173 = ssub.s32 %s20, %s27
    %s174 = sor.u32 %s172, %s173
    %p175 = scmp.eq.s32.totalorder %s174, 0
    %s177 = sadd.s32 %s176, 1
    %s178 = scalar_select %p175, %s176, %s177
    %p181 = pneg %p175
    %p182 = scmp.eq.s32.totalorder %s12, 1
    %p183 = por %p181, %p182
    %p184 = scmp.ne.s32.totalorder %s176, %s179
    %p185 = scmp.eq.s32.totalorder %s12, 0
    %p186 = por %p184, %p185
    %p187 = scmp.ne.s32.totalorder %s176, %s179
    %p188 = scmp.eq.s32.totalorder %s17, 1
    %p189 = por %p187, %p188
    %p190 = scmp.ne.s32.totalorder %s179, %s180
    %p191 = scmp.eq.s32.totalorder %s17, 0
    %p192 = por %p190, %p191
    %p193 = scmp.ne.s32.totalorder %s179, %s180
    %p194 = scmp.eq.s32.totalorder %s18, 1
    %p195 = por %p193, %p194
    %p197 = scmp.ne.s32.totalorder %s180, %s196
    %p198 = scmp.eq.s32.totalorder %s18, 0
    %p199 = por %p197, %p198
    %p200 = scmp.le.s32.totalorder 1, %s12
    %p201 = scmp.lt.s32.totalorder %s12, 3
    %p202 = pnand %p200, %p201
    %p203 = pneg %p202
    // Predicated region
    $region9: #{fno2d_forward.12} parent=5 // pred_check
      _
    $region10: #{fno2d_forward.12} parent=5 // pred_check_branch
      %205 = sbr.rel (%p202) target = $region12
    $region11: #{fno2d_forward.12} parent=5 // pred_region
      %s206 = ssub.s32 %s12, 1
      // Predicated region
      $region13: #{fno2d_forward.12} parent=11 // pred_check
        %p207 = pneg %p101
      $region14: #{fno2d_forward.12} parent=11 // pred_check_branch
        %209 = sbr.rel (%p207) target = $region16
      $region15: #{fno2d_forward.12} parent=11 // pred_region
        _
      $region16: #{fno2d_forward.12} parent=11 // pred_fallthru
        _
      // Predicated region
      $region17: #{fno2d_forward.12} parent=11 // pred_check
        %p210 = pneg %p122
      $region18: #{fno2d_forward.12} parent=11 // pred_check_branch
        %212 = sbr.rel (%p210) target = $region20
      $region19: #{fno2d_forward.12} parent=11 // pred_region
        _
      $region20: #{fno2d_forward.12} parent=11 // pred_fallthru
        _
      // Predicated region
      $region21: #{fno2d_forward.12} parent=11 // pred_check
        %p213 = pneg %p143
      $region22: #{fno2d_forward.12} parent=11 // pred_check_branch
        %215 = sbr.rel (%p213) target = $region24
      $region23: #{fno2d_forward.12} parent=11 // pred_region
        _
      $region24: #{fno2d_forward.12} parent=11 // pred_fallthru
        _
      // Predicated region
      $region25: #{fno2d_forward.12} parent=11 // pred_check
        %p216 = pneg %p164
      $region26: #{fno2d_forward.12} parent=11 // pred_check_branch
        %218 = sbr.rel (%p216) target = $region28
      $region27: #{fno2d_forward.12} parent=11 // pred_region
        _
      $region28: #{fno2d_forward.12} parent=11 // pred_fallthru
        _
    $region12: #{fno2d_forward.12} parent=5 // pred_fallthru
      _
    %p219 = scmp.lt.s32.totalorder %s12, 2
    // Predicated region
    $region29: #{fno2d_forward.12} parent=5 // pred_check
      %p220 = pneg %p219
    $region30: #{fno2d_forward.12} parent=5 // pred_check_branch
      %222 = sbr.rel (%p220) target = $region32
    $region31: #{fno2d_forward.12} parent=5 // pred_region
      // Predicated region
      $region33: #{fno2d_forward.12} parent=31 // pred_check
        %p223 = pneg %p46
      $region34: #{fno2d_forward.12} parent=31 // pred_check_branch
        %225 = sbr.rel (%p223) target = $region36
      $region35: #{fno2d_forward.12} parent=31 // pred_region
        %s226 = smul.u32 5, %s20
        %p227 = scmp.lt.s32.totalorder %s19, 1
        %s228 = scalar_select %p227, %s19, 1
        %p229 = scmp.lt.s32.totalorder %s226, 4
        %s230 = scalar_select %p229, %s226, 4
        %s231 = smul.addr %s228, 10
        %s232 = sadd.s32 %s230, %s231
        %s233 = smul.addr %s232, 8
        %s234 = scalar_lea.vmem %s0, %s233
        %s235 = smul.u32 5, %s20
      $region36: #{fno2d_forward.12} parent=31 // pred_fallthru
        _
      // Predicated region
      $region37: #{fno2d_forward.12} parent=31 // pred_check
        %p236 = pneg %p74
      $region38: #{fno2d_forward.12} parent=31 // pred_check_branch
        %238 = sbr.rel (%p236) target = $region40
      $region39: #{fno2d_forward.12} parent=31 // pred_region
        %s239 = smul.u32 5, %s20
        %p240 = scmp.lt.s32.totalorder %s19, 1
        %s241 = scalar_select %p240, %s19, 1
        %p242 = scmp.lt.s32.totalorder %s239, 4
        %s243 = scalar_select %p242, %s239, 4
        %s244 = smul.addr %s241, 10
        %s245 = sadd.s32 %s243, %s244
        %s246 = smul.addr %s245, 8
        %s247 = scalar_lea.vmem %s1, %s246
        %s248 = smul.u32 5, %s20
      $region40: #{fno2d_forward.12} parent=31 // pred_fallthru
        _
    $region32: #{fno2d_forward.12} parent=5 // pred_fallthru
      _
    %p249 = scmp.le.s32.totalorder 1, %s12
    %p250 = scmp.lt.s32.totalorder %s12, 3
    %p251 = pnand %p249, %p250
    %p252 = pneg %p251
    // Predicated region
    $region41: #{fno2d_forward.12} parent=5 // pred_check
      _
    $region42: #{fno2d_forward.12} parent=5 // pred_check_branch
      %254 = sbr.rel (%p251) target = $region44
    $region43: #{fno2d_forward.12} parent=5 // pred_region
      %s255 = ssub.s32 %s12, 1
      %s256 = smul.u32 5, %s22
      %p257 = scmp.lt.s32.totalorder %s21, 1
      %s258 = scalar_select %p257, %s21, 1
      %p259 = scmp.lt.s32.totalorder %s256, 4
      %s260 = scalar_select %p259, %s256, 4
      %s261 = smul.addr %s258, 10
      %s262 = sadd.s32 %s260, %s261
      %s263 = smul.addr %s262, 8
      %s264 = scalar_lea.vmem %s0, %s263
      %p265 = pneg %p52
      %p266 = pneg %p49
      %s267 = smul.u32 5, %s22
      %p268 = scmp.lt.s32.totalorder %s21, 1
      %s269 = scalar_select %p268, %s21, 1
      %p270 = scmp.lt.s32.totalorder %s267, 4
      %s271 = scalar_select %p270, %s267, 4
      %s272 = smul.addr %s269, 10
      %s273 = sadd.s32 %s271, %s272
      %s274 = smul.addr %s273, 8
      %s275 = scalar_lea.vmem %s1, %s274
      %p276 = pneg %p80
      %p277 = pneg %p77
      %p278 = pneg %p101
      %p279 = pneg %p98
      %p280 = pneg %p122
      %p281 = pneg %p119
      %p282 = pneg %p143
      %p283 = pneg %p140
      %p284 = pneg %p164
      %p285 = pneg %p161
      %p286 = pneg %p192
      %p287 = pneg %p189
      %s288 = smul.u32 5, %s22
      %p289 = scmp.lt.s32.totalorder %s21, 1
      %s290 = scalar_select %p289, %s21, 1
      %p291 = scmp.lt.s32.totalorder %s288, 4
      %s292 = scalar_select %p291, %s288, 4
      %s293 = smul.addr %s290, 10
      %s294 = sadd.s32 %s292, %s293
      %s295 = smul.addr %s294, 8
      %s296 = scalar_lea.vmem %s6, %s295
      %s297 = smul.u32 5, %s22
      %p298 = scmp.lt.s32.totalorder %s21, 1
      %s299 = scalar_select %p298, %s21, 1
      %p300 = scmp.lt.s32.totalorder %s297, 4
      %s301 = scalar_select %p300, %s297, 4
      %s302 = smul.addr %s299, 10
      %s303 = sadd.s32 %s301, %s302
      %s304 = smul.addr %s303, 8
      %s305 = scalar_lea.vmem %s0, %s304
      %s306 = smul.u32 5, %s22
      %s307 = smul.u32 5, %s22
      %p308 = scmp.lt.s32.totalorder %s21, 1
      %s309 = scalar_select %p308, %s21, 1
      %p310 = scmp.lt.s32.totalorder %s307, 4
      %s311 = scalar_select %p310, %s307, 4
      %s312 = smul.addr %s309, 10
      %s313 = sadd.s32 %s311, %s312
      %s314 = smul.addr %s313, 8
      %s315 = scalar_lea.vmem %s1, %s314
      %s316 = smul.u32 5, %s22
      %s317 = smul.u32 5, %s22
      %p318 = scmp.lt.s32.totalorder %s21, 1
      %s319 = scalar_select %p318, %s21, 1
      %p320 = scmp.lt.s32.totalorder %s317, 4
      %s321 = scalar_select %p320, %s317, 4
      %s322 = smul.addr %s319, 10
      %s323 = sadd.s32 %s321, %s322
      %s324 = smul.addr %s323, 8
      %s325 = scalar_lea.vmem %s6, %s324
      %s326 = smul.u32 5, %s22
      %v327 = vld [vmem:[%s305] sm:$0xff]
      %v328 = vld [vmem:[%s305 + $0x8] sm:$0xff]
      %v329 = vld [vmem:[%s305 + $0x10] sm:$0xff]
      %v330 = vld [vmem:[%s305 + $0x18] sm:$0xff]
      %v331 = vld [vmem:[%s305 + $0x20] sm:$0xff]
      %v332 = vld [vmem:[%s305 + $0x28] sm:$0xff]
      %v333 = vld [vmem:[%s305 + $0x30] sm:$0xff]
      %v334 = vld [vmem:[%s305 + $0x38] sm:$0xff]
      %v335 = vld [vmem:[%s305 + $0x40] sm:$0xff]
      %v336 = vld [vmem:[%s305 + $0x48] sm:$0xff]
      %v337 = vld [vmem:[%s2] sm:$0xff]
      %v338 = vld [vmem:[%s2 + $0x8] sm:$0xff]
      %v339 = vld [vmem:[%s3] sm:$0xff]
      %v340 = vld [vmem:[%s3 + $0x8] sm:$0xff]
      %342 = vset.pattern.permute.xlu0 0
      %343 = vperm.xlu0 %342, %v339
      %v344 = vpop.permute.xlu0 %343
      %347 = vset.pattern.permute.xlu0 0
      %348 = vperm.xlu0 %347, %v340
      %v349 = vpop.permute.xlu0 %348
      %vm351 = vcmask 130048
      %v353 = vsel %vm351, %v337, 0
      %v356 = vsel %vm351, %v338, 0
      %358 = vmatpush.msra.mxu0 0.0
      %359 = vmatpush.msra.mxu0 0.0
      %360 = vmatpush.msra.mxu0 0.0
      %361 = vmatpush.msra.mxu0 0.0
      %362 = vmatpush.msra.mxu0 0.0
      %363 = vmatpush.msra.mxu0 0.0
      %364 = vmatpush.msra.mxu0 0.0
      %365 = vmatpush.msra.mxu0 0.0
      %366 = vmatpush.msra.mxu0 0.0
      %367 = vmatpush.msra.mxu0 0.0
      %368 = vmatpush.msra.mxu0 0.0
      %369 = vmatpush.msra.mxu0 0.0
      %370 = vmatpush.msra.mxu0 0.0
      %371 = vmatpush.msra.mxu0 0.0
      %372 = vmatpush.msra.mxu0 %v332
      %373 = vmatpush.msra.mxu0 %v327
      %374 = vmatmul.f32.gmra.mxu0 %v353
      %v375 = vpop.f32.mrf.mxu0
      %v376 = vadd.f32 %v344, %v375
      %377 = vmatmul.f32.gmra.mxu0 %v356
      %v378 = vpop.f32.mrf.mxu0
      %v379 = vadd.f32 %v349, %v378
      %380 = vdwg.mxu0
      %381 = vmatpush.msra.mxu0 0.0
      %382 = vmatpush.msra.mxu0 0.0
      %383 = vmatpush.msra.mxu0 0.0
      %384 = vmatpush.msra.mxu0 0.0
      %385 = vmatpush.msra.mxu0 0.0
      %386 = vmatpush.msra.mxu0 0.0
      %387 = vmatpush.msra.mxu0 0.0
      %388 = vmatpush.msra.mxu0 0.0
      %389 = vmatpush.msra.mxu0 0.0
      %390 = vmatpush.msra.mxu0 0.0
      %391 = vmatpush.msra.mxu0 0.0
      %392 = vmatpush.msra.mxu0 0.0
      %393 = vmatpush.msra.mxu0 0.0
      %394 = vmatpush.msra.mxu0 0.0
      %395 = vmatpush.msra.mxu0 %v333
      %396 = vmatpush.msra.mxu0 %v328
      %397 = vmatmul.f32.gmra.mxu0 %v353
      %v398 = vpop.f32.mrf.mxu0
      %v399 = vadd.f32 %v344, %v398
      %400 = vmatmul.f32.gmra.mxu0 %v356
      %v401 = vpop.f32.mrf.mxu0
      %v402 = vadd.f32 %v349, %v401
      %403 = vdwg.mxu0
      %404 = vmatpush.msra.mxu0 0.0
      %405 = vmatpush.msra.mxu0 0.0
      %406 = vmatpush.msra.mxu0 0.0
      %407 = vmatpush.msra.mxu0 0.0
      %408 = vmatpush.msra.mxu0 0.0
      %409 = vmatpush.msra.mxu0 0.0
      %410 = vmatpush.msra.mxu0 0.0
      %411 = vmatpush.msra.mxu0 0.0
      %412 = vmatpush.msra.mxu0 0.0
      %413 = vmatpush.msra.mxu0 0.0
      %414 = vmatpush.msra.mxu0 0.0
      %415 = vmatpush.msra.mxu0 0.0
      %416 = vmatpush.msra.mxu0 0.0
      %417 = vmatpush.msra.mxu0 0.0
      %418 = vmatpush.msra.mxu0 %v334
      %419 = vmatpush.msra.mxu0 %v329
      %420 = vmatmul.f32.gmra.mxu0 %v353
      %v421 = vpop.f32.mrf.mxu0
      %v422 = vadd.f32 %v344, %v421
      %423 = vmatmul.f32.gmra.mxu0 %v356
      %v424 = vpop.f32.mrf.mxu0
      %v425 = vadd.f32 %v349, %v424
      %426 = vdwg.mxu0
      %427 = vmatpush.msra.mxu0 0.0
      %428 = vmatpush.msra.mxu0 0.0
      %429 = vmatpush.msra.mxu0 0.0
      %430 = vmatpush.msra.mxu0 0.0
      %431 = vmatpush.msra.mxu0 0.0
      %432 = vmatpush.msra.mxu0 0.0
      %433 = vmatpush.msra.mxu0 0.0
      %434 = vmatpush.msra.mxu0 0.0
      %435 = vmatpush.msra.mxu0 0.0
      %436 = vmatpush.msra.mxu0 0.0
      %437 = vmatpush.msra.mxu0 0.0
      %438 = vmatpush.msra.mxu0 0.0
      %439 = vmatpush.msra.mxu0 0.0
      %440 = vmatpush.msra.mxu0 0.0
      %441 = vmatpush.msra.mxu0 %v335
      %442 = vmatpush.msra.mxu0 %v330
      %443 = vmatmul.f32.gmra.mxu0 %v353
      %v444 = vpop.f32.mrf.mxu0
      %v445 = vadd.f32 %v344, %v444
      %446 = vmatmul.f32.gmra.mxu0 %v356
      %v447 = vpop.f32.mrf.mxu0
      %v448 = vadd.f32 %v349, %v447
      %449 = vdwg.mxu0
      %450 = vmatpush.msra.mxu0 0.0
      %451 = vmatpush.msra.mxu0 0.0
      %452 = vmatpush.msra.mxu0 0.0
      %453 = vmatpush.msra.mxu0 0.0
      %454 = vmatpush.msra.mxu0 0.0
      %455 = vmatpush.msra.mxu0 0.0
      %456 = vmatpush.msra.mxu0 0.0
      %457 = vmatpush.msra.mxu0 0.0
      %458 = vmatpush.msra.mxu0 0.0
      %459 = vmatpush.msra.mxu0 0.0
      %460 = vmatpush.msra.mxu0 0.0
      %461 = vmatpush.msra.mxu0 0.0
      %462 = vmatpush.msra.mxu0 0.0
      %463 = vmatpush.msra.mxu0 0.0
      %464 = vmatpush.msra.mxu0 %v336
      %465 = vmatpush.msra.mxu0 %v331
      %466 = vmatmul.f32.gmra.mxu0 %v353
      %v467 = vpop.f32.mrf.mxu0
      %v468 = vadd.f32 %v344, %v467
      %469 = vmatmul.f32.gmra.mxu0 %v356
      %v470 = vpop.f32.mrf.mxu0
      %v471 = vadd.f32 %v349, %v470
      %472 = vdwg.mxu0
      %v473 = vmul.f32 %v376, 0.5
      %v474 = vmul.f32 %v399, 0.5
      %v475 = vmul.f32 %v422, 0.5
      %v476 = vmul.f32 %v445, 0.5
      %v477 = vmul.f32 %v468, 0.5
      %v478 = vmul.f32 %v379, 0.5
      %v479 = vmul.f32 %v402, 0.5
      %v480 = vmul.f32 %v425, 0.5
      %v481 = vmul.f32 %v448, 0.5
      %v482 = vmul.f32 %v471, 0.5
      %v483 = vmul.f32 %v376, 0.70710677
      %v484 = vmul.f32 %v399, 0.70710677
      %v485 = vmul.f32 %v422, 0.70710677
      %v486 = vmul.f32 %v445, 0.70710677
      %v487 = vmul.f32 %v468, 0.70710677
      %v488 = vmul.f32 %v379, 0.70710677
      %v489 = vmul.f32 %v402, 0.70710677
      %v490 = vmul.f32 %v425, 0.70710677
      %v491 = vmul.f32 %v448, 0.70710677
      %v492 = vmul.f32 %v471, 0.70710677
      %v493 = vmul.f32 %v483, %v483
      %v494 = vmin.f32 16.0, %v493
      %v495 = vmul.f32 %v494, 2.1237322e-06
      %v496 = vadd.f32 %v495, 0.00028619796
      %v497 = vmul.f32 %v494, %v496
      %v498 = vadd.f32 %v497, 0.0036580483
      %v499 = vmul.f32 %v494, %v498
      %v500 = vadd.f32 %v499, 0.05243302
      %v501 = vmul.f32 %v494, %v500
      %v502 = vadd.f32 %v501, 0.18741608
      %v503 = vmul.f32 %v494, %v502
      %v504 = vadd.f32 %v503, 1.1283791
      %v505 = vmul.f32 %v483, %v504
      %v506 = vmul.f32 %v494, 3.8918573e-05
      %v507 = vadd.f32 %v506, 0.001143296
      %v508 = vmul.f32 %v494, %v507
      %v509 = vadd.f32 %v508, 0.014752088
      %v510 = vmul.f32 %v494, %v509
      %v511 = vadd.f32 %v510, 0.112945676
      %v512 = vmul.f32 %v494, %v511
      %v513 = vadd.f32 %v512, 0.4994258
      %v514 = vmul.f32 %v494, %v513
      %v515 = vadd.f32 %v514, 1.0
      %v516 = vrcp.pop %v515
      %v517 = vmul.f32 %v515, %v516
      %v518 = vsub.f32 1.0, %v517
      %v519 = vmul.f32 %v516, %v518
      %v520 = vadd.f32 %v516, %v519
      %vm521 = vweird.f32 %v515
      %vm522 = vweird.f32 %v516
      %vm523 = vmor %vm521, %vm522
      %v524 = vsel %vm523, %v516, %v520
      %v525 = vand.u32 2147483647, %v515
      %vm526 = vcmp.eq.f32.partialorder %v525, 8.507059e+37
      %v527 = vand.u32 %v515, 2147483648
      %v528 = vor.u32 1.1754944e-38, %v527
      %v529 = vsel %vm526, %v528, %v524
      %v530 = vmul.f32 %v505, %v529
      %v531 = vmin.f32 %v530, 1.0
      %v532 = vmax.f32 %v531, -1.0
      %v533 = vmul.f32 %v484, %v484
      %v534 = vmin.f32 16.0, %v533
      %v535 = vmul.f32 %v534, 2.1237322e-06
      %v536 = vadd.f32 %v535, 0.00028619796
      %v537 = vmul.f32 %v534, %v536
      %v538 = vadd.f32 %v537, 0.0036580483
      %v539 = vmul.f32 %v534, %v538
      %v540 = vadd.f32 %v539, 0.05243302
      %v541 = vmul.f32 %v534, %v540
      %v542 = vadd.f32 %v541, 0.18741608
      %v543 = vmul.f32 %v534, %v542
      %v544 = vadd.f32 %v543, 1.1283791
      %v545 = vmul.f32 %v484, %v544
      %v546 = vmul.f32 %v534, 3.8918573e-05
      %v547 = vadd.f32 %v546, 0.001143296
      %v548 = vmul.f32 %v534, %v547
      %v549 = vadd.f32 %v548, 0.014752088
      %v550 = vmul.f32 %v534, %v549
      %v551 = vadd.f32 %v550, 0.112945676
      %v552 = vmul.f32 %v534, %v551
      %v553 = vadd.f32 %v552, 0.4994258
      %v554 = vmul.f32 %v534, %v553
      %v555 = vadd.f32 %v554, 1.0
      %v556 = vrcp.pop %v555
      %v557 = vmul.f32 %v555, %v556
      %v558 = vsub.f32 1.0, %v557
      %v559 = vmul.f32 %v556, %v558
      %v560 = vadd.f32 %v556, %v559
      %vm561 = vweird.f32 %v555
      %vm562 = vweird.f32 %v556
      %vm563 = vmor %vm561, %vm562
      %v564 = vsel %vm563, %v556, %v560
      %v565 = vand.u32 2147483647, %v555
      %vm566 = vcmp.eq.f32.partialorder %v565, 8.507059e+37
      %v567 = vand.u32 %v555, 2147483648
      %v568 = vor.u32 1.1754944e-38, %v567
      %v569 = vsel %vm566, %v568, %v564
      %v570 = vmul.f32 %v545, %v569
      %v571 = vmin.f32 %v570, 1.0
      %v572 = vmax.f32 %v571, -1.0
      %v573 = vmul.f32 %v485, %v485
      %v574 = vmin.f32 16.0, %v573
      %v575 = vmul.f32 %v574, 2.1237322e-06
      %v576 = vadd.f32 %v575, 0.00028619796
      %v577 = vmul.f32 %v574, %v576
      %v578 = vadd.f32 %v577, 0.0036580483
      %v579 = vmul.f32 %v574, %v578
      %v580 = vadd.f32 %v579, 0.05243302
      %v581 = vmul.f32 %v574, %v580
      %v582 = vadd.f32 %v581, 0.18741608
      %v583 = vmul.f32 %v574, %v582
      %v584 = vadd.f32 %v583, 1.1283791
      %v585 = vmul.f32 %v485, %v584
      %v586 = vmul.f32 %v574, 3.8918573e-05
      %v587 = vadd.f32 %v586, 0.001143296
      %v588 = vmul.f32 %v574, %v587
      %v589 = vadd.f32 %v588, 0.014752088
      %v590 = vmul.f32 %v574, %v589
      %v591 = vadd.f32 %v590, 0.112945676
      %v592 = vmul.f32 %v574, %v591
      %v593 = vadd.f32 %v592, 0.4994258
      %v594 = vmul.f32 %v574, %v593
      %v595 = vadd.f32 %v594, 1.0
      %v596 = vrcp.pop %v595
      %v597 = vmul.f32 %v595, %v596
      %v598 = vsub.f32 1.0, %v597
      %v599 = vmul.f32 %v596, %v598
      %v600 = vadd.f32 %v596, %v599
      %vm601 = vweird.f32 %v595
      %vm602 = vweird.f32 %v596
      %vm603 = vmor %vm601, %vm602
      %v604 = vsel %vm603, %v596, %v600
      %v605 = vand.u32 2147483647, %v595
      %vm606 = vcmp.eq.f32.partialorder %v605, 8.507059e+37
      %v607 = vand.u32 %v595, 2147483648
      %v608 = vor.u32 1.1754944e-38, %v607
      %v609 = vsel %vm606, %v608, %v604
      %v610 = vmul.f32 %v585, %v609
      %v611 = vmin.f32 %v610, 1.0
      %v612 = vmax.f32 %v611, -1.0
      %v613 = vmul.f32 %v486, %v486
      %v614 = vmin.f32 16.0, %v613
      %v615 = vmul.f32 %v614, 2.1237322e-06
      %v616 = vadd.f32 %v615, 0.00028619796
      %v617 = vmul.f32 %v614, %v616
      %v618 = vadd.f32 %v617, 0.0036580483
      %v619 = vmul.f32 %v614, %v618
      %v620 = vadd.f32 %v619, 0.05243302
      %v621 = vmul.f32 %v614, %v620
      %v622 = vadd.f32 %v621, 0.18741608
      %v623 = vmul.f32 %v614, %v622
      %v624 = vadd.f32 %v623, 1.1283791
      %v625 = vmul.f32 %v486, %v624
      %v626 = vmul.f32 %v614, 3.8918573e-05
      %v627 = vadd.f32 %v626, 0.001143296
      %v628 = vmul.f32 %v614, %v627
      %v629 = vadd.f32 %v628, 0.014752088
      %v630 = vmul.f32 %v614, %v629
      %v631 = vadd.f32 %v630, 0.112945676
      %v632 = vmul.f32 %v614, %v631
      %v633 = vadd.f32 %v632, 0.4994258
      %v634 = vmul.f32 %v614, %v633
      %v635 = vadd.f32 %v634, 1.0
      %v636 = vrcp.pop %v635
      %v637 = vmul.f32 %v635, %v636
      %v638 = vsub.f32 1.0, %v637
      %v639 = vmul.f32 %v636, %v638
      %v640 = vadd.f32 %v636, %v639
      %vm641 = vweird.f32 %v635
      %vm642 = vweird.f32 %v636
      %vm643 = vmor %vm641, %vm642
      %v644 = vsel %vm643, %v636, %v640
      %v645 = vand.u32 2147483647, %v635
      %vm646 = vcmp.eq.f32.partialorder %v645, 8.507059e+37
      %v647 = vand.u32 %v635, 2147483648
      %v648 = vor.u32 1.1754944e-38, %v647
      %v649 = vsel %vm646, %v648, %v644
      %v650 = vmul.f32 %v625, %v649
      %v651 = vmin.f32 %v650, 1.0
      %v652 = vmax.f32 %v651, -1.0
      %v653 = vmul.f32 %v487, %v487
      %v654 = vmin.f32 16.0, %v653
      %v655 = vmul.f32 %v654, 2.1237322e-06
      %v656 = vadd.f32 %v655, 0.00028619796
      %v657 = vmul.f32 %v654, %v656
      %v658 = vadd.f32 %v657, 0.0036580483
      %v659 = vmul.f32 %v654, %v658
      %v660 = vadd.f32 %v659, 0.05243302
      %v661 = vmul.f32 %v654, %v660
      %v662 = vadd.f32 %v661, 0.18741608
      %v663 = vmul.f32 %v654, %v662
      %v664 = vadd.f32 %v663, 1.1283791
      %v665 = vmul.f32 %v487, %v664
      %v666 = vmul.f32 %v654, 3.8918573e-05
      %v667 = vadd.f32 %v666, 0.001143296
      %v668 = vmul.f32 %v654, %v667
      %v669 = vadd.f32 %v668, 0.014752088
      %v670 = vmul.f32 %v654, %v669
      %v671 = vadd.f32 %v670, 0.112945676
      %v672 = vmul.f32 %v654, %v671
      %v673 = vadd.f32 %v672, 0.4994258
      %v674 = vmul.f32 %v654, %v673
      %v675 = vadd.f32 %v674, 1.0
      %v676 = vrcp.pop %v675
      %v677 = vmul.f32 %v675, %v676
      %v678 = vsub.f32 1.0, %v677
      %v679 = vmul.f32 %v676, %v678
      %v680 = vadd.f32 %v676, %v679
      %vm681 = vweird.f32 %v675
      %vm682 = vweird.f32 %v676
      %vm683 = vmor %vm681, %vm682
      %v684 = vsel %vm683, %v676, %v680
      %v685 = vand.u32 2147483647, %v675
      %vm686 = vcmp.eq.f32.partialorder %v685, 8.507059e+37
      %v687 = vand.u32 %v675, 2147483648
      %v688 = vor.u32 1.1754944e-38, %v687
      %v689 = vsel %vm686, %v688, %v684
      %v690 = vmul.f32 %v665, %v689
      %v691 = vmin.f32 %v690, 1.0
      %v692 = vmax.f32 %v691, -1.0
      %v693 = vmul.f32 %v488, %v488
      %v694 = vmin.f32 16.0, %v693
      %v695 = vmul.f32 %v694, 2.1237322e-06
      %v696 = vadd.f32 %v695, 0.00028619796
      %v697 = vmul.f32 %v694, %v696
      %v698 = vadd.f32 %v697, 0.0036580483
      %v699 = vmul.f32 %v694, %v698
      %v700 = vadd.f32 %v699, 0.05243302
      %v701 = vmul.f32 %v694, %v700
      %v702 = vadd.f32 %v701, 0.18741608
      %v703 = vmul.f32 %v694, %v702
      %v704 = vadd.f32 %v703, 1.1283791
      %v705 = vmul.f32 %v488, %v704
      %v706 = vmul.f32 %v694, 3.8918573e-05
      %v707 = vadd.f32 %v706, 0.001143296
      %v708 = vmul.f32 %v694, %v707
      %v709 = vadd.f32 %v708, 0.014752088
      %v710 = vmul.f32 %v694, %v709
      %v711 = vadd.f32 %v710, 0.112945676
      %v712 = vmul.f32 %v694, %v711
      %v713 = vadd.f32 %v712, 0.4994258
      %v714 = vmul.f32 %v694, %v713
      %v715 = vadd.f32 %v714, 1.0
      %v716 = vrcp.pop %v715
      %v717 = vmul.f32 %v715, %v716
      %v718 = vsub.f32 1.0, %v717
      %v719 = vmul.f32 %v716, %v718
      %v720 = vadd.f32 %v716, %v719
      %vm721 = vweird.f32 %v715
      %vm722 = vweird.f32 %v716
      %vm723 = vmor %vm721, %vm722
      %v724 = vsel %vm723, %v716, %v720
      %v725 = vand.u32 2147483647, %v715
      %vm726 = vcmp.eq.f32.partialorder %v725, 8.507059e+37
      %v727 = vand.u32 %v715, 2147483648
      %v728 = vor.u32 1.1754944e-38, %v727
      %v729 = vsel %vm726, %v728, %v724
      %v730 = vmul.f32 %v705, %v729
      %v731 = vmin.f32 %v730, 1.0
      %v732 = vmax.f32 %v731, -1.0
      %v733 = vmul.f32 %v489, %v489
      %v734 = vmin.f32 16.0, %v733
      %v735 = vmul.f32 %v734, 2.1237322e-06
      %v736 = vadd.f32 %v735, 0.00028619796
      %v737 = vmul.f32 %v734, %v736
      %v738 = vadd.f32 %v737, 0.0036580483
      %v739 = vmul.f32 %v734, %v738
      %v740 = vadd.f32 %v739, 0.05243302
      %v741 = vmul.f32 %v734, %v740
      %v742 = vadd.f32 %v741, 0.18741608
      %v743 = vmul.f32 %v734, %v742
      %v744 = vadd.f32 %v743, 1.1283791
      %v745 = vmul.f32 %v489, %v744
      %v746 = vmul.f32 %v734, 3.8918573e-05
      %v747 = vadd.f32 %v746, 0.001143296
      %v748 = vmul.f32 %v734, %v747
      %v749 = vadd.f32 %v748, 0.014752088
      %v750 = vmul.f32 %v734, %v749
      %v751 = vadd.f32 %v750, 0.112945676
      %v752 = vmul.f32 %v734, %v751
      %v753 = vadd.f32 %v752, 0.4994258
      %v754 = vmul.f32 %v734, %v753
      %v755 = vadd.f32 %v754, 1.0
      %v756 = vrcp.pop %v755
      %v757 = vmul.f32 %v755, %v756
      %v758 = vsub.f32 1.0, %v757
      %v759 = vmul.f32 %v756, %v758
      %v760 = vadd.f32 %v756, %v759
      %vm761 = vweird.f32 %v755
      %vm762 = vweird.f32 %v756
      %vm763 = vmor %vm761, %vm762
      %v764 = vsel %vm763, %v756, %v760
      %v765 = vand.u32 2147483647, %v755
      %vm766 = vcmp.eq.f32.partialorder %v765, 8.507059e+37
      %v767 = vand.u32 %v755, 2147483648
      %v768 = vor.u32 1.1754944e-38, %v767
      %v769 = vsel %vm766, %v768, %v764
      %v770 = vmul.f32 %v745, %v769
      %v771 = vmin.f32 %v770, 1.0
      %v772 = vmax.f32 %v771, -1.0
      %v773 = vmul.f32 %v490, %v490
      %v774 = vmin.f32 16.0, %v773
      %v775 = vmul.f32 %v774, 2.1237322e-06
      %v776 = vadd.f32 %v775, 0.00028619796
      %v777 = vmul.f32 %v774, %v776
      %v778 = vadd.f32 %v777, 0.0036580483
      %v779 = vmul.f32 %v774, %v778
      %v780 = vadd.f32 %v779, 0.05243302
      %v781 = vmul.f32 %v774, %v780
      %v782 = vadd.f32 %v781, 0.18741608
      %v783 = vmul.f32 %v774, %v782
      %v784 = vadd.f32 %v783, 1.1283791
      %v785 = vmul.f32 %v490, %v784
      %v786 = vmul.f32 %v774, 3.8918573e-05
      %v787 = vadd.f32 %v786, 0.001143296
      %v788 = vmul.f32 %v774, %v787
      %v789 = vadd.f32 %v788, 0.014752088
      %v790 = vmul.f32 %v774, %v789
      %v791 = vadd.f32 %v790, 0.112945676
      %v792 = vmul.f32 %v774, %v791
      %v793 = vadd.f32 %v792, 0.4994258
      %v794 = vmul.f32 %v774, %v793
      %v795 = vadd.f32 %v794, 1.0
      %v796 = vrcp.pop %v795
      %v797 = vmul.f32 %v795, %v796
      %v798 = vsub.f32 1.0, %v797
      %v799 = vmul.f32 %v796, %v798
      %v800 = vadd.f32 %v796, %v799
      %vm801 = vweird.f32 %v795
      %vm802 = vweird.f32 %v796
      %vm803 = vmor %vm801, %vm802
      %v804 = vsel %vm803, %v796, %v800
      %v805 = vand.u32 2147483647, %v795
      %vm806 = vcmp.eq.f32.partialorder %v805, 8.507059e+37
      %v807 = vand.u32 %v795, 2147483648
      %v808 = vor.u32 1.1754944e-38, %v807
      %v809 = vsel %vm806, %v808, %v804
      %v810 = vmul.f32 %v785, %v809
      %v811 = vmin.f32 %v810, 1.0
      %v812 = vmax.f32 %v811, -1.0
      %v813 = vmul.f32 %v491, %v491
      %v814 = vmin.f32 16.0, %v813
      %v815 = vmul.f32 %v814, 2.1237322e-06
      %v816 = vadd.f32 %v815, 0.00028619796
      %v817 = vmul.f32 %v814, %v816
      %v818 = vadd.f32 %v817, 0.0036580483
      %v819 = vmul.f32 %v814, %v818
      %v820 = vadd.f32 %v819, 0.05243302
      %v821 = vmul.f32 %v814, %v820
      %v822 = vadd.f32 %v821, 0.18741608
      %v823 = vmul.f32 %v814, %v822
      %v824 = vadd.f32 %v823, 1.1283791
      %v825 = vmul.f32 %v491, %v824
      %v826 = vmul.f32 %v814, 3.8918573e-05
      %v827 = vadd.f32 %v826, 0.001143296
      %v828 = vmul.f32 %v814, %v827
      %v829 = vadd.f32 %v828, 0.014752088
      %v830 = vmul.f32 %v814, %v829
      %v831 = vadd.f32 %v830, 0.112945676
      %v832 = vmul.f32 %v814, %v831
      %v833 = vadd.f32 %v832, 0.4994258
      %v834 = vmul.f32 %v814, %v833
      %v835 = vadd.f32 %v834, 1.0
      %v836 = vrcp.pop %v835
      %v837 = vmul.f32 %v835, %v836
      %v838 = vsub.f32 1.0, %v837
      %v839 = vmul.f32 %v836, %v838
      %v840 = vadd.f32 %v836, %v839
      %vm841 = vweird.f32 %v835
      %vm842 = vweird.f32 %v836
      %vm843 = vmor %vm841, %vm842
      %v844 = vsel %vm843, %v836, %v840
      %v845 = vand.u32 2147483647, %v835
      %vm846 = vcmp.eq.f32.partialorder %v845, 8.507059e+37
      %v847 = vand.u32 %v835, 2147483648
      %v848 = vor.u32 1.1754944e-38, %v847
      %v849 = vsel %vm846, %v848, %v844
      %v850 = vmul.f32 %v825, %v849
      %v851 = vmin.f32 %v850, 1.0
      %v852 = vmax.f32 %v851, -1.0
      %v853 = vmul.f32 %v492, %v492
      %v854 = vmin.f32 16.0, %v853
      %v855 = vmul.f32 %v854, 2.1237322e-06
      %v856 = vadd.f32 %v855, 0.00028619796
      %v857 = vmul.f32 %v854, %v856
      %v858 = vadd.f32 %v857, 0.0036580483
      %v859 = vmul.f32 %v854, %v858
      %v860 = vadd.f32 %v859, 0.05243302
      %v861 = vmul.f32 %v854, %v860
      %v862 = vadd.f32 %v861, 0.18741608
      %v863 = vmul.f32 %v854, %v862
      %v864 = vadd.f32 %v863, 1.1283791
      %v865 = vmul.f32 %v492, %v864
      %v866 = vmul.f32 %v854, 3.8918573e-05
      %v867 = vadd.f32 %v866, 0.001143296
      %v868 = vmul.f32 %v854, %v867
      %v869 = vadd.f32 %v868, 0.014752088
      %v870 = vmul.f32 %v854, %v869
      %v871 = vadd.f32 %v870, 0.112945676
      %v872 = vmul.f32 %v854, %v871
      %v873 = vadd.f32 %v872, 0.4994258
      %v874 = vmul.f32 %v854, %v873
      %v875 = vadd.f32 %v874, 1.0
      %v876 = vrcp.pop %v875
      %v877 = vmul.f32 %v875, %v876
      %v878 = vsub.f32 1.0, %v877
      %v879 = vmul.f32 %v876, %v878
      %v880 = vadd.f32 %v876, %v879
      %vm881 = vweird.f32 %v875
      %vm882 = vweird.f32 %v876
      %vm883 = vmor %vm881, %vm882
      %v884 = vsel %vm883, %v876, %v880
      %v885 = vand.u32 2147483647, %v875
      %vm886 = vcmp.eq.f32.partialorder %v885, 8.507059e+37
      %v887 = vand.u32 %v875, 2147483648
      %v888 = vor.u32 1.1754944e-38, %v887
      %v889 = vsel %vm886, %v888, %v884
      %v890 = vmul.f32 %v865, %v889
      %v891 = vmin.f32 %v890, 1.0
      %v892 = vmax.f32 %v891, -1.0
      %v893 = vadd.f32 %v532, 1.0
      %v894 = vadd.f32 %v572, 1.0
      %v895 = vadd.f32 %v612, 1.0
      %v896 = vadd.f32 %v652, 1.0
      %v897 = vadd.f32 %v692, 1.0
      %v898 = vadd.f32 %v732, 1.0
      %v899 = vadd.f32 %v772, 1.0
      %v900 = vadd.f32 %v812, 1.0
      %v901 = vadd.f32 %v852, 1.0
      %v902 = vadd.f32 %v892, 1.0
      %v903 = vmul.f32 %v473, %v893
      %v904 = vmul.f32 %v474, %v894
      %v905 = vmul.f32 %v475, %v895
      %v906 = vmul.f32 %v476, %v896
      %v907 = vmul.f32 %v477, %v897
      %v908 = vmul.f32 %v478, %v898
      %v909 = vmul.f32 %v479, %v899
      %v910 = vmul.f32 %v480, %v900
      %v911 = vmul.f32 %v481, %v901
      %v912 = vmul.f32 %v482, %v902
      %v913 = vld [vmem:[%s4] sm:$0xff]
      %v914 = vld [vmem:[%s4 + $0x8] sm:$0xff]
      %v915 = vld [vmem:[%s5] sm:$0xff]
      %v916 = vld [vmem:[%s5 + $0x8] sm:$0xff]
      %918 = vset.pattern.permute.xlu0 0
      %919 = vperm.xlu0 %918, %v915
      %v920 = vpop.permute.xlu0 %919
      %923 = vset.pattern.permute.xlu0 0
      %924 = vperm.xlu0 %923, %v916
      %v925 = vpop.permute.xlu0 %924
      %v928 = vsel %vm351, %v913, 0
      %v931 = vsel %vm351, %v914, 0
      %933 = vmatpush.msra.mxu0 0.0
      %934 = vmatpush.msra.mxu0 0.0
      %935 = vmatpush.msra.mxu0 0.0
      %936 = vmatpush.msra.mxu0 0.0
      %937 = vmatpush.msra.mxu0 0.0
      %938 = vmatpush.msra.mxu0 0.0
      %939 = vmatpush.msra.mxu0 0.0
      %940 = vmatpush.msra.mxu0 0.0
      %941 = vmatpush.msra.mxu0 0.0
      %942 = vmatpush.msra.mxu0 0.0
      %943 = vmatpush.msra.mxu0 0.0
      %944 = vmatpush.msra.mxu0 0.0
      %945 = vmatpush.msra.mxu0 0.0
      %946 = vmatpush.msra.mxu0 0.0
      %947 = vmatpush.msra.mxu0 %v908
      %948 = vmatpush.msra.mxu0 %v903
      %949 = vmatmul.f32.gmra.mxu0 %v928
      %v950 = vpop.f32.mrf.mxu0
      %v951 = vadd.f32 %v920, %v950
      %952 = vmatmul.f32.gmra.mxu0 %v931
      %v953 = vpop.f32.mrf.mxu0
      %v954 = vadd.f32 %v925, %v953
      %955 = vdwg.mxu0
      %956 = vmatpush.msra.mxu0 0.0
      %957 = vmatpush.msra.mxu0 0.0
      %958 = vmatpush.msra.mxu0 0.0
      %959 = vmatpush.msra.mxu0 0.0
      %960 = vmatpush.msra.mxu0 0.0
      %961 = vmatpush.msra.mxu0 0.0
      %962 = vmatpush.msra.mxu0 0.0
      %963 = vmatpush.msra.mxu0 0.0
      %964 = vmatpush.msra.mxu0 0.0
      %965 = vmatpush.msra.mxu0 0.0
      %966 = vmatpush.msra.mxu0 0.0
      %967 = vmatpush.msra.mxu0 0.0
      %968 = vmatpush.msra.mxu0 0.0
      %969 = vmatpush.msra.mxu0 0.0
      %970 = vmatpush.msra.mxu0 %v909
      %971 = vmatpush.msra.mxu0 %v904
      %972 = vmatmul.f32.gmra.mxu0 %v928
      %v973 = vpop.f32.mrf.mxu0
      %v974 = vadd.f32 %v920, %v973
      %975 = vmatmul.f32.gmra.mxu0 %v931
      %v976 = vpop.f32.mrf.mxu0
      %v977 = vadd.f32 %v925, %v976
      %978 = vdwg.mxu0
      %979 = vmatpush.msra.mxu0 0.0
      %980 = vmatpush.msra.mxu0 0.0
      %981 = vmatpush.msra.mxu0 0.0
      %982 = vmatpush.msra.mxu0 0.0
      %983 = vmatpush.msra.mxu0 0.0
      %984 = vmatpush.msra.mxu0 0.0
      %985 = vmatpush.msra.mxu0 0.0
      %986 = vmatpush.msra.mxu0 0.0
      %987 = vmatpush.msra.mxu0 0.0
      %988 = vmatpush.msra.mxu0 0.0
      %989 = vmatpush.msra.mxu0 0.0
      %990 = vmatpush.msra.mxu0 0.0
      %991 = vmatpush.msra.mxu0 0.0
      %992 = vmatpush.msra.mxu0 0.0
      %993 = vmatpush.msra.mxu0 %v910
      %994 = vmatpush.msra.mxu0 %v905
      %995 = vmatmul.f32.gmra.mxu0 %v928
      %v996 = vpop.f32.mrf.mxu0
      %v997 = vadd.f32 %v920, %v996
      %998 = vmatmul.f32.gmra.mxu0 %v931
      %v999 = vpop.f32.mrf.mxu0
      %v1000 = vadd.f32 %v925, %v999
      %1001 = vdwg.mxu0
      %1002 = vmatpush.msra.mxu0 0.0
      %1003 = vmatpush.msra.mxu0 0.0
      %1004 = vmatpush.msra.mxu0 0.0
      %1005 = vmatpush.msra.mxu0 0.0
      %1006 = vmatpush.msra.mxu0 0.0
      %1007 = vmatpush.msra.mxu0 0.0
      %1008 = vmatpush.msra.mxu0 0.0
      %1009 = vmatpush.msra.mxu0 0.0
      %1010 = vmatpush.msra.mxu0 0.0
      %1011 = vmatpush.msra.mxu0 0.0
      %1012 = vmatpush.msra.mxu0 0.0
      %1013 = vmatpush.msra.mxu0 0.0
      %1014 = vmatpush.msra.mxu0 0.0
      %1015 = vmatpush.msra.mxu0 0.0
      %1016 = vmatpush.msra.mxu0 %v911
      %1017 = vmatpush.msra.mxu0 %v906
      %1018 = vmatmul.f32.gmra.mxu0 %v928
      %v1019 = vpop.f32.mrf.mxu0
      %v1020 = vadd.f32 %v920, %v1019
      %1021 = vmatmul.f32.gmra.mxu0 %v931
      %v1022 = vpop.f32.mrf.mxu0
      %v1023 = vadd.f32 %v925, %v1022
      %1024 = vdwg.mxu0
      %1025 = vmatpush.msra.mxu0 0.0
      %1026 = vmatpush.msra.mxu0 0.0
      %1027 = vmatpush.msra.mxu0 0.0
      %1028 = vmatpush.msra.mxu0 0.0
      %1029 = vmatpush.msra.mxu0 0.0
      %1030 = vmatpush.msra.mxu0 0.0
      %1031 = vmatpush.msra.mxu0 0.0
      %1032 = vmatpush.msra.mxu0 0.0
      %1033 = vmatpush.msra.mxu0 0.0
      %1034 = vmatpush.msra.mxu0 0.0
      %1035 = vmatpush.msra.mxu0 0.0
      %1036 = vmatpush.msra.mxu0 0.0
      %1037 = vmatpush.msra.mxu0 0.0
      %1038 = vmatpush.msra.mxu0 0.0
      %1039 = vmatpush.msra.mxu0 %v912
      %1040 = vmatpush.msra.mxu0 %v907
      %1041 = vmatmul.f32.gmra.mxu0 %v928
      %v1042 = vpop.f32.mrf.mxu0
      %v1043 = vadd.f32 %v920, %v1042
      %1044 = vmatmul.f32.gmra.mxu0 %v931
      %v1045 = vpop.f32.mrf.mxu0
      %v1046 = vadd.f32 %v925, %v1045
      %1047 = vdwg.mxu0
      %v1048 = vld [vmem:[%s315] sm:$0xff]
      %v1049 = vld [vmem:[%s315 + $0x8] sm:$0xff]
      %v1050 = vld [vmem:[%s315 + $0x10] sm:$0xff]
      %v1051 = vld [vmem:[%s315 + $0x18] sm:$0xff]
      %v1052 = vld [vmem:[%s315 + $0x20] sm:$0xff]
      %v1053 = vld [vmem:[%s315 + $0x28] sm:$0xff]
      %v1054 = vld [vmem:[%s315 + $0x30] sm:$0xff]
      %v1055 = vld [vmem:[%s315 + $0x38] sm:$0xff]
      %v1056 = vld [vmem:[%s315 + $0x40] sm:$0xff]
      %v1057 = vld [vmem:[%s315 + $0x48] sm:$0xff]
      %v1058 = vadd.f32 %v951, %v1048
      %v1059 = vadd.f32 %v974, %v1049
      %v1060 = vadd.f32 %v997, %v1050
      %v1061 = vadd.f32 %v1020, %v1051
      %v1062 = vadd.f32 %v1043, %v1052
      %v1063 = vadd.f32 %v954, %v1053
      %v1064 = vadd.f32 %v977, %v1054
      %v1065 = vadd.f32 %v1000, %v1055
      %v1066 = vadd.f32 %v1023, %v1056
      %v1067 = vadd.f32 %v1046, %v1057
      %v1068 = vmul.f32 %v1058, 0.5
      %v1069 = vmul.f32 %v1059, 0.5
      %v1070 = vmul.f32 %v1060, 0.5
      %v1071 = vmul.f32 %v1061, 0.5
      %v1072 = vmul.f32 %v1062, 0.5
      %v1073 = vmul.f32 %v1063, 0.5
      %v1074 = vmul.f32 %v1064, 0.5
      %v1075 = vmul.f32 %v1065, 0.5
      %v1076 = vmul.f32 %v1066, 0.5
      %v1077 = vmul.f32 %v1067, 0.5
      %v1078 = vmul.f32 %v1058, 0.70710677
      %v1079 = vmul.f32 %v1059, 0.70710677
      %v1080 = vmul.f32 %v1060, 0.70710677
      %v1081 = vmul.f32 %v1061, 0.70710677
      %v1082 = vmul.f32 %v1062, 0.70710677
      %v1083 = vmul.f32 %v1063, 0.70710677
      %v1084 = vmul.f32 %v1064, 0.70710677
      %v1085 = vmul.f32 %v1065, 0.70710677
      %v1086 = vmul.f32 %v1066, 0.70710677
      %v1087 = vmul.f32 %v1067, 0.70710677
      %v1088 = vmul.f32 %v1078, %v1078
      %v1089 = vmin.f32 16.0, %v1088
      %v1090 = vmul.f32 %v1089, 2.1237322e-06
      %v1091 = vadd.f32 %v1090, 0.00028619796
      %v1092 = vmul.f32 %v1089, %v1091
      %v1093 = vadd.f32 %v1092, 0.0036580483
      %v1094 = vmul.f32 %v1089, %v1093
      %v1095 = vadd.f32 %v1094, 0.05243302
      %v1096 = vmul.f32 %v1089, %v1095
      %v1097 = vadd.f32 %v1096, 0.18741608
      %v1098 = vmul.f32 %v1089, %v1097
      %v1099 = vadd.f32 %v1098, 1.1283791
      %v1100 = vmul.f32 %v1078, %v1099
      %v1101 = vmul.f32 %v1089, 3.8918573e-05
      %v1102 = vadd.f32 %v1101, 0.001143296
      %v1103 = vmul.f32 %v1089, %v1102
      %v1104 = vadd.f32 %v1103, 0.014752088
      %v1105 = vmul.f32 %v1089, %v1104
      %v1106 = vadd.f32 %v1105, 0.112945676
      %v1107 = vmul.f32 %v1089, %v1106
      %v1108 = vadd.f32 %v1107, 0.4994258
      %v1109 = vmul.f32 %v1089, %v1108
      %v1110 = vadd.f32 %v1109, 1.0
      %v1111 = vrcp.pop %v1110
      %v1112 = vmul.f32 %v1110, %v1111
      %v1113 = vsub.f32 1.0, %v1112
      %v1114 = vmul.f32 %v1111, %v1113
      %v1115 = vadd.f32 %v1111, %v1114
      %vm1116 = vweird.f32 %v1110
      %vm1117 = vweird.f32 %v1111
      %vm1118 = vmor %vm1116, %vm1117
      %v1119 = vsel %vm1118, %v1111, %v1115
      %v1120 = vand.u32 2147483647, %v1110
      %vm1121 = vcmp.eq.f32.partialorder %v1120, 8.507059e+37
      %v1122 = vand.u32 %v1110, 2147483648
      %v1123 = vor.u32 1.1754944e-38, %v1122
      %v1124 = vsel %vm1121, %v1123, %v1119
      %v1125 = vmul.f32 %v1100, %v1124
      %v1126 = vmin.f32 %v1125, 1.0
      %v1127 = vmax.f32 %v1126, -1.0
      %v1128 = vmul.f32 %v1079, %v1079
      %v1129 = vmin.f32 16.0, %v1128
      %v1130 = vmul.f32 %v1129, 2.1237322e-06
      %v1131 = vadd.f32 %v1130, 0.00028619796
      %v1132 = vmul.f32 %v1129, %v1131
      %v1133 = vadd.f32 %v1132, 0.0036580483
      %v1134 = vmul.f32 %v1129, %v1133
      %v1135 = vadd.f32 %v1134, 0.05243302
      %v1136 = vmul.f32 %v1129, %v1135
      %v1137 = vadd.f32 %v1136, 0.18741608
      %v1138 = vmul.f32 %v1129, %v1137
      %v1139 = vadd.f32 %v1138, 1.1283791
      %v1140 = vmul.f32 %v1079, %v1139
      %v1141 = vmul.f32 %v1129, 3.8918573e-05
      %v1142 = vadd.f32 %v1141, 0.001143296
      %v1143 = vmul.f32 %v1129, %v1142
      %v1144 = vadd.f32 %v1143, 0.014752088
      %v1145 = vmul.f32 %v1129, %v1144
      %v1146 = vadd.f32 %v1145, 0.112945676
      %v1147 = vmul.f32 %v1129, %v1146
      %v1148 = vadd.f32 %v1147, 0.4994258
      %v1149 = vmul.f32 %v1129, %v1148
      %v1150 = vadd.f32 %v1149, 1.0
      %v1151 = vrcp.pop %v1150
      %v1152 = vmul.f32 %v1150, %v1151
      %v1153 = vsub.f32 1.0, %v1152
      %v1154 = vmul.f32 %v1151, %v1153
      %v1155 = vadd.f32 %v1151, %v1154
      %vm1156 = vweird.f32 %v1150
      %vm1157 = vweird.f32 %v1151
      %vm1158 = vmor %vm1156, %vm1157
      %v1159 = vsel %vm1158, %v1151, %v1155
      %v1160 = vand.u32 2147483647, %v1150
      %vm1161 = vcmp.eq.f32.partialorder %v1160, 8.507059e+37
      %v1162 = vand.u32 %v1150, 2147483648
      %v1163 = vor.u32 1.1754944e-38, %v1162
      %v1164 = vsel %vm1161, %v1163, %v1159
      %v1165 = vmul.f32 %v1140, %v1164
      %v1166 = vmin.f32 %v1165, 1.0
      %v1167 = vmax.f32 %v1166, -1.0
      %v1168 = vmul.f32 %v1080, %v1080
      %v1169 = vmin.f32 16.0, %v1168
      %v1170 = vmul.f32 %v1169, 2.1237322e-06
      %v1171 = vadd.f32 %v1170, 0.00028619796
      %v1172 = vmul.f32 %v1169, %v1171
      %v1173 = vadd.f32 %v1172, 0.0036580483
      %v1174 = vmul.f32 %v1169, %v1173
      %v1175 = vadd.f32 %v1174, 0.05243302
      %v1176 = vmul.f32 %v1169, %v1175
      %v1177 = vadd.f32 %v1176, 0.18741608
      %v1178 = vmul.f32 %v1169, %v1177
      %v1179 = vadd.f32 %v1178, 1.1283791
      %v1180 = vmul.f32 %v1080, %v1179
      %v1181 = vmul.f32 %v1169, 3.8918573e-05
      %v1182 = vadd.f32 %v1181, 0.001143296
      %v1183 = vmul.f32 %v1169, %v1182
      %v1184 = vadd.f32 %v1183, 0.014752088
      %v1185 = vmul.f32 %v1169, %v1184
      %v1186 = vadd.f32 %v1185, 0.112945676
      %v1187 = vmul.f32 %v1169, %v1186
      %v1188 = vadd.f32 %v1187, 0.4994258
      %v1189 = vmul.f32 %v1169, %v1188
      %v1190 = vadd.f32 %v1189, 1.0
      %v1191 = vrcp.pop %v1190
      %v1192 = vmul.f32 %v1190, %v1191
      %v1193 = vsub.f32 1.0, %v1192
      %v1194 = vmul.f32 %v1191, %v1193
      %v1195 = vadd.f32 %v1191, %v1194
      %vm1196 = vweird.f32 %v1190
      %vm1197 = vweird.f32 %v1191
      %vm1198 = vmor %vm1196, %vm1197
      %v1199 = vsel %vm1198, %v1191, %v1195
      %v1200 = vand.u32 2147483647, %v1190
      %vm1201 = vcmp.eq.f32.partialorder %v1200, 8.507059e+37
      %v1202 = vand.u32 %v1190, 2147483648
      %v1203 = vor.u32 1.1754944e-38, %v1202
      %v1204 = vsel %vm1201, %v1203, %v1199
      %v1205 = vmul.f32 %v1180, %v1204
      %v1206 = vmin.f32 %v1205, 1.0
      %v1207 = vmax.f32 %v1206, -1.0
      %v1208 = vmul.f32 %v1081, %v1081
      %v1209 = vmin.f32 16.0, %v1208
      %v1210 = vmul.f32 %v1209, 2.1237322e-06
      %v1211 = vadd.f32 %v1210, 0.00028619796
      %v1212 = vmul.f32 %v1209, %v1211
      %v1213 = vadd.f32 %v1212, 0.0036580483
      %v1214 = vmul.f32 %v1209, %v1213
      %v1215 = vadd.f32 %v1214, 0.05243302
      %v1216 = vmul.f32 %v1209, %v1215
      %v1217 = vadd.f32 %v1216, 0.18741608
      %v1218 = vmul.f32 %v1209, %v1217
      %v1219 = vadd.f32 %v1218, 1.1283791
      %v1220 = vmul.f32 %v1081, %v1219
      %v1221 = vmul.f32 %v1209, 3.8918573e-05
      %v1222 = vadd.f32 %v1221, 0.001143296
      %v1223 = vmul.f32 %v1209, %v1222
      %v1224 = vadd.f32 %v1223, 0.014752088
      %v1225 = vmul.f32 %v1209, %v1224
      %v1226 = vadd.f32 %v1225, 0.112945676
      %v1227 = vmul.f32 %v1209, %v1226
      %v1228 = vadd.f32 %v1227, 0.4994258
      %v1229 = vmul.f32 %v1209, %v1228
      %v1230 = vadd.f32 %v1229, 1.0
      %v1231 = vrcp.pop %v1230
      %v1232 = vmul.f32 %v1230, %v1231
      %v1233 = vsub.f32 1.0, %v1232
      %v1234 = vmul.f32 %v1231, %v1233
      %v1235 = vadd.f32 %v1231, %v1234
      %vm1236 = vweird.f32 %v1230
      %vm1237 = vweird.f32 %v1231
      %vm1238 = vmor %vm1236, %vm1237
      %v1239 = vsel %vm1238, %v1231, %v1235
      %v1240 = vand.u32 2147483647, %v1230
      %vm1241 = vcmp.eq.f32.partialorder %v1240, 8.507059e+37
      %v1242 = vand.u32 %v1230, 2147483648
      %v1243 = vor.u32 1.1754944e-38, %v1242
      %v1244 = vsel %vm1241, %v1243, %v1239
      %v1245 = vmul.f32 %v1220, %v1244
      %v1246 = vmin.f32 %v1245, 1.0
      %v1247 = vmax.f32 %v1246, -1.0
      %v1248 = vmul.f32 %v1082, %v1082
      %v1249 = vmin.f32 16.0, %v1248
      %v1250 = vmul.f32 %v1249, 2.1237322e-06
      %v1251 = vadd.f32 %v1250, 0.00028619796
      %v1252 = vmul.f32 %v1249, %v1251
      %v1253 = vadd.f32 %v1252, 0.0036580483
      %v1254 = vmul.f32 %v1249, %v1253
      %v1255 = vadd.f32 %v1254, 0.05243302
      %v1256 = vmul.f32 %v1249, %v1255
      %v1257 = vadd.f32 %v1256, 0.18741608
      %v1258 = vmul.f32 %v1249, %v1257
      %v1259 = vadd.f32 %v1258, 1.1283791
      %v1260 = vmul.f32 %v1082, %v1259
      %v1261 = vmul.f32 %v1249, 3.8918573e-05
      %v1262 = vadd.f32 %v1261, 0.001143296
      %v1263 = vmul.f32 %v1249, %v1262
      %v1264 = vadd.f32 %v1263, 0.014752088
      %v1265 = vmul.f32 %v1249, %v1264
      %v1266 = vadd.f32 %v1265, 0.112945676
      %v1267 = vmul.f32 %v1249, %v1266
      %v1268 = vadd.f32 %v1267, 0.4994258
      %v1269 = vmul.f32 %v1249, %v1268
      %v1270 = vadd.f32 %v1269, 1.0
      %v1271 = vrcp.pop %v1270
      %v1272 = vmul.f32 %v1270, %v1271
      %v1273 = vsub.f32 1.0, %v1272
      %v1274 = vmul.f32 %v1271, %v1273
      %v1275 = vadd.f32 %v1271, %v1274
      %vm1276 = vweird.f32 %v1270
      %vm1277 = vweird.f32 %v1271
      %vm1278 = vmor %vm1276, %vm1277
      %v1279 = vsel %vm1278, %v1271, %v1275
      %v1280 = vand.u32 2147483647, %v1270
      %vm1281 = vcmp.eq.f32.partialorder %v1280, 8.507059e+37
      %v1282 = vand.u32 %v1270, 2147483648
      %v1283 = vor.u32 1.1754944e-38, %v1282
      %v1284 = vsel %vm1281, %v1283, %v1279
      %v1285 = vmul.f32 %v1260, %v1284
      %v1286 = vmin.f32 %v1285, 1.0
      %v1287 = vmax.f32 %v1286, -1.0
      %v1288 = vmul.f32 %v1083, %v1083
      %v1289 = vmin.f32 16.0, %v1288
      %v1290 = vmul.f32 %v1289, 2.1237322e-06
      %v1291 = vadd.f32 %v1290, 0.00028619796
      %v1292 = vmul.f32 %v1289, %v1291
      %v1293 = vadd.f32 %v1292, 0.0036580483
      %v1294 = vmul.f32 %v1289, %v1293
      %v1295 = vadd.f32 %v1294, 0.05243302
      %v1296 = vmul.f32 %v1289, %v1295
      %v1297 = vadd.f32 %v1296, 0.18741608
      %v1298 = vmul.f32 %v1289, %v1297
      %v1299 = vadd.f32 %v1298, 1.1283791
      %v1300 = vmul.f32 %v1083, %v1299
      %v1301 = vmul.f32 %v1289, 3.8918573e-05
      %v1302 = vadd.f32 %v1301, 0.001143296
      %v1303 = vmul.f32 %v1289, %v1302
      %v1304 = vadd.f32 %v1303, 0.014752088
      %v1305 = vmul.f32 %v1289, %v1304
      %v1306 = vadd.f32 %v1305, 0.112945676
      %v1307 = vmul.f32 %v1289, %v1306
      %v1308 = vadd.f32 %v1307, 0.4994258
      %v1309 = vmul.f32 %v1289, %v1308
      %v1310 = vadd.f32 %v1309, 1.0
      %v1311 = vrcp.pop %v1310
      %v1312 = vmul.f32 %v1310, %v1311
      %v1313 = vsub.f32 1.0, %v1312
      %v1314 = vmul.f32 %v1311, %v1313
      %v1315 = vadd.f32 %v1311, %v1314
      %vm1316 = vweird.f32 %v1310
      %vm1317 = vweird.f32 %v1311
      %vm1318 = vmor %vm1316, %vm1317
      %v1319 = vsel %vm1318, %v1311, %v1315
      %v1320 = vand.u32 2147483647, %v1310
      %vm1321 = vcmp.eq.f32.partialorder %v1320, 8.507059e+37
      %v1322 = vand.u32 %v1310, 2147483648
      %v1323 = vor.u32 1.1754944e-38, %v1322
      %v1324 = vsel %vm1321, %v1323, %v1319
      %v1325 = vmul.f32 %v1300, %v1324
      %v1326 = vmin.f32 %v1325, 1.0
      %v1327 = vmax.f32 %v1326, -1.0
      %v1328 = vmul.f32 %v1084, %v1084
      %v1329 = vmin.f32 16.0, %v1328
      %v1330 = vmul.f32 %v1329, 2.1237322e-06
      %v1331 = vadd.f32 %v1330, 0.00028619796
      %v1332 = vmul.f32 %v1329, %v1331
      %v1333 = vadd.f32 %v1332, 0.0036580483
      %v1334 = vmul.f32 %v1329, %v1333
      %v1335 = vadd.f32 %v1334, 0.05243302
      %v1336 = vmul.f32 %v1329, %v1335
      %v1337 = vadd.f32 %v1336, 0.18741608
      %v1338 = vmul.f32 %v1329, %v1337
      %v1339 = vadd.f32 %v1338, 1.1283791
      %v1340 = vmul.f32 %v1084, %v1339
      %v1341 = vmul.f32 %v1329, 3.8918573e-05
      %v1342 = vadd.f32 %v1341, 0.001143296
      %v1343 = vmul.f32 %v1329, %v1342
      %v1344 = vadd.f32 %v1343, 0.014752088
      %v1345 = vmul.f32 %v1329, %v1344
      %v1346 = vadd.f32 %v1345, 0.112945676
      %v1347 = vmul.f32 %v1329, %v1346
      %v1348 = vadd.f32 %v1347, 0.4994258
      %v1349 = vmul.f32 %v1329, %v1348
      %v1350 = vadd.f32 %v1349, 1.0
      %v1351 = vrcp.pop %v1350
      %v1352 = vmul.f32 %v1350, %v1351
      %v1353 = vsub.f32 1.0, %v1352
      %v1354 = vmul.f32 %v1351, %v1353
      %v1355 = vadd.f32 %v1351, %v1354
      %vm1356 = vweird.f32 %v1350
      %vm1357 = vweird.f32 %v1351
      %vm1358 = vmor %vm1356, %vm1357
      %v1359 = vsel %vm1358, %v1351, %v1355
      %v1360 = vand.u32 2147483647, %v1350
      %vm1361 = vcmp.eq.f32.partialorder %v1360, 8.507059e+37
      %v1362 = vand.u32 %v1350, 2147483648
      %v1363 = vor.u32 1.1754944e-38, %v1362
      %v1364 = vsel %vm1361, %v1363, %v1359
      %v1365 = vmul.f32 %v1340, %v1364
      %v1366 = vmin.f32 %v1365, 1.0
      %v1367 = vmax.f32 %v1366, -1.0
      %v1368 = vmul.f32 %v1085, %v1085
      %v1369 = vmin.f32 16.0, %v1368
      %v1370 = vmul.f32 %v1369, 2.1237322e-06
      %v1371 = vadd.f32 %v1370, 0.00028619796
      %v1372 = vmul.f32 %v1369, %v1371
      %v1373 = vadd.f32 %v1372, 0.0036580483
      %v1374 = vmul.f32 %v1369, %v1373
      %v1375 = vadd.f32 %v1374, 0.05243302
      %v1376 = vmul.f32 %v1369, %v1375
      %v1377 = vadd.f32 %v1376, 0.18741608
      %v1378 = vmul.f32 %v1369, %v1377
      %v1379 = vadd.f32 %v1378, 1.1283791
      %v1380 = vmul.f32 %v1085, %v1379
      %v1381 = vmul.f32 %v1369, 3.8918573e-05
      %v1382 = vadd.f32 %v1381, 0.001143296
      %v1383 = vmul.f32 %v1369, %v1382
      %v1384 = vadd.f32 %v1383, 0.014752088
      %v1385 = vmul.f32 %v1369, %v1384
      %v1386 = vadd.f32 %v1385, 0.112945676
      %v1387 = vmul.f32 %v1369, %v1386
      %v1388 = vadd.f32 %v1387, 0.4994258
      %v1389 = vmul.f32 %v1369, %v1388
      %v1390 = vadd.f32 %v1389, 1.0
      %v1391 = vrcp.pop %v1390
      %v1392 = vmul.f32 %v1390, %v1391
      %v1393 = vsub.f32 1.0, %v1392
      %v1394 = vmul.f32 %v1391, %v1393
      %v1395 = vadd.f32 %v1391, %v1394
      %vm1396 = vweird.f32 %v1390
      %vm1397 = vweird.f32 %v1391
      %vm1398 = vmor %vm1396, %vm1397
      %v1399 = vsel %vm1398, %v1391, %v1395
      %v1400 = vand.u32 2147483647, %v1390
      %vm1401 = vcmp.eq.f32.partialorder %v1400, 8.507059e+37
      %v1402 = vand.u32 %v1390, 2147483648
      %v1403 = vor.u32 1.1754944e-38, %v1402
      %v1404 = vsel %vm1401, %v1403, %v1399
      %v1405 = vmul.f32 %v1380, %v1404
      %v1406 = vmin.f32 %v1405, 1.0
      %v1407 = vmax.f32 %v1406, -1.0
      %v1408 = vmul.f32 %v1086, %v1086
      %v1409 = vmin.f32 16.0, %v1408
      %v1410 = vmul.f32 %v1409, 2.1237322e-06
      %v1411 = vadd.f32 %v1410, 0.00028619796
      %v1412 = vmul.f32 %v1409, %v1411
      %v1413 = vadd.f32 %v1412, 0.0036580483
      %v1414 = vmul.f32 %v1409, %v1413
      %v1415 = vadd.f32 %v1414, 0.05243302
      %v1416 = vmul.f32 %v1409, %v1415
      %v1417 = vadd.f32 %v1416, 0.18741608
      %v1418 = vmul.f32 %v1409, %v1417
      %v1419 = vadd.f32 %v1418, 1.1283791
      %v1420 = vmul.f32 %v1086, %v1419
      %v1421 = vmul.f32 %v1409, 3.8918573e-05
      %v1422 = vadd.f32 %v1421, 0.001143296
      %v1423 = vmul.f32 %v1409, %v1422
      %v1424 = vadd.f32 %v1423, 0.014752088
      %v1425 = vmul.f32 %v1409, %v1424
      %v1426 = vadd.f32 %v1425, 0.112945676
      %v1427 = vmul.f32 %v1409, %v1426
      %v1428 = vadd.f32 %v1427, 0.4994258
      %v1429 = vmul.f32 %v1409, %v1428
      %v1430 = vadd.f32 %v1429, 1.0
      %v1431 = vrcp.pop %v1430
      %v1432 = vmul.f32 %v1430, %v1431
      %v1433 = vsub.f32 1.0, %v1432
      %v1434 = vmul.f32 %v1431, %v1433
      %v1435 = vadd.f32 %v1431, %v1434
      %vm1436 = vweird.f32 %v1430
      %vm1437 = vweird.f32 %v1431
      %vm1438 = vmor %vm1436, %vm1437
      %v1439 = vsel %vm1438, %v1431, %v1435
      %v1440 = vand.u32 2147483647, %v1430
      %vm1441 = vcmp.eq.f32.partialorder %v1440, 8.507059e+37
      %v1442 = vand.u32 %v1430, 2147483648
      %v1443 = vor.u32 1.1754944e-38, %v1442
      %v1444 = vsel %vm1441, %v1443, %v1439
      %v1445 = vmul.f32 %v1420, %v1444
      %v1446 = vmin.f32 %v1445, 1.0
      %v1447 = vmax.f32 %v1446, -1.0
      %v1448 = vmul.f32 %v1087, %v1087
      %v1449 = vmin.f32 16.0, %v1448
      %v1450 = vmul.f32 %v1449, 2.1237322e-06
      %v1451 = vadd.f32 %v1450, 0.00028619796
      %v1452 = vmul.f32 %v1449, %v1451
      %v1453 = vadd.f32 %v1452, 0.0036580483
      %v1454 = vmul.f32 %v1449, %v1453
      %v1455 = vadd.f32 %v1454, 0.05243302
      %v1456 = vmul.f32 %v1449, %v1455
      %v1457 = vadd.f32 %v1456, 0.18741608
      %v1458 = vmul.f32 %v1449, %v1457
      %v1459 = vadd.f32 %v1458, 1.1283791
      %v1460 = vmul.f32 %v1087, %v1459
      %v1461 = vmul.f32 %v1449, 3.8918573e-05
      %v1462 = vadd.f32 %v1461, 0.001143296
      %v1463 = vmul.f32 %v1449, %v1462
      %v1464 = vadd.f32 %v1463, 0.014752088
      %v1465 = vmul.f32 %v1449, %v1464
      %v1466 = vadd.f32 %v1465, 0.112945676
      %v1467 = vmul.f32 %v1449, %v1466
      %v1468 = vadd.f32 %v1467, 0.4994258
      %v1469 = vmul.f32 %v1449, %v1468
      %v1470 = vadd.f32 %v1469, 1.0
      %v1471 = vrcp.pop %v1470
      %v1472 = vmul.f32 %v1470, %v1471
      %v1473 = vsub.f32 1.0, %v1472
      %v1474 = vmul.f32 %v1471, %v1473
      %v1475 = vadd.f32 %v1471, %v1474
      %vm1476 = vweird.f32 %v1470
      %vm1477 = vweird.f32 %v1471
      %vm1478 = vmor %vm1476, %vm1477
      %v1479 = vsel %vm1478, %v1471, %v1475
      %v1480 = vand.u32 2147483647, %v1470
      %vm1481 = vcmp.eq.f32.partialorder %v1480, 8.507059e+37
      %v1482 = vand.u32 %v1470, 2147483648
      %v1483 = vor.u32 1.1754944e-38, %v1482
      %v1484 = vsel %vm1481, %v1483, %v1479
      %v1485 = vmul.f32 %v1460, %v1484
      %v1486 = vmin.f32 %v1485, 1.0
      %v1487 = vmax.f32 %v1486, -1.0
      %v1488 = vadd.f32 %v1127, 1.0
      %v1489 = vadd.f32 %v1167, 1.0
      %v1490 = vadd.f32 %v1207, 1.0
      %v1491 = vadd.f32 %v1247, 1.0
      %v1492 = vadd.f32 %v1287, 1.0
      %v1493 = vadd.f32 %v1327, 1.0
      %v1494 = vadd.f32 %v1367, 1.0
      %v1495 = vadd.f32 %v1407, 1.0
      %v1496 = vadd.f32 %v1447, 1.0
      %v1497 = vadd.f32 %v1487, 1.0
      %v1498 = vmul.f32 %v1068, %v1488
      %v1499 = vmul.f32 %v1069, %v1489
      %v1500 = vmul.f32 %v1070, %v1490
      %v1501 = vmul.f32 %v1071, %v1491
      %v1502 = vmul.f32 %v1072, %v1492
      %v1503 = vmul.f32 %v1073, %v1493
      %v1504 = vmul.f32 %v1074, %v1494
      %v1505 = vmul.f32 %v1075, %v1495
      %v1506 = vmul.f32 %v1076, %v1496
      %v1507 = vmul.f32 %v1077, %v1497
      %1508 = vst [vmem:[%s325] sm:$0xff] %v1498
      %1509 = vst [vmem:[%s325 + $0x8] sm:$0xff] %v1499
      %1510 = vst [vmem:[%s325 + $0x10] sm:$0xff] %v1500
      %1511 = vst [vmem:[%s325 + $0x18] sm:$0xff] %v1501
      %1512 = vst [vmem:[%s325 + $0x20] sm:$0xff] %v1502
      %1513 = vst [vmem:[%s325 + $0x28] sm:$0xff] %v1503
      %1514 = vst [vmem:[%s325 + $0x30] sm:$0xff] %v1504
      %1515 = vst [vmem:[%s325 + $0x38] sm:$0xff] %v1505
      %1516 = vst [vmem:[%s325 + $0x40] sm:$0xff] %v1506
      %1517 = vst [vmem:[%s325 + $0x48] sm:$0xff] %v1507
      %s1518 = smul.u32 5, %s22
      %p1519 = scmp.lt.s32.totalorder %s21, 1
      %s1520 = scalar_select %p1519, %s21, 1
      %p1521 = scmp.lt.s32.totalorder %s1518, 4
      %s1522 = scalar_select %p1521, %s1518, 4
      %s1523 = smul.addr %s1520, 10
      %s1524 = sadd.s32 %s1522, %s1523
      %s1525 = smul.addr %s1524, 8
      %s1526 = scalar_lea.vmem %s6, %s1525
      // Predicated region
      $region45: #{fno2d_forward.12} parent=43 // pred_check
        %p1527 = pneg %p189
      $region46: #{fno2d_forward.12} parent=43 // pred_check_branch
        %1529 = sbr.rel (%p1527) target = $region48
      $region47: #{fno2d_forward.12} parent=43 // pred_region
        %s1530 = smul.u32 5, %s22
      $region48: #{fno2d_forward.12} parent=43 // pred_fallthru
        _
    $region44: #{fno2d_forward.12} parent=5 // pred_fallthru
      _
    %p1531 = scmp.le.s32.totalorder 2, %s12
    // Predicated region
    $region49: #{fno2d_forward.12} parent=5 // pred_check
      %p1532 = pneg %p1531
    $region50: #{fno2d_forward.12} parent=5 // pred_check_branch
      %1534 = sbr.rel (%p1532) target = $region52
    $region51: #{fno2d_forward.12} parent=5 // pred_region
      %s1535 = ssub.s32 %s12, 2
      // Predicated region
      $region53: #{fno2d_forward.12} parent=51 // pred_check
        %p1536 = pneg %p195
      $region54: #{fno2d_forward.12} parent=51 // pred_check_branch
        %1538 = sbr.rel (%p1536) target = $region56
      $region55: #{fno2d_forward.12} parent=51 // pred_region
        %s1539 = smul.u32 5, %s24
        %p1540 = scmp.lt.s32.totalorder %s23, 1
        %s1541 = scalar_select %p1540, %s23, 1
        %p1542 = scmp.lt.s32.totalorder %s1539, 4
        %s1543 = scalar_select %p1542, %s1539, 4
        %s1544 = smul.addr %s1541, 10
        %s1545 = sadd.s32 %s1543, %s1544
        %s1546 = smul.addr %s1545, 8
        %s1547 = scalar_lea.vmem %s6, %s1546
      $region56: #{fno2d_forward.12} parent=51 // pred_fallthru
        _
    $region52: #{fno2d_forward.12} parent=5 // pred_fallthru
      _
  $region6: #{fno2d_forward.12} parent=0 // loop_footer
    %s16 = sadd.s32 1, %s12
  $region7: #{fno2d_forward.12} parent=0 // loop_footer_branch
    %11 = sbr.rel target = $region3
  $region8: #{fno2d_forward.12} parent=0 // loop_exit
    _

// kernel: fno2d_forward.18
$region0: #{fno2d_forward.18}
  #allocation0 [shape = 'u32[]', space=smem, size = 0x4, offset = 0x4, fixed_abs, tag = 'smem constant byte address 0x4 - core index']
  #allocation1 [shape = 'u32[72,128]{1,0:T(1,128)}', space=vmem, size = 0x9000, scoped, tag = 'internal scratch']
  %s0 = inlined_call_operand.vmem [shape: f32[2,16,640], index: 0, kind: input, shape index: {}]
  %s1 = inlined_call_operand.vmem [shape: f32[2,16,640], index: 1, kind: input, shape index: {}]
  %s2 = inlined_call_operand.vmem [shape: f32[16,16], index: 2, kind: input, shape index: {}]
  %s3 = inlined_call_operand.vmem [shape: f32[16,1], index: 3, kind: input, shape index: {}]
  %s4 = inlined_call_operand.vmem [shape: f32[16,16], index: 4, kind: input, shape index: {}]
  %s5 = inlined_call_operand.vmem [shape: f32[16,1], index: 5, kind: input, shape index: {}]
  %s6 = inlined_call_operand.vmem [shape: f32[2,16,640], index: 6, kind: output, shape index: {}]
  %s7 = sld [smem:[#allocation0]]
  $region57: #{fno2d_forward.18} parent=0
    _
  %s9 = ssub.s32 1, %s7
  %s10 = scalar_select 0, %s9, %s7
  loop: start=0, step=1, limit=4
  $region2: #{fno2d_forward.18} parent=0 // loop_pre_header
    _
  $region3: #{fno2d_forward.18} parent=0 // loop_header
    %s12 = sphi 0, %s16
    %p13 = scmp.ge.s32.totalorder %s12, 4
    %s19 = sphi 0, %s31
    %s20 = sphi 0, %s27
    %s21 = sphi 0, %s19
    %s22 = sphi 0, %s20
    %s23 = sphi 0, %s21
    %s24 = sphi 0, %s22
    %s36 = sphi 0, %s38
    %s39 = sphi 0, %s36
    %s40 = sphi 0, %s39
    %s56 = sphi 0, %s40
    %s64 = sphi 0, %s66
    %s67 = sphi 0, %s64
    %s68 = sphi 0, %s67
    %s84 = sphi 0, %s68
    %s88 = sphi 0, %s88
    %s90 = sphi 0, %s88
    %s91 = sphi 0, %s90
    %s105 = sphi 0, %s91
    %s109 = sphi 0, %s109
    %s111 = sphi 0, %s109
    %s112 = sphi 0, %s111
    %s126 = sphi 0, %s112
    %s130 = sphi 0, %s130
    %s132 = sphi 0, %s130
    %s133 = sphi 0, %s132
    %s147 = sphi 0, %s133
    %s151 = sphi 0, %s151
    %s153 = sphi 0, %s151
    %s154 = sphi 0, %s153
    %s168 = sphi 0, %s154
    %s176 = sphi 0, %s178
    %s179 = sphi 0, %s176
    %s180 = sphi 0, %s179
    %s196 = sphi 0, %s180
  $region4: #{fno2d_forward.18} parent=0 // loop_header_branch
    %15 = sbr.rel (%p13) target = $region8
  $region5: #{fno2d_forward.18} parent=0 // loop_body
    %s17 = ssub.s32 %s12, 1
    %s18 = ssub.s32 %s12, 2
    %s25 = sadd.s32 1, %s20
    %p26 = scmp.ge.s32.totalorder %s25, 1
    %s27 = scalar_select %p26, 0, %s25
    %s28 = sadd.s32 1, %s19
    %s29 = scalar_select %p26, %s28, %s19
    %p30 = scmp.ge.s32.totalorder %s29, 2
    %s31 = scalar_select %p30, 0, %s29
    %s32 = ssub.s32 %s19, %s31
    %s33 = ssub.s32 %s20, %s27
    %s34 = sor.u32 %s32, %s33
    %p35 = scmp.eq.s32.totalorder %s34, 0
    %s37 = sadd.s32 %s36, 1
    %s38 = scalar_select %p35, %s36, %s37
    %p41 = pneg %p35
    %p42 = scmp.eq.s32.totalorder %s12, 1
    %p43 = por %p41, %p42
    %p44 = scmp.ne.s32.totalorder %s36, %s39
    %p45 = scmp.eq.s32.totalorder %s12, 0
    %p46 = por %p44, %p45
    %p47 = scmp.ne.s32.totalorder %s36, %s39
    %p48 = scmp.eq.s32.totalorder %s17, 1
    %p49 = por %p47, %p48
    %p50 = scmp.ne.s32.totalorder %s39, %s40
    %p51 = scmp.eq.s32.totalorder %s17, 0
    %p52 = por %p50, %p51
    %p53 = scmp.ne.s32.totalorder %s39, %s40
    %p54 = scmp.eq.s32.totalorder %s18, 1
    %p55 = por %p53, %p54
    %p57 = scmp.ne.s32.totalorder %s40, %s56
    %p58 = scmp.eq.s32.totalorder %s18, 0
    %p59 = por %p57, %p58
    %s60 = ssub.s32 %s19, %s31
    %s61 = ssub.s32 %s20, %s27
    %s62 = sor.u32 %s60, %s61
    %p63 = scmp.eq.s32.totalorder %s62, 0
    %s65 = sadd.s32 %s64, 1
    %s66 = scalar_select %p63, %s64, %s65
    %p69 = pneg %p63
    %p70 = scmp.eq.s32.totalorder %s12, 1
    %p71 = por %p69, %p70
    %p72 = scmp.ne.s32.totalorder %s64, %s67
    %p73 = scmp.eq.s32.totalorder %s12, 0
    %p74 = por %p72, %p73
    %p75 = scmp.ne.s32.totalorder %s64, %s67
    %p76 = scmp.eq.s32.totalorder %s17, 1
    %p77 = por %p75, %p76
    %p78 = scmp.ne.s32.totalorder %s67, %s68
    %p79 = scmp.eq.s32.totalorder %s17, 0
    %p80 = por %p78, %p79
    %p81 = scmp.ne.s32.totalorder %s67, %s68
    %p82 = scmp.eq.s32.totalorder %s18, 1
    %p83 = por %p81, %p82
    %p85 = scmp.ne.s32.totalorder %s68, %s84
    %p86 = scmp.eq.s32.totalorder %s18, 0
    %p87 = por %p85, %p86
    %s89 = sadd.s32 %s88, 1
    %p92 = scmp.eq.s32.totalorder %s12, 1
    %p93 = scmp.ne.s32.totalorder %s88, %s90
    %p94 = scmp.eq.s32.totalorder %s12, 0
    %p95 = por %p93, %p94
    %p96 = scmp.ne.s32.totalorder %s88, %s90
    %p97 = scmp.eq.s32.totalorder %s17, 1
    %p98 = por %p96, %p97
    %p99 = scmp.ne.s32.totalorder %s90, %s91
    %p100 = scmp.eq.s32.totalorder %s17, 0
    %p101 = por %p99, %p100
    %p102 = scmp.ne.s32.totalorder %s90, %s91
    %p103 = scmp.eq.s32.totalorder %s18, 1
    %p104 = por %p102, %p103
    %p106 = scmp.ne.s32.totalorder %s91, %s105
    %p107 = scmp.eq.s32.totalorder %s18, 0
    %p108 = por %p106, %p107
    %s110 = sadd.s32 %s109, 1
    %p113 = scmp.eq.s32.totalorder %s12, 1
    %p114 = scmp.ne.s32.totalorder %s109, %s111
    %p115 = scmp.eq.s32.totalorder %s12, 0
    %p116 = por %p114, %p115
    %p117 = scmp.ne.s32.totalorder %s109, %s111
    %p118 = scmp.eq.s32.totalorder %s17, 1
    %p119 = por %p117, %p118
    %p120 = scmp.ne.s32.totalorder %s111, %s112
    %p121 = scmp.eq.s32.totalorder %s17, 0
    %p122 = por %p120, %p121
    %p123 = scmp.ne.s32.totalorder %s111, %s112
    %p124 = scmp.eq.s32.totalorder %s18, 1
    %p125 = por %p123, %p124
    %p127 = scmp.ne.s32.totalorder %s112, %s126
    %p128 = scmp.eq.s32.totalorder %s18, 0
    %p129 = por %p127, %p128
    %s131 = sadd.s32 %s130, 1
    %p134 = scmp.eq.s32.totalorder %s12, 1
    %p135 = scmp.ne.s32.totalorder %s130, %s132
    %p136 = scmp.eq.s32.totalorder %s12, 0
    %p137 = por %p135, %p136
    %p138 = scmp.ne.s32.totalorder %s130, %s132
    %p139 = scmp.eq.s32.totalorder %s17, 1
    %p140 = por %p138, %p139
    %p141 = scmp.ne.s32.totalorder %s132, %s133
    %p142 = scmp.eq.s32.totalorder %s17, 0
    %p143 = por %p141, %p142
    %p144 = scmp.ne.s32.totalorder %s132, %s133
    %p145 = scmp.eq.s32.totalorder %s18, 1
    %p146 = por %p144, %p145
    %p148 = scmp.ne.s32.totalorder %s133, %s147
    %p149 = scmp.eq.s32.totalorder %s18, 0
    %p150 = por %p148, %p149
    %s152 = sadd.s32 %s151, 1
    %p155 = scmp.eq.s32.totalorder %s12, 1
    %p156 = scmp.ne.s32.totalorder %s151, %s153
    %p157 = scmp.eq.s32.totalorder %s12, 0
    %p158 = por %p156, %p157
    %p159 = scmp.ne.s32.totalorder %s151, %s153
    %p160 = scmp.eq.s32.totalorder %s17, 1
    %p161 = por %p159, %p160
    %p162 = scmp.ne.s32.totalorder %s153, %s154
    %p163 = scmp.eq.s32.totalorder %s17, 0
    %p164 = por %p162, %p163
    %p165 = scmp.ne.s32.totalorder %s153, %s154
    %p166 = scmp.eq.s32.totalorder %s18, 1
    %p167 = por %p165, %p166
    %p169 = scmp.ne.s32.totalorder %s154, %s168
    %p170 = scmp.eq.s32.totalorder %s18, 0
    %p171 = por %p169, %p170
    %s172 = ssub.s32 %s19, %s31
    %s173 = ssub.s32 %s20, %s27
    %s174 = sor.u32 %s172, %s173
    %p175 = scmp.eq.s32.totalorder %s174, 0
    %s177 = sadd.s32 %s176, 1
    %s178 = scalar_select %p175, %s176, %s177
    %p181 = pneg %p175
    %p182 = scmp.eq.s32.totalorder %s12, 1
    %p183 = por %p181, %p182
    %p184 = scmp.ne.s32.totalorder %s176, %s179
    %p185 = scmp.eq.s32.totalorder %s12, 0
    %p186 = por %p184, %p185
    %p187 = scmp.ne.s32.totalorder %s176, %s179
    %p188 = scmp.eq.s32.totalorder %s17, 1
    %p189 = por %p187, %p188
    %p190 = scmp.ne.s32.totalorder %s179, %s180
    %p191 = scmp.eq.s32.totalorder %s17, 0
    %p192 = por %p190, %p191
    %p193 = scmp.ne.s32.totalorder %s179, %s180
    %p194 = scmp.eq.s32.totalorder %s18, 1
    %p195 = por %p193, %p194
    %p197 = scmp.ne.s32.totalorder %s180, %s196
    %p198 = scmp.eq.s32.totalorder %s18, 0
    %p199 = por %p197, %p198
    %p200 = scmp.le.s32.totalorder 1, %s12
    %p201 = scmp.lt.s32.totalorder %s12, 3
    %p202 = pnand %p200, %p201
    %p203 = pneg %p202
    // Predicated region
    $region9: #{fno2d_forward.18} parent=5 // pred_check
      _
    $region10: #{fno2d_forward.18} parent=5 // pred_check_branch
      %205 = sbr.rel (%p202) target = $region12
    $region11: #{fno2d_forward.18} parent=5 // pred_region
      %s206 = ssub.s32 %s12, 1
      // Predicated region
      $region13: #{fno2d_forward.18} parent=11 // pred_check
        %p207 = pneg %p101
      $region14: #{fno2d_forward.18} parent=11 // pred_check_branch
        %209 = sbr.rel (%p207) target = $region16
      $region15: #{fno2d_forward.18} parent=11 // pred_region
        _
      $region16: #{fno2d_forward.18} parent=11 // pred_fallthru
        _
      // Predicated region
      $region17: #{fno2d_forward.18} parent=11 // pred_check
        %p210 = pneg %p122
      $region18: #{fno2d_forward.18} parent=11 // pred_check_branch
        %212 = sbr.rel (%p210) target = $region20
      $region19: #{fno2d_forward.18} parent=11 // pred_region
        _
      $region20: #{fno2d_forward.18} parent=11 // pred_fallthru
        _
      // Predicated region
      $region21: #{fno2d_forward.18} parent=11 // pred_check
        %p213 = pneg %p143
      $region22: #{fno2d_forward.18} parent=11 // pred_check_branch
        %215 = sbr.rel (%p213) target = $region24
      $region23: #{fno2d_forward.18} parent=11 // pred_region
        _
      $region24: #{fno2d_forward.18} parent=11 // pred_fallthru
        _
      // Predicated region
      $region25: #{fno2d_forward.18} parent=11 // pred_check
        %p216 = pneg %p164
      $region26: #{fno2d_forward.18} parent=11 // pred_check_branch
        %218 = sbr.rel (%p216) target = $region28
      $region27: #{fno2d_forward.18} parent=11 // pred_region
        _
      $region28: #{fno2d_forward.18} parent=11 // pred_fallthru
        _
    $region12: #{fno2d_forward.18} parent=5 // pred_fallthru
      _
    %p219 = scmp.lt.s32.totalorder %s12, 2
    // Predicated region
    $region29: #{fno2d_forward.18} parent=5 // pred_check
      %p220 = pneg %p219
    $region30: #{fno2d_forward.18} parent=5 // pred_check_branch
      %222 = sbr.rel (%p220) target = $region32
    $region31: #{fno2d_forward.18} parent=5 // pred_region
      // Predicated region
      $region33: #{fno2d_forward.18} parent=31 // pred_check
        %p223 = pneg %p46
      $region34: #{fno2d_forward.18} parent=31 // pred_check_branch
        %225 = sbr.rel (%p223) target = $region36
      $region35: #{fno2d_forward.18} parent=31 // pred_region
        %s226 = smul.u32 5, %s20
        %p227 = scmp.lt.s32.totalorder %s19, 1
        %s228 = scalar_select %p227, %s19, 1
        %p229 = scmp.lt.s32.totalorder %s226, 4
        %s230 = scalar_select %p229, %s226, 4
        %s231 = smul.addr %s228, 10
        %s232 = sadd.s32 %s230, %s231
        %s233 = smul.addr %s232, 8
        %s234 = scalar_lea.vmem %s0, %s233
        %s235 = smul.u32 5, %s20
      $region36: #{fno2d_forward.18} parent=31 // pred_fallthru
        _
      // Predicated region
      $region37: #{fno2d_forward.18} parent=31 // pred_check
        %p236 = pneg %p74
      $region38: #{fno2d_forward.18} parent=31 // pred_check_branch
        %238 = sbr.rel (%p236) target = $region40
      $region39: #{fno2d_forward.18} parent=31 // pred_region
        %s239 = smul.u32 5, %s20
        %p240 = scmp.lt.s32.totalorder %s19, 1
        %s241 = scalar_select %p240, %s19, 1
        %p242 = scmp.lt.s32.totalorder %s239, 4
        %s243 = scalar_select %p242, %s239, 4
        %s244 = smul.addr %s241, 10
        %s245 = sadd.s32 %s243, %s244
        %s246 = smul.addr %s245, 8
        %s247 = scalar_lea.vmem %s1, %s246
        %s248 = smul.u32 5, %s20
      $region40: #{fno2d_forward.18} parent=31 // pred_fallthru
        _
    $region32: #{fno2d_forward.18} parent=5 // pred_fallthru
      _
    %p249 = scmp.le.s32.totalorder 1, %s12
    %p250 = scmp.lt.s32.totalorder %s12, 3
    %p251 = pnand %p249, %p250
    %p252 = pneg %p251
    // Predicated region
    $region41: #{fno2d_forward.18} parent=5 // pred_check
      _
    $region42: #{fno2d_forward.18} parent=5 // pred_check_branch
      %254 = sbr.rel (%p251) target = $region44
    $region43: #{fno2d_forward.18} parent=5 // pred_region
      %s255 = ssub.s32 %s12, 1
      %s256 = smul.u32 5, %s22
      %p257 = scmp.lt.s32.totalorder %s21, 1
      %s258 = scalar_select %p257, %s21, 1
      %p259 = scmp.lt.s32.totalorder %s256, 4
      %s260 = scalar_select %p259, %s256, 4
      %s261 = smul.addr %s258, 10
      %s262 = sadd.s32 %s260, %s261
      %s263 = smul.addr %s262, 8
      %s264 = scalar_lea.vmem %s0, %s263
      %p265 = pneg %p52
      %p266 = pneg %p49
      %s267 = smul.u32 5, %s22
      %p268 = scmp.lt.s32.totalorder %s21, 1
      %s269 = scalar_select %p268, %s21, 1
      %p270 = scmp.lt.s32.totalorder %s267, 4
      %s271 = scalar_select %p270, %s267, 4
      %s272 = smul.addr %s269, 10
      %s273 = sadd.s32 %s271, %s272
      %s274 = smul.addr %s273, 8
      %s275 = scalar_lea.vmem %s1, %s274
      %p276 = pneg %p80
      %p277 = pneg %p77
      %p278 = pneg %p101
      %p279 = pneg %p98
      %p280 = pneg %p122
      %p281 = pneg %p119
      %p282 = pneg %p143
      %p283 = pneg %p140
      %p284 = pneg %p164
      %p285 = pneg %p161
      %p286 = pneg %p192
      %p287 = pneg %p189
      %s288 = smul.u32 5, %s22
      %p289 = scmp.lt.s32.totalorder %s21, 1
      %s290 = scalar_select %p289, %s21, 1
      %p291 = scmp.lt.s32.totalorder %s288, 4
      %s292 = scalar_select %p291, %s288, 4
      %s293 = smul.addr %s290, 10
      %s294 = sadd.s32 %s292, %s293
      %s295 = smul.addr %s294, 8
      %s296 = scalar_lea.vmem %s6, %s295
      %s297 = smul.u32 5, %s22
      %p298 = scmp.lt.s32.totalorder %s21, 1
      %s299 = scalar_select %p298, %s21, 1
      %p300 = scmp.lt.s32.totalorder %s297, 4
      %s301 = scalar_select %p300, %s297, 4
      %s302 = smul.addr %s299, 10
      %s303 = sadd.s32 %s301, %s302
      %s304 = smul.addr %s303, 8
      %s305 = scalar_lea.vmem %s0, %s304
      %s306 = smul.u32 5, %s22
      %s307 = smul.u32 5, %s22
      %p308 = scmp.lt.s32.totalorder %s21, 1
      %s309 = scalar_select %p308, %s21, 1
      %p310 = scmp.lt.s32.totalorder %s307, 4
      %s311 = scalar_select %p310, %s307, 4
      %s312 = smul.addr %s309, 10
      %s313 = sadd.s32 %s311, %s312
      %s314 = smul.addr %s313, 8
      %s315 = scalar_lea.vmem %s1, %s314
      %s316 = smul.u32 5, %s22
      %s317 = smul.u32 5, %s22
      %p318 = scmp.lt.s32.totalorder %s21, 1
      %s319 = scalar_select %p318, %s21, 1
      %p320 = scmp.lt.s32.totalorder %s317, 4
      %s321 = scalar_select %p320, %s317, 4
      %s322 = smul.addr %s319, 10
      %s323 = sadd.s32 %s321, %s322
      %s324 = smul.addr %s323, 8
      %s325 = scalar_lea.vmem %s6, %s324
      %s326 = smul.u32 5, %s22
      %v327 = vld [vmem:[%s305] sm:$0xff]
      %v328 = vld [vmem:[%s305 + $0x8] sm:$0xff]
      %v329 = vld [vmem:[%s305 + $0x10] sm:$0xff]
      %v330 = vld [vmem:[%s305 + $0x18] sm:$0xff]
      %v331 = vld [vmem:[%s305 + $0x20] sm:$0xff]
      %v332 = vld [vmem:[%s305 + $0x28] sm:$0xff]
      %v333 = vld [vmem:[%s305 + $0x30] sm:$0xff]
      %v334 = vld [vmem:[%s305 + $0x38] sm:$0xff]
      %v335 = vld [vmem:[%s305 + $0x40] sm:$0xff]
      %v336 = vld [vmem:[%s305 + $0x48] sm:$0xff]
      %v337 = vld [vmem:[%s2] sm:$0xff]
      %v338 = vld [vmem:[%s2 + $0x8] sm:$0xff]
      %v339 = vld [vmem:[%s3] sm:$0xff]
      %v340 = vld [vmem:[%s3 + $0x8] sm:$0xff]
      %342 = vset.pattern.permute.xlu0 0
      %343 = vperm.xlu0 %342, %v339
      %v344 = vpop.permute.xlu0 %343
      %347 = vset.pattern.permute.xlu0 0
      %348 = vperm.xlu0 %347, %v340
      %v349 = vpop.permute.xlu0 %348
      %vm351 = vcmask 130048
      %v353 = vsel %vm351, %v337, 0
      %v356 = vsel %vm351, %v338, 0
      %358 = vmatpush.msra.mxu0 0.0
      %359 = vmatpush.msra.mxu0 0.0
      %360 = vmatpush.msra.mxu0 0.0
      %361 = vmatpush.msra.mxu0 0.0
      %362 = vmatpush.msra.mxu0 0.0
      %363 = vmatpush.msra.mxu0 0.0
      %364 = vmatpush.msra.mxu0 0.0
      %365 = vmatpush.msra.mxu0 0.0
      %366 = vmatpush.msra.mxu0 0.0
      %367 = vmatpush.msra.mxu0 0.0
      %368 = vmatpush.msra.mxu0 0.0
      %369 = vmatpush.msra.mxu0 0.0
      %370 = vmatpush.msra.mxu0 0.0
      %371 = vmatpush.msra.mxu0 0.0
      %372 = vmatpush.msra.mxu0 %v332
      %373 = vmatpush.msra.mxu0 %v327
      %374 = vmatmul.f32.gmra.mxu0 %v353
      %v375 = vpop.f32.mrf.mxu0
      %v376 = vadd.f32 %v344, %v375
      %377 = vmatmul.f32.gmra.mxu0 %v356
      %v378 = vpop.f32.mrf.mxu0
      %v379 = vadd.f32 %v349, %v378
      %380 = vdwg.mxu0
      %381 = vmatpush.msra.mxu0 0.0
      %382 = vmatpush.msra.mxu0 0.0
      %383 = vmatpush.msra.mxu0 0.0
      %384 = vmatpush.msra.mxu0 0.0
      %385 = vmatpush.msra.mxu0 0.0
      %386 = vmatpush.msra.mxu0 0.0
      %387 = vmatpush.msra.mxu0 0.0
      %388 = vmatpush.msra.mxu0 0.0
      %389 = vmatpush.msra.mxu0 0.0
      %390 = vmatpush.msra.mxu0 0.0
      %391 = vmatpush.msra.mxu0 0.0
      %392 = vmatpush.msra.mxu0 0.0
      %393 = vmatpush.msra.mxu0 0.0
      %394 = vmatpush.msra.mxu0 0.0
      %395 = vmatpush.msra.mxu0 %v333
      %396 = vmatpush.msra.mxu0 %v328
      %397 = vmatmul.f32.gmra.mxu0 %v353
      %v398 = vpop.f32.mrf.mxu0
      %v399 = vadd.f32 %v344, %v398
      %400 = vmatmul.f32.gmra.mxu0 %v356
      %v401 = vpop.f32.mrf.mxu0
      %v402 = vadd.f32 %v349, %v401
      %403 = vdwg.mxu0
      %404 = vmatpush.msra.mxu0 0.0
      %405 = vmatpush.msra.mxu0 0.0
      %406 = vmatpush.msra.mxu0 0.0
      %407 = vmatpush.msra.mxu0 0.0
      %408 = vmatpush.msra.mxu0 0.0
      %409 = vmatpush.msra.mxu0 0.0
      %410 = vmatpush.msra.mxu0 0.0
      %411 = vmatpush.msra.mxu0 0.0
      %412 = vmatpush.msra.mxu0 0.0
      %413 = vmatpush.msra.mxu0 0.0
      %414 = vmatpush.msra.mxu0 0.0
      %415 = vmatpush.msra.mxu0 0.0
      %416 = vmatpush.msra.mxu0 0.0
      %417 = vmatpush.msra.mxu0 0.0
      %418 = vmatpush.msra.mxu0 %v334
      %419 = vmatpush.msra.mxu0 %v329
      %420 = vmatmul.f32.gmra.mxu0 %v353
      %v421 = vpop.f32.mrf.mxu0
      %v422 = vadd.f32 %v344, %v421
      %423 = vmatmul.f32.gmra.mxu0 %v356
      %v424 = vpop.f32.mrf.mxu0
      %v425 = vadd.f32 %v349, %v424
      %426 = vdwg.mxu0
      %427 = vmatpush.msra.mxu0 0.0
      %428 = vmatpush.msra.mxu0 0.0
      %429 = vmatpush.msra.mxu0 0.0
      %430 = vmatpush.msra.mxu0 0.0
      %431 = vmatpush.msra.mxu0 0.0
      %432 = vmatpush.msra.mxu0 0.0
      %433 = vmatpush.msra.mxu0 0.0
      %434 = vmatpush.msra.mxu0 0.0
      %435 = vmatpush.msra.mxu0 0.0
      %436 = vmatpush.msra.mxu0 0.0
      %437 = vmatpush.msra.mxu0 0.0
      %438 = vmatpush.msra.mxu0 0.0
      %439 = vmatpush.msra.mxu0 0.0
      %440 = vmatpush.msra.mxu0 0.0
      %441 = vmatpush.msra.mxu0 %v335
      %442 = vmatpush.msra.mxu0 %v330
      %443 = vmatmul.f32.gmra.mxu0 %v353
      %v444 = vpop.f32.mrf.mxu0
      %v445 = vadd.f32 %v344, %v444
      %446 = vmatmul.f32.gmra.mxu0 %v356
      %v447 = vpop.f32.mrf.mxu0
      %v448 = vadd.f32 %v349, %v447
      %449 = vdwg.mxu0
      %450 = vmatpush.msra.mxu0 0.0
      %451 = vmatpush.msra.mxu0 0.0
      %452 = vmatpush.msra.mxu0 0.0
      %453 = vmatpush.msra.mxu0 0.0
      %454 = vmatpush.msra.mxu0 0.0
      %455 = vmatpush.msra.mxu0 0.0
      %456 = vmatpush.msra.mxu0 0.0
      %457 = vmatpush.msra.mxu0 0.0
      %458 = vmatpush.msra.mxu0 0.0
      %459 = vmatpush.msra.mxu0 0.0
      %460 = vmatpush.msra.mxu0 0.0
      %461 = vmatpush.msra.mxu0 0.0
      %462 = vmatpush.msra.mxu0 0.0
      %463 = vmatpush.msra.mxu0 0.0
      %464 = vmatpush.msra.mxu0 %v336
      %465 = vmatpush.msra.mxu0 %v331
      %466 = vmatmul.f32.gmra.mxu0 %v353
      %v467 = vpop.f32.mrf.mxu0
      %v468 = vadd.f32 %v344, %v467
      %469 = vmatmul.f32.gmra.mxu0 %v356
      %v470 = vpop.f32.mrf.mxu0
      %v471 = vadd.f32 %v349, %v470
      %472 = vdwg.mxu0
      %v473 = vmul.f32 %v376, 0.5
      %v474 = vmul.f32 %v399, 0.5
      %v475 = vmul.f32 %v422, 0.5
      %v476 = vmul.f32 %v445, 0.5
      %v477 = vmul.f32 %v468, 0.5
      %v478 = vmul.f32 %v379, 0.5
      %v479 = vmul.f32 %v402, 0.5
      %v480 = vmul.f32 %v425, 0.5
      %v481 = vmul.f32 %v448, 0.5
      %v482 = vmul.f32 %v471, 0.5
      %v483 = vmul.f32 %v376, 0.70710677
      %v484 = vmul.f32 %v399, 0.70710677
      %v485 = vmul.f32 %v422, 0.70710677
      %v486 = vmul.f32 %v445, 0.70710677
      %v487 = vmul.f32 %v468, 0.70710677
      %v488 = vmul.f32 %v379, 0.70710677
      %v489 = vmul.f32 %v402, 0.70710677
      %v490 = vmul.f32 %v425, 0.70710677
      %v491 = vmul.f32 %v448, 0.70710677
      %v492 = vmul.f32 %v471, 0.70710677
      %v493 = vmul.f32 %v483, %v483
      %v494 = vmin.f32 16.0, %v493
      %v495 = vmul.f32 %v494, 2.1237322e-06
      %v496 = vadd.f32 %v495, 0.00028619796
      %v497 = vmul.f32 %v494, %v496
      %v498 = vadd.f32 %v497, 0.0036580483
      %v499 = vmul.f32 %v494, %v498
      %v500 = vadd.f32 %v499, 0.05243302
      %v501 = vmul.f32 %v494, %v500
      %v502 = vadd.f32 %v501, 0.18741608
      %v503 = vmul.f32 %v494, %v502
      %v504 = vadd.f32 %v503, 1.1283791
      %v505 = vmul.f32 %v483, %v504
      %v506 = vmul.f32 %v494, 3.8918573e-05
      %v507 = vadd.f32 %v506, 0.001143296
      %v508 = vmul.f32 %v494, %v507
      %v509 = vadd.f32 %v508, 0.014752088
      %v510 = vmul.f32 %v494, %v509
      %v511 = vadd.f32 %v510, 0.112945676
      %v512 = vmul.f32 %v494, %v511
      %v513 = vadd.f32 %v512, 0.4994258
      %v514 = vmul.f32 %v494, %v513
      %v515 = vadd.f32 %v514, 1.0
      %v516 = vrcp.pop %v515
      %v517 = vmul.f32 %v515, %v516
      %v518 = vsub.f32 1.0, %v517
      %v519 = vmul.f32 %v516, %v518
      %v520 = vadd.f32 %v516, %v519
      %vm521 = vweird.f32 %v515
      %vm522 = vweird.f32 %v516
      %vm523 = vmor %vm521, %vm522
      %v524 = vsel %vm523, %v516, %v520
      %v525 = vand.u32 2147483647, %v515
      %vm526 = vcmp.eq.f32.partialorder %v525, 8.507059e+37
      %v527 = vand.u32 %v515, 2147483648
      %v528 = vor.u32 1.1754944e-38, %v527
      %v529 = vsel %vm526, %v528, %v524
      %v530 = vmul.f32 %v505, %v529
      %v531 = vmin.f32 %v530, 1.0
      %v532 = vmax.f32 %v531, -1.0
      %v533 = vmul.f32 %v484, %v484
      %v534 = vmin.f32 16.0, %v533
      %v535 = vmul.f32 %v534, 2.1237322e-06
      %v536 = vadd.f32 %v535, 0.00028619796
      %v537 = vmul.f32 %v534, %v536
      %v538 = vadd.f32 %v537, 0.0036580483
      %v539 = vmul.f32 %v534, %v538
      %v540 = vadd.f32 %v539, 0.05243302
      %v541 = vmul.f32 %v534, %v540
      %v542 = vadd.f32 %v541, 0.18741608
      %v543 = vmul.f32 %v534, %v542
      %v544 = vadd.f32 %v543, 1.1283791
      %v545 = vmul.f32 %v484, %v544
      %v546 = vmul.f32 %v534, 3.8918573e-05
      %v547 = vadd.f32 %v546, 0.001143296
      %v548 = vmul.f32 %v534, %v547
      %v549 = vadd.f32 %v548, 0.014752088
      %v550 = vmul.f32 %v534, %v549
      %v551 = vadd.f32 %v550, 0.112945676
      %v552 = vmul.f32 %v534, %v551
      %v553 = vadd.f32 %v552, 0.4994258
      %v554 = vmul.f32 %v534, %v553
      %v555 = vadd.f32 %v554, 1.0
      %v556 = vrcp.pop %v555
      %v557 = vmul.f32 %v555, %v556
      %v558 = vsub.f32 1.0, %v557
      %v559 = vmul.f32 %v556, %v558
      %v560 = vadd.f32 %v556, %v559
      %vm561 = vweird.f32 %v555
      %vm562 = vweird.f32 %v556
      %vm563 = vmor %vm561, %vm562
      %v564 = vsel %vm563, %v556, %v560
      %v565 = vand.u32 2147483647, %v555
      %vm566 = vcmp.eq.f32.partialorder %v565, 8.507059e+37
      %v567 = vand.u32 %v555, 2147483648
      %v568 = vor.u32 1.1754944e-38, %v567
      %v569 = vsel %vm566, %v568, %v564
      %v570 = vmul.f32 %v545, %v569
      %v571 = vmin.f32 %v570, 1.0
      %v572 = vmax.f32 %v571, -1.0
      %v573 = vmul.f32 %v485, %v485
      %v574 = vmin.f32 16.0, %v573
      %v575 = vmul.f32 %v574, 2.1237322e-06
      %v576 = vadd.f32 %v575, 0.00028619796
      %v577 = vmul.f32 %v574, %v576
      %v578 = vadd.f32 %v577, 0.0036580483
      %v579 = vmul.f32 %v574, %v578
      %v580 = vadd.f32 %v579, 0.05243302
      %v581 = vmul.f32 %v574, %v580
      %v582 = vadd.f32 %v581, 0.18741608
      %v583 = vmul.f32 %v574, %v582
      %v584 = vadd.f32 %v583, 1.1283791
      %v585 = vmul.f32 %v485, %v584
      %v586 = vmul.f32 %v574, 3.8918573e-05
      %v587 = vadd.f32 %v586, 0.001143296
      %v588 = vmul.f32 %v574, %v587
      %v589 = vadd.f32 %v588, 0.014752088
      %v590 = vmul.f32 %v574, %v589
      %v591 = vadd.f32 %v590, 0.112945676
      %v592 = vmul.f32 %v574, %v591
      %v593 = vadd.f32 %v592, 0.4994258
      %v594 = vmul.f32 %v574, %v593
      %v595 = vadd.f32 %v594, 1.0
      %v596 = vrcp.pop %v595
      %v597 = vmul.f32 %v595, %v596
      %v598 = vsub.f32 1.0, %v597
      %v599 = vmul.f32 %v596, %v598
      %v600 = vadd.f32 %v596, %v599
      %vm601 = vweird.f32 %v595
      %vm602 = vweird.f32 %v596
      %vm603 = vmor %vm601, %vm602
      %v604 = vsel %vm603, %v596, %v600
      %v605 = vand.u32 2147483647, %v595
      %vm606 = vcmp.eq.f32.partialorder %v605, 8.507059e+37
      %v607 = vand.u32 %v595, 2147483648
      %v608 = vor.u32 1.1754944e-38, %v607
      %v609 = vsel %vm606, %v608, %v604
      %v610 = vmul.f32 %v585, %v609
      %v611 = vmin.f32 %v610, 1.0
      %v612 = vmax.f32 %v611, -1.0
      %v613 = vmul.f32 %v486, %v486
      %v614 = vmin.f32 16.0, %v613
      %v615 = vmul.f32 %v614, 2.1237322e-06
      %v616 = vadd.f32 %v615, 0.00028619796
      %v617 = vmul.f32 %v614, %v616
      %v618 = vadd.f32 %v617, 0.0036580483
      %v619 = vmul.f32 %v614, %v618
      %v620 = vadd.f32 %v619, 0.05243302
      %v621 = vmul.f32 %v614, %v620
      %v622 = vadd.f32 %v621, 0.18741608
      %v623 = vmul.f32 %v614, %v622
      %v624 = vadd.f32 %v623, 1.1283791
      %v625 = vmul.f32 %v486, %v624
      %v626 = vmul.f32 %v614, 3.8918573e-05
      %v627 = vadd.f32 %v626, 0.001143296
      %v628 = vmul.f32 %v614, %v627
      %v629 = vadd.f32 %v628, 0.014752088
      %v630 = vmul.f32 %v614, %v629
      %v631 = vadd.f32 %v630, 0.112945676
      %v632 = vmul.f32 %v614, %v631
      %v633 = vadd.f32 %v632, 0.4994258
      %v634 = vmul.f32 %v614, %v633
      %v635 = vadd.f32 %v634, 1.0
      %v636 = vrcp.pop %v635
      %v637 = vmul.f32 %v635, %v636
      %v638 = vsub.f32 1.0, %v637
      %v639 = vmul.f32 %v636, %v638
      %v640 = vadd.f32 %v636, %v639
      %vm641 = vweird.f32 %v635
      %vm642 = vweird.f32 %v636
      %vm643 = vmor %vm641, %vm642
      %v644 = vsel %vm643, %v636, %v640
      %v645 = vand.u32 2147483647, %v635
      %vm646 = vcmp.eq.f32.partialorder %v645, 8.507059e+37
      %v647 = vand.u32 %v635, 2147483648
      %v648 = vor.u32 1.1754944e-38, %v647
      %v649 = vsel %vm646, %v648, %v644
      %v650 = vmul.f32 %v625, %v649
      %v651 = vmin.f32 %v650, 1.0
      %v652 = vmax.f32 %v651, -1.0
      %v653 = vmul.f32 %v487, %v487
      %v654 = vmin.f32 16.0, %v653
      %v655 = vmul.f32 %v654, 2.1237322e-06
      %v656 = vadd.f32 %v655, 0.00028619796
      %v657 = vmul.f32 %v654, %v656
      %v658 = vadd.f32 %v657, 0.0036580483
      %v659 = vmul.f32 %v654, %v658
      %v660 = vadd.f32 %v659, 0.05243302
      %v661 = vmul.f32 %v654, %v660
      %v662 = vadd.f32 %v661, 0.18741608
      %v663 = vmul.f32 %v654, %v662
      %v664 = vadd.f32 %v663, 1.1283791
      %v665 = vmul.f32 %v487, %v664
      %v666 = vmul.f32 %v654, 3.8918573e-05
      %v667 = vadd.f32 %v666, 0.001143296
      %v668 = vmul.f32 %v654, %v667
      %v669 = vadd.f32 %v668, 0.014752088
      %v670 = vmul.f32 %v654, %v669
      %v671 = vadd.f32 %v670, 0.112945676
      %v672 = vmul.f32 %v654, %v671
      %v673 = vadd.f32 %v672, 0.4994258
      %v674 = vmul.f32 %v654, %v673
      %v675 = vadd.f32 %v674, 1.0
      %v676 = vrcp.pop %v675
      %v677 = vmul.f32 %v675, %v676
      %v678 = vsub.f32 1.0, %v677
      %v679 = vmul.f32 %v676, %v678
      %v680 = vadd.f32 %v676, %v679
      %vm681 = vweird.f32 %v675
      %vm682 = vweird.f32 %v676
      %vm683 = vmor %vm681, %vm682
      %v684 = vsel %vm683, %v676, %v680
      %v685 = vand.u32 2147483647, %v675
      %vm686 = vcmp.eq.f32.partialorder %v685, 8.507059e+37
      %v687 = vand.u32 %v675, 2147483648
      %v688 = vor.u32 1.1754944e-38, %v687
      %v689 = vsel %vm686, %v688, %v684
      %v690 = vmul.f32 %v665, %v689
      %v691 = vmin.f32 %v690, 1.0
      %v692 = vmax.f32 %v691, -1.0
      %v693 = vmul.f32 %v488, %v488
      %v694 = vmin.f32 16.0, %v693
      %v695 = vmul.f32 %v694, 2.1237322e-06
      %v696 = vadd.f32 %v695, 0.00028619796
      %v697 = vmul.f32 %v694, %v696
      %v698 = vadd.f32 %v697, 0.0036580483
      %v699 = vmul.f32 %v694, %v698
      %v700 = vadd.f32 %v699, 0.05243302
      %v701 = vmul.f32 %v694, %v700
      %v702 = vadd.f32 %v701, 0.18741608
      %v703 = vmul.f32 %v694, %v702
      %v704 = vadd.f32 %v703, 1.1283791
      %v705 = vmul.f32 %v488, %v704
      %v706 = vmul.f32 %v694, 3.8918573e-05
      %v707 = vadd.f32 %v706, 0.001143296
      %v708 = vmul.f32 %v694, %v707
      %v709 = vadd.f32 %v708, 0.014752088
      %v710 = vmul.f32 %v694, %v709
      %v711 = vadd.f32 %v710, 0.112945676
      %v712 = vmul.f32 %v694, %v711
      %v713 = vadd.f32 %v712, 0.4994258
      %v714 = vmul.f32 %v694, %v713
      %v715 = vadd.f32 %v714, 1.0
      %v716 = vrcp.pop %v715
      %v717 = vmul.f32 %v715, %v716
      %v718 = vsub.f32 1.0, %v717
      %v719 = vmul.f32 %v716, %v718
      %v720 = vadd.f32 %v716, %v719
      %vm721 = vweird.f32 %v715
      %vm722 = vweird.f32 %v716
      %vm723 = vmor %vm721, %vm722
      %v724 = vsel %vm723, %v716, %v720
      %v725 = vand.u32 2147483647, %v715
      %vm726 = vcmp.eq.f32.partialorder %v725, 8.507059e+37
      %v727 = vand.u32 %v715, 2147483648
      %v728 = vor.u32 1.1754944e-38, %v727
      %v729 = vsel %vm726, %v728, %v724
      %v730 = vmul.f32 %v705, %v729
      %v731 = vmin.f32 %v730, 1.0
      %v732 = vmax.f32 %v731, -1.0
      %v733 = vmul.f32 %v489, %v489
      %v734 = vmin.f32 16.0, %v733
      %v735 = vmul.f32 %v734, 2.1237322e-06
      %v736 = vadd.f32 %v735, 0.00028619796
      %v737 = vmul.f32 %v734, %v736
      %v738 = vadd.f32 %v737, 0.0036580483
      %v739 = vmul.f32 %v734, %v738
      %v740 = vadd.f32 %v739, 0.05243302
      %v741 = vmul.f32 %v734, %v740
      %v742 = vadd.f32 %v741, 0.18741608
      %v743 = vmul.f32 %v734, %v742
      %v744 = vadd.f32 %v743, 1.1283791
      %v745 = vmul.f32 %v489, %v744
      %v746 = vmul.f32 %v734, 3.8918573e-05
      %v747 = vadd.f32 %v746, 0.001143296
      %v748 = vmul.f32 %v734, %v747
      %v749 = vadd.f32 %v748, 0.014752088
      %v750 = vmul.f32 %v734, %v749
      %v751 = vadd.f32 %v750, 0.112945676
      %v752 = vmul.f32 %v734, %v751
      %v753 = vadd.f32 %v752, 0.4994258
      %v754 = vmul.f32 %v734, %v753
      %v755 = vadd.f32 %v754, 1.0
      %v756 = vrcp.pop %v755
      %v757 = vmul.f32 %v755, %v756
      %v758 = vsub.f32 1.0, %v757
      %v759 = vmul.f32 %v756, %v758
      %v760 = vadd.f32 %v756, %v759
      %vm761 = vweird.f32 %v755
      %vm762 = vweird.f32 %v756
      %vm763 = vmor %vm761, %vm762
      %v764 = vsel %vm763, %v756, %v760
      %v765 = vand.u32 2147483647, %v755
      %vm766 = vcmp.eq.f32.partialorder %v765, 8.507059e+37
      %v767 = vand.u32 %v755, 2147483648
      %v768 = vor.u32 1.1754944e-38, %v767
      %v769 = vsel %vm766, %v768, %v764
      %v770 = vmul.f32 %v745, %v769
      %v771 = vmin.f32 %v770, 1.0
      %v772 = vmax.f32 %v771, -1.0
      %v773 = vmul.f32 %v490, %v490
      %v774 = vmin.f32 16.0, %v773
      %v775 = vmul.f32 %v774, 2.1237322e-06
      %v776 = vadd.f32 %v775, 0.00028619796
      %v777 = vmul.f32 %v774, %v776
      %v778 = vadd.f32 %v777, 0.0036580483
      %v779 = vmul.f32 %v774, %v778
      %v780 = vadd.f32 %v779, 0.05243302
      %v781 = vmul.f32 %v774, %v780
      %v782 = vadd.f32 %v781, 0.18741608
      %v783 = vmul.f32 %v774, %v782
      %v784 = vadd.f32 %v783, 1.1283791
      %v785 = vmul.f32 %v490, %v784
      %v786 = vmul.f32 %v774, 3.8918573e-05
      %v787 = vadd.f32 %v786, 0.001143296
      %v788 = vmul.f32 %v774, %v787
      %v789 = vadd.f32 %v788, 0.014752088
      %v790 = vmul.f32 %v774, %v789
      %v791 = vadd.f32 %v790, 0.112945676
      %v792 = vmul.f32 %v774, %v791
      %v793 = vadd.f32 %v792, 0.4994258
      %v794 = vmul.f32 %v774, %v793
      %v795 = vadd.f32 %v794, 1.0
      %v796 = vrcp.pop %v795
      %v797 = vmul.f32 %v795, %v796
      %v798 = vsub.f32 1.0, %v797
      %v799 = vmul.f32 %v796, %v798
      %v800 = vadd.f32 %v796, %v799
      %vm801 = vweird.f32 %v795
      %vm802 = vweird.f32 %v796
      %vm803 = vmor %vm801, %vm802
      %v804 = vsel %vm803, %v796, %v800
      %v805 = vand.u32 2147483647, %v795
      %vm806 = vcmp.eq.f32.partialorder %v805, 8.507059e+37
      %v807 = vand.u32 %v795, 2147483648
      %v808 = vor.u32 1.1754944e-38, %v807
      %v809 = vsel %vm806, %v808, %v804
      %v810 = vmul.f32 %v785, %v809
      %v811 = vmin.f32 %v810, 1.0
      %v812 = vmax.f32 %v811, -1.0
      %v813 = vmul.f32 %v491, %v491
      %v814 = vmin.f32 16.0, %v813
      %v815 = vmul.f32 %v814, 2.1237322e-06
      %v816 = vadd.f32 %v815, 0.00028619796
      %v817 = vmul.f32 %v814, %v816
      %v818 = vadd.f32 %v817, 0.0036580483
      %v819 = vmul.f32 %v814, %v818
      %v820 = vadd.f32 %v819, 0.05243302
      %v821 = vmul.f32 %v814, %v820
      %v822 = vadd.f32 %v821, 0.18741608
      %v823 = vmul.f32 %v814, %v822
      %v824 = vadd.f32 %v823, 1.1283791
      %v825 = vmul.f32 %v491, %v824
      %v826 = vmul.f32 %v814, 3.8918573e-05
      %v827 = vadd.f32 %v826, 0.001143296
      %v828 = vmul.f32 %v814, %v827
      %v829 = vadd.f32 %v828, 0.014752088
      %v830 = vmul.f32 %v814, %v829
      %v831 = vadd.f32 %v830, 0.112945676
      %v832 = vmul.f32 %v814, %v831
      %v833 = vadd.f32 %v832, 0.4994258
      %v834 = vmul.f32 %v814, %v833
      %v835 = vadd.f32 %v834, 1.0
      %v836 = vrcp.pop %v835
      %v837 = vmul.f32 %v835, %v836
      %v838 = vsub.f32 1.0, %v837
      %v839 = vmul.f32 %v836, %v838
      %v840 = vadd.f32 %v836, %v839
      %vm841 = vweird.f32 %v835
      %vm842 = vweird.f32 %v836
      %vm843 = vmor %vm841, %vm842
      %v844 = vsel %vm843, %v836, %v840
      %v845 = vand.u32 2147483647, %v835
      %vm846 = vcmp.eq.f32.partialorder %v845, 8.507059e+37
      %v847 = vand.u32 %v835, 2147483648
      %v848 = vor.u32 1.1754944e-38, %v847
      %v849 = vsel %vm846, %v848, %v844
      %v850 = vmul.f32 %v825, %v849
      %v851 = vmin.f32 %v850, 1.0
      %v852 = vmax.f32 %v851, -1.0
      %v853 = vmul.f32 %v492, %v492
      %v854 = vmin.f32 16.0, %v853
      %v855 = vmul.f32 %v854, 2.1237322e-06
      %v856 = vadd.f32 %v855, 0.00028619796
      %v857 = vmul.f32 %v854, %v856
      %v858 = vadd.f32 %v857, 0.0036580483
      %v859 = vmul.f32 %v854, %v858
      %v860 = vadd.f32 %v859, 0.05243302
      %v861 = vmul.f32 %v854, %v860
      %v862 = vadd.f32 %v861, 0.18741608
      %v863 = vmul.f32 %v854, %v862
      %v864 = vadd.f32 %v863, 1.1283791
      %v865 = vmul.f32 %v492, %v864
      %v866 = vmul.f32 %v854, 3.8918573e-05
      %v867 = vadd.f32 %v866, 0.001143296
      %v868 = vmul.f32 %v854, %v867
      %v869 = vadd.f32 %v868, 0.014752088
      %v870 = vmul.f32 %v854, %v869
      %v871 = vadd.f32 %v870, 0.112945676
      %v872 = vmul.f32 %v854, %v871
      %v873 = vadd.f32 %v872, 0.4994258
      %v874 = vmul.f32 %v854, %v873
      %v875 = vadd.f32 %v874, 1.0
      %v876 = vrcp.pop %v875
      %v877 = vmul.f32 %v875, %v876
      %v878 = vsub.f32 1.0, %v877
      %v879 = vmul.f32 %v876, %v878
      %v880 = vadd.f32 %v876, %v879
      %vm881 = vweird.f32 %v875
      %vm882 = vweird.f32 %v876
      %vm883 = vmor %vm881, %vm882
      %v884 = vsel %vm883, %v876, %v880
      %v885 = vand.u32 2147483647, %v875
      %vm886 = vcmp.eq.f32.partialorder %v885, 8.507059e+37
      %v887 = vand.u32 %v875, 2147483648
      %v888 = vor.u32 1.1754944e-38, %v887
      %v889 = vsel %vm886, %v888, %v884
      %v890 = vmul.f32 %v865, %v889
      %v891 = vmin.f32 %v890, 1.0
      %v892 = vmax.f32 %v891, -1.0
      %v893 = vadd.f32 %v532, 1.0
      %v894 = vadd.f32 %v572, 1.0
      %v895 = vadd.f32 %v612, 1.0
      %v896 = vadd.f32 %v652, 1.0
      %v897 = vadd.f32 %v692, 1.0
      %v898 = vadd.f32 %v732, 1.0
      %v899 = vadd.f32 %v772, 1.0
      %v900 = vadd.f32 %v812, 1.0
      %v901 = vadd.f32 %v852, 1.0
      %v902 = vadd.f32 %v892, 1.0
      %v903 = vmul.f32 %v473, %v893
      %v904 = vmul.f32 %v474, %v894
      %v905 = vmul.f32 %v475, %v895
      %v906 = vmul.f32 %v476, %v896
      %v907 = vmul.f32 %v477, %v897
      %v908 = vmul.f32 %v478, %v898
      %v909 = vmul.f32 %v479, %v899
      %v910 = vmul.f32 %v480, %v900
      %v911 = vmul.f32 %v481, %v901
      %v912 = vmul.f32 %v482, %v902
      %v913 = vld [vmem:[%s4] sm:$0xff]
      %v914 = vld [vmem:[%s4 + $0x8] sm:$0xff]
      %v915 = vld [vmem:[%s5] sm:$0xff]
      %v916 = vld [vmem:[%s5 + $0x8] sm:$0xff]
      %918 = vset.pattern.permute.xlu0 0
      %919 = vperm.xlu0 %918, %v915
      %v920 = vpop.permute.xlu0 %919
      %923 = vset.pattern.permute.xlu0 0
      %924 = vperm.xlu0 %923, %v916
      %v925 = vpop.permute.xlu0 %924
      %v928 = vsel %vm351, %v913, 0
      %v931 = vsel %vm351, %v914, 0
      %933 = vmatpush.msra.mxu0 0.0
      %934 = vmatpush.msra.mxu0 0.0
      %935 = vmatpush.msra.mxu0 0.0
      %936 = vmatpush.msra.mxu0 0.0
      %937 = vmatpush.msra.mxu0 0.0
      %938 = vmatpush.msra.mxu0 0.0
      %939 = vmatpush.msra.mxu0 0.0
      %940 = vmatpush.msra.mxu0 0.0
      %941 = vmatpush.msra.mxu0 0.0
      %942 = vmatpush.msra.mxu0 0.0
      %943 = vmatpush.msra.mxu0 0.0
      %944 = vmatpush.msra.mxu0 0.0
      %945 = vmatpush.msra.mxu0 0.0
      %946 = vmatpush.msra.mxu0 0.0
      %947 = vmatpush.msra.mxu0 %v908
      %948 = vmatpush.msra.mxu0 %v903
      %949 = vmatmul.f32.gmra.mxu0 %v928
      %v950 = vpop.f32.mrf.mxu0
      %v951 = vadd.f32 %v920, %v950
      %952 = vmatmul.f32.gmra.mxu0 %v931
      %v953 = vpop.f32.mrf.mxu0
      %v954 = vadd.f32 %v925, %v953
      %955 = vdwg.mxu0
      %956 = vmatpush.msra.mxu0 0.0
      %957 = vmatpush.msra.mxu0 0.0
      %958 = vmatpush.msra.mxu0 0.0
      %959 = vmatpush.msra.mxu0 0.0
      %960 = vmatpush.msra.mxu0 0.0
      %961 = vmatpush.msra.mxu0 0.0
      %962 = vmatpush.msra.mxu0 0.0
      %963 = vmatpush.msra.mxu0 0.0
      %964 = vmatpush.msra.mxu0 0.0
      %965 = vmatpush.msra.mxu0 0.0
      %966 = vmatpush.msra.mxu0 0.0
      %967 = vmatpush.msra.mxu0 0.0
      %968 = vmatpush.msra.mxu0 0.0
      %969 = vmatpush.msra.mxu0 0.0
      %970 = vmatpush.msra.mxu0 %v909
      %971 = vmatpush.msra.mxu0 %v904
      %972 = vmatmul.f32.gmra.mxu0 %v928
      %v973 = vpop.f32.mrf.mxu0
      %v974 = vadd.f32 %v920, %v973
      %975 = vmatmul.f32.gmra.mxu0 %v931
      %v976 = vpop.f32.mrf.mxu0
      %v977 = vadd.f32 %v925, %v976
      %978 = vdwg.mxu0
      %979 = vmatpush.msra.mxu0 0.0
      %980 = vmatpush.msra.mxu0 0.0
      %981 = vmatpush.msra.mxu0 0.0
      %982 = vmatpush.msra.mxu0 0.0
      %983 = vmatpush.msra.mxu0 0.0
      %984 = vmatpush.msra.mxu0 0.0
      %985 = vmatpush.msra.mxu0 0.0
      %986 = vmatpush.msra.mxu0 0.0
      %987 = vmatpush.msra.mxu0 0.0
      %988 = vmatpush.msra.mxu0 0.0
      %989 = vmatpush.msra.mxu0 0.0
      %990 = vmatpush.msra.mxu0 0.0
      %991 = vmatpush.msra.mxu0 0.0
      %992 = vmatpush.msra.mxu0 0.0
      %993 = vmatpush.msra.mxu0 %v910
      %994 = vmatpush.msra.mxu0 %v905
      %995 = vmatmul.f32.gmra.mxu0 %v928
      %v996 = vpop.f32.mrf.mxu0
      %v997 = vadd.f32 %v920, %v996
      %998 = vmatmul.f32.gmra.mxu0 %v931
      %v999 = vpop.f32.mrf.mxu0
      %v1000 = vadd.f32 %v925, %v999
      %1001 = vdwg.mxu0
      %1002 = vmatpush.msra.mxu0 0.0
      %1003 = vmatpush.msra.mxu0 0.0
      %1004 = vmatpush.msra.mxu0 0.0
      %1005 = vmatpush.msra.mxu0 0.0
      %1006 = vmatpush.msra.mxu0 0.0
      %1007 = vmatpush.msra.mxu0 0.0
      %1008 = vmatpush.msra.mxu0 0.0
      %1009 = vmatpush.msra.mxu0 0.0
      %1010 = vmatpush.msra.mxu0 0.0
      %1011 = vmatpush.msra.mxu0 0.0
      %1012 = vmatpush.msra.mxu0 0.0
      %1013 = vmatpush.msra.mxu0 0.0
      %1014 = vmatpush.msra.mxu0 0.0
      %1015 = vmatpush.msra.mxu0 0.0
      %1016 = vmatpush.msra.mxu0 %v911
      %1017 = vmatpush.msra.mxu0 %v906
      %1018 = vmatmul.f32.gmra.mxu0 %v928
      %v1019 = vpop.f32.mrf.mxu0
      %v1020 = vadd.f32 %v920, %v1019
      %1021 = vmatmul.f32.gmra.mxu0 %v931
      %v1022 = vpop.f32.mrf.mxu0
      %v1023 = vadd.f32 %v925, %v1022
      %1024 = vdwg.mxu0
      %1025 = vmatpush.msra.mxu0 0.0
      %1026 = vmatpush.msra.mxu0 0.0
      %1027 = vmatpush.msra.mxu0 0.0
      %1028 = vmatpush.msra.mxu0 0.0
      %1029 = vmatpush.msra.mxu0 0.0
      %1030 = vmatpush.msra.mxu0 0.0
      %1031 = vmatpush.msra.mxu0 0.0
      %1032 = vmatpush.msra.mxu0 0.0
      %1033 = vmatpush.msra.mxu0 0.0
      %1034 = vmatpush.msra.mxu0 0.0
      %1035 = vmatpush.msra.mxu0 0.0
      %1036 = vmatpush.msra.mxu0 0.0
      %1037 = vmatpush.msra.mxu0 0.0
      %1038 = vmatpush.msra.mxu0 0.0
      %1039 = vmatpush.msra.mxu0 %v912
      %1040 = vmatpush.msra.mxu0 %v907
      %1041 = vmatmul.f32.gmra.mxu0 %v928
      %v1042 = vpop.f32.mrf.mxu0
      %v1043 = vadd.f32 %v920, %v1042
      %1044 = vmatmul.f32.gmra.mxu0 %v931
      %v1045 = vpop.f32.mrf.mxu0
      %v1046 = vadd.f32 %v925, %v1045
      %1047 = vdwg.mxu0
      %v1048 = vld [vmem:[%s315] sm:$0xff]
      %v1049 = vld [vmem:[%s315 + $0x8] sm:$0xff]
      %v1050 = vld [vmem:[%s315 + $0x10] sm:$0xff]
      %v1051 = vld [vmem:[%s315 + $0x18] sm:$0xff]
      %v1052 = vld [vmem:[%s315 + $0x20] sm:$0xff]
      %v1053 = vld [vmem:[%s315 + $0x28] sm:$0xff]
      %v1054 = vld [vmem:[%s315 + $0x30] sm:$0xff]
      %v1055 = vld [vmem:[%s315 + $0x38] sm:$0xff]
      %v1056 = vld [vmem:[%s315 + $0x40] sm:$0xff]
      %v1057 = vld [vmem:[%s315 + $0x48] sm:$0xff]
      %v1058 = vadd.f32 %v951, %v1048
      %v1059 = vadd.f32 %v974, %v1049
      %v1060 = vadd.f32 %v997, %v1050
      %v1061 = vadd.f32 %v1020, %v1051
      %v1062 = vadd.f32 %v1043, %v1052
      %v1063 = vadd.f32 %v954, %v1053
      %v1064 = vadd.f32 %v977, %v1054
      %v1065 = vadd.f32 %v1000, %v1055
      %v1066 = vadd.f32 %v1023, %v1056
      %v1067 = vadd.f32 %v1046, %v1057
      %1068 = vst [vmem:[%s325] sm:$0xff] %v1058
      %1069 = vst [vmem:[%s325 + $0x8] sm:$0xff] %v1059
      %1070 = vst [vmem:[%s325 + $0x10] sm:$0xff] %v1060
      %1071 = vst [vmem:[%s325 + $0x18] sm:$0xff] %v1061
      %1072 = vst [vmem:[%s325 + $0x20] sm:$0xff] %v1062
      %1073 = vst [vmem:[%s325 + $0x28] sm:$0xff] %v1063
      %1074 = vst [vmem:[%s325 + $0x30] sm:$0xff] %v1064
      %1075 = vst [vmem:[%s325 + $0x38] sm:$0xff] %v1065
      %1076 = vst [vmem:[%s325 + $0x40] sm:$0xff] %v1066
      %1077 = vst [vmem:[%s325 + $0x48] sm:$0xff] %v1067
      %s1078 = smul.u32 5, %s22
      %p1079 = scmp.lt.s32.totalorder %s21, 1
      %s1080 = scalar_select %p1079, %s21, 1
      %p1081 = scmp.lt.s32.totalorder %s1078, 4
      %s1082 = scalar_select %p1081, %s1078, 4
      %s1083 = smul.addr %s1080, 10
      %s1084 = sadd.s32 %s1082, %s1083
      %s1085 = smul.addr %s1084, 8
      %s1086 = scalar_lea.vmem %s6, %s1085
      // Predicated region
      $region45: #{fno2d_forward.18} parent=43 // pred_check
        %p1087 = pneg %p189
      $region46: #{fno2d_forward.18} parent=43 // pred_check_branch
        %1089 = sbr.rel (%p1087) target = $region48
      $region47: #{fno2d_forward.18} parent=43 // pred_region
        %s1090 = smul.u32 5, %s22
      $region48: #{fno2d_forward.18} parent=43 // pred_fallthru
        _
    $region44: #{fno2d_forward.18} parent=5 // pred_fallthru
      _
    %p1091 = scmp.le.s32.totalorder 2, %s12
    // Predicated region
    $region49: #{fno2d_forward.18} parent=5 // pred_check
      %p1092 = pneg %p1091
    $region50: #{fno2d_forward.18} parent=5 // pred_check_branch
      %1094 = sbr.rel (%p1092) target = $region52
    $region51: #{fno2d_forward.18} parent=5 // pred_region
      %s1095 = ssub.s32 %s12, 2
      // Predicated region
      $region53: #{fno2d_forward.18} parent=51 // pred_check
        %p1096 = pneg %p195
      $region54: #{fno2d_forward.18} parent=51 // pred_check_branch
        %1098 = sbr.rel (%p1096) target = $region56
      $region55: #{fno2d_forward.18} parent=51 // pred_region
        %s1099 = smul.u32 5, %s24
        %p1100 = scmp.lt.s32.totalorder %s23, 1
        %s1101 = scalar_select %p1100, %s23, 1
        %p1102 = scmp.lt.s32.totalorder %s1099, 4
        %s1103 = scalar_select %p1102, %s1099, 4
        %s1104 = smul.addr %s1101, 10
        %s1105 = sadd.s32 %s1103, %s1104
        %s1106 = smul.addr %s1105, 8
        %s1107 = scalar_lea.vmem %s6, %s1106
      $region56: #{fno2d_forward.18} parent=51 // pred_fallthru
        _
    $region52: #{fno2d_forward.18} parent=5 // pred_fallthru
      _
  $region6: #{fno2d_forward.18} parent=0 // loop_footer
    %s16 = sadd.s32 1, %s12
  $region7: #{fno2d_forward.18} parent=0 // loop_footer_branch
    %11 = sbr.rel target = $region3
  $region8: #{fno2d_forward.18} parent=0 // loop_exit
    _

// kernel: fno2d_forward.19
$region0: #{fno2d_forward.19}
  #allocation0 [shape = 'u32[]', space=smem, size = 0x4, offset = 0x4, fixed_abs, tag = 'smem constant byte address 0x4 - core index']
  #allocation1 [shape = 'u32[72,128]{1,0:T(1,128)}', space=vmem, size = 0x9000, scoped, tag = 'internal scratch']
  #allocation2 [shape = 'f32[1,1]{1,0:T(1,128)S(1)}', space=vmem, size = 0x200, scoped, tag = 'scoped memory for fno2d_forward.19']
  %s0 = inlined_call_operand.vmem [shape: f32[2,16,256], index: 0, kind: input, shape index: {}]
  %s1 = inlined_call_operand.vmem [shape: f32[16,16], index: 1, kind: input, shape index: {}]
  %s2 = inlined_call_operand.vmem [shape: f32[16,1], index: 2, kind: input, shape index: {}]
  %s3 = inlined_call_operand.vmem [shape: f32[1,16], index: 3, kind: input, shape index: {}]
  %s4 = inlined_call_operand.<no memory space> [shape: f32[1,1], index: 4, kind: input, shape index: {}]
  %s5 = inlined_call_operand.vmem [shape: f32[2,1,256], index: 5, kind: output, shape index: {}]
  %s6 = sld [smem:[#allocation0]]
  $region53: #{fno2d_forward.19} parent=0
    _
  %s8 = ssub.s32 1, %s6
  %s9 = scalar_select 0, %s8, %s6
  %v10 = vstv %s4
  %11 = vst [vmem:[#allocation2] sm:$0x1] %v10
  loop: start=0, step=1, limit=4
  $region2: #{fno2d_forward.19} parent=0 // loop_pre_header
    _
  $region3: #{fno2d_forward.19} parent=0 // loop_header
    %s13 = sphi 0, %s17
    %p14 = scmp.ge.s32.totalorder %s13, 4
    %s20 = sphi 0, %s32
    %s21 = sphi 0, %s28
    %s22 = sphi 0, %s20
    %s23 = sphi 0, %s21
    %s24 = sphi 0, %s22
    %s25 = sphi 0, %s23
    %s37 = sphi 0, %s39
    %s40 = sphi 0, %s37
    %s41 = sphi 0, %s40
    %s57 = sphi 0, %s41
    %s61 = sphi 0, %s61
    %s63 = sphi 0, %s61
    %s64 = sphi 0, %s63
    %s78 = sphi 0, %s64
    %s82 = sphi 0, %s82
    %s84 = sphi 0, %s82
    %s85 = sphi 0, %s84
    %s99 = sphi 0, %s85
    %s103 = sphi 0, %s103
    %s105 = sphi 0, %s103
    %s106 = sphi 0, %s105
    %s120 = sphi 0, %s106
    %s124 = sphi 0, %s124
    %s126 = sphi 0, %s124
    %s127 = sphi 0, %s126
    %s141 = sphi 0, %s127
    %s149 = sphi 0, %s151
    %s152 = sphi 0, %s149
    %s153 = sphi 0, %s152
    %s169 = sphi 0, %s153
  $region4: #{fno2d_forward.19} parent=0 // loop_header_branch
    %16 = sbr.rel (%p14) target = $region8
  $region5: #{fno2d_forward.19} parent=0 // loop_body
    %s18 = ssub.s32 %s13, 1
    %s19 = ssub.s32 %s13, 2
    %s26 = sadd.s32 1, %s21
    %p27 = scmp.ge.s32.totalorder %s26, 1
    %s28 = scalar_select %p27, 0, %s26
    %s29 = sadd.s32 1, %s20
    %s30 = scalar_select %p27, %s29, %s20
    %p31 = scmp.ge.s32.totalorder %s30, 2
    %s32 = scalar_select %p31, 0, %s30
    %s33 = ssub.s32 %s20, %s32
    %s34 = ssub.s32 %s21, %s28
    %s35 = sor.u32 %s33, %s34
    %p36 = scmp.eq.s32.totalorder %s35, 0
    %s38 = sadd.s32 %s37, 1
    %s39 = scalar_select %p36, %s37, %s38
    %p42 = pneg %p36
    %p43 = scmp.eq.s32.totalorder %s13, 1
    %p44 = por %p42, %p43
    %p45 = scmp.ne.s32.totalorder %s37, %s40
    %p46 = scmp.eq.s32.totalorder %s13, 0
    %p47 = por %p45, %p46
    %p48 = scmp.ne.s32.totalorder %s37, %s40
    %p49 = scmp.eq.s32.totalorder %s18, 1
    %p50 = por %p48, %p49
    %p51 = scmp.ne.s32.totalorder %s40, %s41
    %p52 = scmp.eq.s32.totalorder %s18, 0
    %p53 = por %p51, %p52
    %p54 = scmp.ne.s32.totalorder %s40, %s41
    %p55 = scmp.eq.s32.totalorder %s19, 1
    %p56 = por %p54, %p55
    %p58 = scmp.ne.s32.totalorder %s41, %s57
    %p59 = scmp.eq.s32.totalorder %s19, 0
    %p60 = por %p58, %p59
    %s62 = sadd.s32 %s61, 1
    %p65 = scmp.eq.s32.totalorder %s13, 1
    %p66 = scmp.ne.s32.totalorder %s61, %s63
    %p67 = scmp.eq.s32.totalorder %s13, 0
    %p68 = por %p66, %p67
    %p69 = scmp.ne.s32.totalorder %s61, %s63
    %p70 = scmp.eq.s32.totalorder %s18, 1
    %p71 = por %p69, %p70
    %p72 = scmp.ne.s32.totalorder %s63, %s64
    %p73 = scmp.eq.s32.totalorder %s18, 0
    %p74 = por %p72, %p73
    %p75 = scmp.ne.s32.totalorder %s63, %s64
    %p76 = scmp.eq.s32.totalorder %s19, 1
    %p77 = por %p75, %p76
    %p79 = scmp.ne.s32.totalorder %s64, %s78
    %p80 = scmp.eq.s32.totalorder %s19, 0
    %p81 = por %p79, %p80
    %s83 = sadd.s32 %s82, 1
    %p86 = scmp.eq.s32.totalorder %s13, 1
    %p87 = scmp.ne.s32.totalorder %s82, %s84
    %p88 = scmp.eq.s32.totalorder %s13, 0
    %p89 = por %p87, %p88
    %p90 = scmp.ne.s32.totalorder %s82, %s84
    %p91 = scmp.eq.s32.totalorder %s18, 1
    %p92 = por %p90, %p91
    %p93 = scmp.ne.s32.totalorder %s84, %s85
    %p94 = scmp.eq.s32.totalorder %s18, 0
    %p95 = por %p93, %p94
    %p96 = scmp.ne.s32.totalorder %s84, %s85
    %p97 = scmp.eq.s32.totalorder %s19, 1
    %p98 = por %p96, %p97
    %p100 = scmp.ne.s32.totalorder %s85, %s99
    %p101 = scmp.eq.s32.totalorder %s19, 0
    %p102 = por %p100, %p101
    %s104 = sadd.s32 %s103, 1
    %p107 = scmp.eq.s32.totalorder %s13, 1
    %p108 = scmp.ne.s32.totalorder %s103, %s105
    %p109 = scmp.eq.s32.totalorder %s13, 0
    %p110 = por %p108, %p109
    %p111 = scmp.ne.s32.totalorder %s103, %s105
    %p112 = scmp.eq.s32.totalorder %s18, 1
    %p113 = por %p111, %p112
    %p114 = scmp.ne.s32.totalorder %s105, %s106
    %p115 = scmp.eq.s32.totalorder %s18, 0
    %p116 = por %p114, %p115
    %p117 = scmp.ne.s32.totalorder %s105, %s106
    %p118 = scmp.eq.s32.totalorder %s19, 1
    %p119 = por %p117, %p118
    %p121 = scmp.ne.s32.totalorder %s106, %s120
    %p122 = scmp.eq.s32.totalorder %s19, 0
    %p123 = por %p121, %p122
    %s125 = sadd.s32 %s124, 1
    %p128 = scmp.eq.s32.totalorder %s13, 1
    %p129 = scmp.ne.s32.totalorder %s124, %s126
    %p130 = scmp.eq.s32.totalorder %s13, 0
    %p131 = por %p129, %p130
    %p132 = scmp.ne.s32.totalorder %s124, %s126
    %p133 = scmp.eq.s32.totalorder %s18, 1
    %p134 = por %p132, %p133
    %p135 = scmp.ne.s32.totalorder %s126, %s127
    %p136 = scmp.eq.s32.totalorder %s18, 0
    %p137 = por %p135, %p136
    %p138 = scmp.ne.s32.totalorder %s126, %s127
    %p139 = scmp.eq.s32.totalorder %s19, 1
    %p140 = por %p138, %p139
    %p142 = scmp.ne.s32.totalorder %s127, %s141
    %p143 = scmp.eq.s32.totalorder %s19, 0
    %p144 = por %p142, %p143
    %s145 = ssub.s32 %s20, %s32
    %s146 = ssub.s32 %s21, %s28
    %s147 = sor.u32 %s145, %s146
    %p148 = scmp.eq.s32.totalorder %s147, 0
    %s150 = sadd.s32 %s149, 1
    %s151 = scalar_select %p148, %s149, %s150
    %p154 = pneg %p148
    %p155 = scmp.eq.s32.totalorder %s13, 1
    %p156 = por %p154, %p155
    %p157 = scmp.ne.s32.totalorder %s149, %s152
    %p158 = scmp.eq.s32.totalorder %s13, 0
    %p159 = por %p157, %p158
    %p160 = scmp.ne.s32.totalorder %s149, %s152
    %p161 = scmp.eq.s32.totalorder %s18, 1
    %p162 = por %p160, %p161
    %p163 = scmp.ne.s32.totalorder %s152, %s153
    %p164 = scmp.eq.s32.totalorder %s18, 0
    %p165 = por %p163, %p164
    %p166 = scmp.ne.s32.totalorder %s152, %s153
    %p167 = scmp.eq.s32.totalorder %s19, 1
    %p168 = por %p166, %p167
    %p170 = scmp.ne.s32.totalorder %s153, %s169
    %p171 = scmp.eq.s32.totalorder %s19, 0
    %p172 = por %p170, %p171
    %p173 = scmp.le.s32.totalorder 1, %s13
    %p174 = scmp.lt.s32.totalorder %s13, 3
    %p175 = pnand %p173, %p174
    %p176 = pneg %p175
    // Predicated region
    $region9: #{fno2d_forward.19} parent=5 // pred_check
      _
    $region10: #{fno2d_forward.19} parent=5 // pred_check_branch
      %178 = sbr.rel (%p175) target = $region12
    $region11: #{fno2d_forward.19} parent=5 // pred_region
      %s179 = ssub.s32 %s13, 1
      // Predicated region
      $region13: #{fno2d_forward.19} parent=11 // pred_check
        %p180 = pneg %p74
      $region14: #{fno2d_forward.19} parent=11 // pred_check_branch
        %182 = sbr.rel (%p180) target = $region16
      $region15: #{fno2d_forward.19} parent=11 // pred_region
        _
      $region16: #{fno2d_forward.19} parent=11 // pred_fallthru
        _
      // Predicated region
      $region17: #{fno2d_forward.19} parent=11 // pred_check
        %p183 = pneg %p95
      $region18: #{fno2d_forward.19} parent=11 // pred_check_branch
        %185 = sbr.rel (%p183) target = $region20
      $region19: #{fno2d_forward.19} parent=11 // pred_region
        _
      $region20: #{fno2d_forward.19} parent=11 // pred_fallthru
        _
      // Predicated region
      $region21: #{fno2d_forward.19} parent=11 // pred_check
        %p186 = pneg %p116
      $region22: #{fno2d_forward.19} parent=11 // pred_check_branch
        %188 = sbr.rel (%p186) target = $region24
      $region23: #{fno2d_forward.19} parent=11 // pred_region
        _
      $region24: #{fno2d_forward.19} parent=11 // pred_fallthru
        _
      // Predicated region
      $region25: #{fno2d_forward.19} parent=11 // pred_check
        %p189 = pneg %p137
      $region26: #{fno2d_forward.19} parent=11 // pred_check_branch
        %191 = sbr.rel (%p189) target = $region28
      $region27: #{fno2d_forward.19} parent=11 // pred_region
        _
      $region28: #{fno2d_forward.19} parent=11 // pred_fallthru
        _
    $region12: #{fno2d_forward.19} parent=5 // pred_fallthru
      _
    %p192 = scmp.lt.s32.totalorder %s13, 2
    // Predicated region
    $region29: #{fno2d_forward.19} parent=5 // pred_check
      %p193 = pneg %p192
    $region30: #{fno2d_forward.19} parent=5 // pred_check_branch
      %195 = sbr.rel (%p193) target = $region32
    $region31: #{fno2d_forward.19} parent=5 // pred_region
      // Predicated region
      $region33: #{fno2d_forward.19} parent=31 // pred_check
        %p196 = pneg %p47
      $region34: #{fno2d_forward.19} parent=31 // pred_check_branch
        %198 = sbr.rel (%p196) target = $region36
      $region35: #{fno2d_forward.19} parent=31 // pred_region
        %s199 = smul.u32 2, %s21
        %p200 = scmp.lt.s32.totalorder %s20, 1
        %s201 = scalar_select %p200, %s20, 1
        %p202 = scmp.lt.s32.totalorder %s199, 1
        %s203 = scalar_select %p202, %s199, 1
        %s204 = smul.addr %s201, 4
        %s205 = sadd.s32 %s203, %s204
        %s206 = smul.addr %s205, 8
        %s207 = scalar_lea.vmem %s0, %s206
        %s208 = smul.u32 2, %s21
      $region36: #{fno2d_forward.19} parent=31 // pred_fallthru
        _
    $region32: #{fno2d_forward.19} parent=5 // pred_fallthru
      _
    %p209 = scmp.le.s32.totalorder 1, %s13
    %p210 = scmp.lt.s32.totalorder %s13, 3
    %p211 = pnand %p209, %p210
    %p212 = pneg %p211
    // Predicated region
    $region37: #{fno2d_forward.19} parent=5 // pred_check
      _
    $region38: #{fno2d_forward.19} parent=5 // pred_check_branch
      %214 = sbr.rel (%p211) target = $region40
    $region39: #{fno2d_forward.19} parent=5 // pred_region
      %s215 = ssub.s32 %s13, 1
      %s216 = smul.u32 2, %s23
      %p217 = scmp.lt.s32.totalorder %s22, 1
      %s218 = scalar_select %p217, %s22, 1
      %p219 = scmp.lt.s32.totalorder %s216, 1
      %s220 = scalar_select %p219, %s216, 1
      %s221 = smul.addr %s218, 4
      %s222 = sadd.s32 %s220, %s221
      %s223 = smul.addr %s222, 8
      %s224 = scalar_lea.vmem %s0, %s223
      %p225 = pneg %p53
      %p226 = pneg %p50
      %p227 = pneg %p74
      %p228 = pneg %p71
      %p229 = pneg %p95
      %p230 = pneg %p92
      %p231 = pneg %p116
      %p232 = pneg %p113
      %p233 = pneg %p137
      %p234 = pneg %p134
      %p235 = pneg %p165
      %p236 = pneg %p162
      %s237 = smul.u32 2, %s23
      %p238 = scmp.lt.s32.totalorder %s22, 1
      %s239 = scalar_select %p238, %s22, 1
      %p240 = scmp.lt.s32.totalorder %s237, 1
      %s241 = scalar_select %p240, %s237, 1
      %s242 = smul.addr %s239, 2
      %s243 = sadd.s32 %s241, %s242
      %s244 = scalar_lea.vmem %s5, %s243
      %s245 = smul.u32 2, %s23
      %p246 = scmp.lt.s32.totalorder %s22, 1
      %s247 = scalar_select %p246, %s22, 1
      %p248 = scmp.lt.s32.totalorder %s245, 1
      %s249 = scalar_select %p248, %s245, 1
      %s250 = smul.addr %s247, 4
      %s251 = sadd.s32 %s249, %s250
      %s252 = smul.addr %s251, 8
      %s253 = scalar_lea.vmem %s0, %s252
      %s254 = smul.u32 2, %s23
      %s255 = smul.u32 2, %s23
      %p256 = scmp.lt.s32.totalorder %s22, 1
      %s257 = scalar_select %p256, %s22, 1
      %p258 = scmp.lt.s32.totalorder %s255, 1
      %s259 = scalar_select %p258, %s255, 1
      %s260 = smul.addr %s257, 2
      %s261 = sadd.s32 %s259, %s260
      %s262 = scalar_lea.vmem %s5, %s261
      %s263 = smul.u32 2, %s23
      %v264 = vld [vmem:[%s1] sm:$0xff]
      %v265 = vld [vmem:[%s1 + $0x8] sm:$0xff]
      %v266 = vld [vmem:[%s253] sm:$0xff]
      %v267 = vld [vmem:[%s253 + $0x8] sm:$0xff]
      %v268 = vld [vmem:[%s253 + $0x10] sm:$0xff]
      %v269 = vld [vmem:[%s253 + $0x18] sm:$0xff]
      %v270 = vld [vmem:[%s2] sm:$0xff]
      %v271 = vld [vmem:[%s2 + $0x8] sm:$0xff]
      %273 = vset.pattern.permute.xlu0 0
      %274 = vperm.xlu0 %273, %v270
      %v275 = vpop.permute.xlu0 %274
      %278 = vset.pattern.permute.xlu0 0
      %279 = vperm.xlu0 %278, %v271
      %v280 = vpop.permute.xlu0 %279
      %vm282 = vcmask 130048
      %v284 = vsel %vm282, %v264, 0
      %v287 = vsel %vm282, %v265, 0
      %289 = vmatpush.msra.mxu0 0.0
      %290 = vmatpush.msra.mxu0 0.0
      %291 = vmatpush.msra.mxu0 0.0
      %292 = vmatpush.msra.mxu0 0.0
      %293 = vmatpush.msra.mxu0 0.0
      %294 = vmatpush.msra.mxu0 0.0
      %295 = vmatpush.msra.mxu0 0.0
      %296 = vmatpush.msra.mxu0 0.0
      %297 = vmatpush.msra.mxu0 0.0
      %298 = vmatpush.msra.mxu0 0.0
      %299 = vmatpush.msra.mxu0 0.0
      %300 = vmatpush.msra.mxu0 0.0
      %301 = vmatpush.msra.mxu0 0.0
      %302 = vmatpush.msra.mxu0 0.0
      %303 = vmatpush.msra.mxu0 %v268
      %304 = vmatpush.msra.mxu0 %v266
      %305 = vmatmul.f32.gmra.mxu0 %v284
      %v306 = vpop.f32.mrf.mxu0
      %v307 = vadd.f32 %v275, %v306
      %308 = vmatmul.f32.gmra.mxu0 %v287
      %v309 = vpop.f32.mrf.mxu0
      %v310 = vadd.f32 %v280, %v309
      %311 = vdwg.mxu0
      %312 = vmatpush.msra.mxu0 0.0
      %313 = vmatpush.msra.mxu0 0.0
      %314 = vmatpush.msra.mxu0 0.0
      %315 = vmatpush.msra.mxu0 0.0
      %316 = vmatpush.msra.mxu0 0.0
      %317 = vmatpush.msra.mxu0 0.0
      %318 = vmatpush.msra.mxu0 0.0
      %319 = vmatpush.msra.mxu0 0.0
      %320 = vmatpush.msra.mxu0 0.0
      %321 = vmatpush.msra.mxu0 0.0
      %322 = vmatpush.msra.mxu0 0.0
      %323 = vmatpush.msra.mxu0 0.0
      %324 = vmatpush.msra.mxu0 0.0
      %325 = vmatpush.msra.mxu0 0.0
      %326 = vmatpush.msra.mxu0 %v269
      %327 = vmatpush.msra.mxu0 %v267
      %328 = vmatmul.f32.gmra.mxu0 %v284
      %v329 = vpop.f32.mrf.mxu0
      %v330 = vadd.f32 %v275, %v329
      %331 = vmatmul.f32.gmra.mxu0 %v287
      %v332 = vpop.f32.mrf.mxu0
      %v333 = vadd.f32 %v280, %v332
      %334 = vdwg.mxu0
      %v335 = vmul.f32 %v307, 0.5
      %v336 = vmul.f32 %v330, 0.5
      %v337 = vmul.f32 %v310, 0.5
      %v338 = vmul.f32 %v333, 0.5
      %v339 = vmul.f32 %v307, 0.70710677
      %v340 = vmul.f32 %v330, 0.70710677
      %v341 = vmul.f32 %v310, 0.70710677
      %v342 = vmul.f32 %v333, 0.70710677
      %v343 = vmul.f32 %v339, %v339
      %v344 = vmin.f32 16.0, %v343
      %v345 = vmul.f32 %v344, 2.1237322e-06
      %v346 = vadd.f32 %v345, 0.00028619796
      %v347 = vmul.f32 %v344, %v346
      %v348 = vadd.f32 %v347, 0.0036580483
      %v349 = vmul.f32 %v344, %v348
      %v350 = vadd.f32 %v349, 0.05243302
      %v351 = vmul.f32 %v344, %v350
      %v352 = vadd.f32 %v351, 0.18741608
      %v353 = vmul.f32 %v344, %v352
      %v354 = vadd.f32 %v353, 1.1283791
      %v355 = vmul.f32 %v339, %v354
      %v356 = vmul.f32 %v344, 3.8918573e-05
      %v357 = vadd.f32 %v356, 0.001143296
      %v358 = vmul.f32 %v344, %v357
      %v359 = vadd.f32 %v358, 0.014752088
      %v360 = vmul.f32 %v344, %v359
      %v361 = vadd.f32 %v360, 0.112945676
      %v362 = vmul.f32 %v344, %v361
      %v363 = vadd.f32 %v362, 0.4994258
      %v364 = vmul.f32 %v344, %v363
      %v365 = vadd.f32 %v364, 1.0
      %v366 = vrcp.pop %v365
      %v367 = vmul.f32 %v365, %v366
      %v368 = vsub.f32 1.0, %v367
      %v369 = vmul.f32 %v366, %v368
      %v370 = vadd.f32 %v366, %v369
      %vm371 = vweird.f32 %v365
      %vm372 = vweird.f32 %v366
      %vm373 = vmor %vm371, %vm372
      %v374 = vsel %vm373, %v366, %v370
      %v375 = vand.u32 2147483647, %v365
      %vm376 = vcmp.eq.f32.partialorder %v375, 8.507059e+37
      %v377 = vand.u32 %v365, 2147483648
      %v378 = vor.u32 1.1754944e-38, %v377
      %v379 = vsel %vm376, %v378, %v374
      %v380 = vmul.f32 %v355, %v379
      %v381 = vmin.f32 %v380, 1.0
      %v382 = vmax.f32 %v381, -1.0
      %v383 = vmul.f32 %v340, %v340
      %v384 = vmin.f32 16.0, %v383
      %v385 = vmul.f32 %v384, 2.1237322e-06
      %v386 = vadd.f32 %v385, 0.00028619796
      %v387 = vmul.f32 %v384, %v386
      %v388 = vadd.f32 %v387, 0.0036580483
      %v389 = vmul.f32 %v384, %v388
      %v390 = vadd.f32 %v389, 0.05243302
      %v391 = vmul.f32 %v384, %v390
      %v392 = vadd.f32 %v391, 0.18741608
      %v393 = vmul.f32 %v384, %v392
      %v394 = vadd.f32 %v393, 1.1283791
      %v395 = vmul.f32 %v340, %v394
      %v396 = vmul.f32 %v384, 3.8918573e-05
      %v397 = vadd.f32 %v396, 0.001143296
      %v398 = vmul.f32 %v384, %v397
      %v399 = vadd.f32 %v398, 0.014752088
      %v400 = vmul.f32 %v384, %v399
      %v401 = vadd.f32 %v400, 0.112945676
      %v402 = vmul.f32 %v384, %v401
      %v403 = vadd.f32 %v402, 0.4994258
      %v404 = vmul.f32 %v384, %v403
      %v405 = vadd.f32 %v404, 1.0
      %v406 = vrcp.pop %v405
      %v407 = vmul.f32 %v405, %v406
      %v408 = vsub.f32 1.0, %v407
      %v409 = vmul.f32 %v406, %v408
      %v410 = vadd.f32 %v406, %v409
      %vm411 = vweird.f32 %v405
      %vm412 = vweird.f32 %v406
      %vm413 = vmor %vm411, %vm412
      %v414 = vsel %vm413, %v406, %v410
      %v415 = vand.u32 2147483647, %v405
      %vm416 = vcmp.eq.f32.partialorder %v415, 8.507059e+37
      %v417 = vand.u32 %v405, 2147483648
      %v418 = vor.u32 1.1754944e-38, %v417
      %v419 = vsel %vm416, %v418, %v414
      %v420 = vmul.f32 %v395, %v419
      %v421 = vmin.f32 %v420, 1.0
      %v422 = vmax.f32 %v421, -1.0
      %v423 = vmul.f32 %v341, %v341
      %v424 = vmin.f32 16.0, %v423
      %v425 = vmul.f32 %v424, 2.1237322e-06
      %v426 = vadd.f32 %v425, 0.00028619796
      %v427 = vmul.f32 %v424, %v426
      %v428 = vadd.f32 %v427, 0.0036580483
      %v429 = vmul.f32 %v424, %v428
      %v430 = vadd.f32 %v429, 0.05243302
      %v431 = vmul.f32 %v424, %v430
      %v432 = vadd.f32 %v431, 0.18741608
      %v433 = vmul.f32 %v424, %v432
      %v434 = vadd.f32 %v433, 1.1283791
      %v435 = vmul.f32 %v341, %v434
      %v436 = vmul.f32 %v424, 3.8918573e-05
      %v437 = vadd.f32 %v436, 0.001143296
      %v438 = vmul.f32 %v424, %v437
      %v439 = vadd.f32 %v438, 0.014752088
      %v440 = vmul.f32 %v424, %v439
      %v441 = vadd.f32 %v440, 0.112945676
      %v442 = vmul.f32 %v424, %v441
      %v443 = vadd.f32 %v442, 0.4994258
      %v444 = vmul.f32 %v424, %v443
      %v445 = vadd.f32 %v444, 1.0
      %v446 = vrcp.pop %v445
      %v447 = vmul.f32 %v445, %v446
      %v448 = vsub.f32 1.0, %v447
      %v449 = vmul.f32 %v446, %v448
      %v450 = vadd.f32 %v446, %v449
      %vm451 = vweird.f32 %v445
      %vm452 = vweird.f32 %v446
      %vm453 = vmor %vm451, %vm452
      %v454 = vsel %vm453, %v446, %v450
      %v455 = vand.u32 2147483647, %v445
      %vm456 = vcmp.eq.f32.partialorder %v455, 8.507059e+37
      %v457 = vand.u32 %v445, 2147483648
      %v458 = vor.u32 1.1754944e-38, %v457
      %v459 = vsel %vm456, %v458, %v454
      %v460 = vmul.f32 %v435, %v459
      %v461 = vmin.f32 %v460, 1.0
      %v462 = vmax.f32 %v461, -1.0
      %v463 = vmul.f32 %v342, %v342
      %v464 = vmin.f32 16.0, %v463
      %v465 = vmul.f32 %v464, 2.1237322e-06
      %v466 = vadd.f32 %v465, 0.00028619796
      %v467 = vmul.f32 %v464, %v466
      %v468 = vadd.f32 %v467, 0.0036580483
      %v469 = vmul.f32 %v464, %v468
      %v470 = vadd.f32 %v469, 0.05243302
      %v471 = vmul.f32 %v464, %v470
      %v472 = vadd.f32 %v471, 0.18741608
      %v473 = vmul.f32 %v464, %v472
      %v474 = vadd.f32 %v473, 1.1283791
      %v475 = vmul.f32 %v342, %v474
      %v476 = vmul.f32 %v464, 3.8918573e-05
      %v477 = vadd.f32 %v476, 0.001143296
      %v478 = vmul.f32 %v464, %v477
      %v479 = vadd.f32 %v478, 0.014752088
      %v480 = vmul.f32 %v464, %v479
      %v481 = vadd.f32 %v480, 0.112945676
      %v482 = vmul.f32 %v464, %v481
      %v483 = vadd.f32 %v482, 0.4994258
      %v484 = vmul.f32 %v464, %v483
      %v485 = vadd.f32 %v484, 1.0
      %v486 = vrcp.pop %v485
      %v487 = vmul.f32 %v485, %v486
      %v488 = vsub.f32 1.0, %v487
      %v489 = vmul.f32 %v486, %v488
      %v490 = vadd.f32 %v486, %v489
      %vm491 = vweird.f32 %v485
      %vm492 = vweird.f32 %v486
      %vm493 = vmor %vm491, %vm492
      %v494 = vsel %vm493, %v486, %v490
      %v495 = vand.u32 2147483647, %v485
      %vm496 = vcmp.eq.f32.partialorder %v495, 8.507059e+37
      %v497 = vand.u32 %v485, 2147483648
      %v498 = vor.u32 1.1754944e-38, %v497
      %v499 = vsel %vm496, %v498, %v494
      %v500 = vmul.f32 %v475, %v499
      %v501 = vmin.f32 %v500, 1.0
      %v502 = vmax.f32 %v501, -1.0
      %v503 = vadd.f32 %v382, 1.0
      %v504 = vadd.f32 %v422, 1.0
      %v505 = vadd.f32 %v462, 1.0
      %v506 = vadd.f32 %v502, 1.0
      %v507 = vmul.f32 %v335, %v503
      %v508 = vmul.f32 %v336, %v504
      %v509 = vmul.f32 %v337, %v505
      %v510 = vmul.f32 %v338, %v506
      %v511 = vld [vmem:[%s3] sm:$0x1]
      %v512 = vld [vmem:[#allocation2] sm:$0x1]
      %514 = vset.pattern.permute.xlu0 0
      %515 = vperm.xlu0 %514, %v512
      %v516 = vpop.permute.xlu0 %515
      %v518 = vperm.slane %v516, 0
      %v520 = vsel %vm282, %v511, 0
      %522 = vmatpush.msra.mxu0 0.0
      %523 = vmatpush.msra.mxu0 0.0
      %524 = vmatpush.msra.mxu0 0.0
      %525 = vmatpush.msra.mxu0 0.0
      %526 = vmatpush.msra.mxu0 0.0
      %527 = vmatpush.msra.mxu0 0.0
      %528 = vmatpush.msra.mxu0 0.0
      %529 = vmatpush.msra.mxu0 0.0
      %530 = vmatpush.msra.mxu0 0.0
      %531 = vmatpush.msra.mxu0 0.0
      %532 = vmatpush.msra.mxu0 0.0
      %533 = vmatpush.msra.mxu0 0.0
      %534 = vmatpush.msra.mxu0 0.0
      %535 = vmatpush.msra.mxu0 0.0
      %536 = vmatpush.msra.mxu0 %v509
      %537 = vmatpush.msra.mxu0 %v507
      %538 = vmatmul.f32.gmra.mxu0 %v520
      %v539 = vpop.f32.mrf.mxu0
      %v540 = vadd.f32 %v518, %v539
      %541 = vdwg.mxu0
      %542 = vmatpush.msra.mxu0 0.0
      %543 = vmatpush.msra.mxu0 0.0
      %544 = vmatpush.msra.mxu0 0.0
      %545 = vmatpush.msra.mxu0 0.0
      %546 = vmatpush.msra.mxu0 0.0
      %547 = vmatpush.msra.mxu0 0.0
      %548 = vmatpush.msra.mxu0 0.0
      %549 = vmatpush.msra.mxu0 0.0
      %550 = vmatpush.msra.mxu0 0.0
      %551 = vmatpush.msra.mxu0 0.0
      %552 = vmatpush.msra.mxu0 0.0
      %553 = vmatpush.msra.mxu0 0.0
      %554 = vmatpush.msra.mxu0 0.0
      %555 = vmatpush.msra.mxu0 0.0
      %556 = vmatpush.msra.mxu0 %v510
      %557 = vmatpush.msra.mxu0 %v508
      %558 = vmatmul.f32.gmra.mxu0 %v520
      %v559 = vpop.f32.mrf.mxu0
      %v560 = vadd.f32 %v518, %v559
      %561 = vdwg.mxu0
      %v564 = vrot.slane %v560, 7
      %vm565 = vcmask 1040384
      %v566 = vsel %vm565, %v540, %v564
      %v568 = vlaneseq
      %vm569 = vcmp.ge.s32.totalorder %v568, 0
      %vm570 = vcmp.lt.s32.totalorder %v568, 256
      %vm571 = vmand %vm569, %vm570
      %572 = vst.msk [vmem:[%s262] sm:$0x3] %vm571, %v566
      %s573 = smul.u32 2, %s23
      %p574 = scmp.lt.s32.totalorder %s22, 1
      %s575 = scalar_select %p574, %s22, 1
      %p576 = scmp.lt.s32.totalorder %s573, 1
      %s577 = scalar_select %p576, %s573, 1
      %s578 = smul.addr %s575, 2
      %s579 = sadd.s32 %s577, %s578
      %s580 = scalar_lea.vmem %s5, %s579
      // Predicated region
      $region41: #{fno2d_forward.19} parent=39 // pred_check
        %p581 = pneg %p162
      $region42: #{fno2d_forward.19} parent=39 // pred_check_branch
        %583 = sbr.rel (%p581) target = $region44
      $region43: #{fno2d_forward.19} parent=39 // pred_region
        %s584 = smul.u32 2, %s23
      $region44: #{fno2d_forward.19} parent=39 // pred_fallthru
        _
    $region40: #{fno2d_forward.19} parent=5 // pred_fallthru
      _
    %p585 = scmp.le.s32.totalorder 2, %s13
    // Predicated region
    $region45: #{fno2d_forward.19} parent=5 // pred_check
      %p586 = pneg %p585
    $region46: #{fno2d_forward.19} parent=5 // pred_check_branch
      %588 = sbr.rel (%p586) target = $region48
    $region47: #{fno2d_forward.19} parent=5 // pred_region
      %s589 = ssub.s32 %s13, 2
      // Predicated region
      $region49: #{fno2d_forward.19} parent=47 // pred_check
        %p590 = pneg %p168
      $region50: #{fno2d_forward.19} parent=47 // pred_check_branch
        %592 = sbr.rel (%p590) target = $region52
      $region51: #{fno2d_forward.19} parent=47 // pred_region
        %s593 = smul.u32 2, %s25
        %p594 = scmp.lt.s32.totalorder %s24, 1
        %s595 = scalar_select %p594, %s24, 1
        %p596 = scmp.lt.s32.totalorder %s593, 1
        %s597 = scalar_select %p596, %s593, 1
        %s598 = smul.addr %s595, 2
        %s599 = sadd.s32 %s597, %s598
        %s600 = scalar_lea.vmem %s5, %s599
      $region52: #{fno2d_forward.19} parent=47 // pred_fallthru
        _
    $region48: #{fno2d_forward.19} parent=5 // pred_fallthru
      _
  $region6: #{fno2d_forward.19} parent=0 // loop_footer
    %s17 = sadd.s32 1, %s13
  $region7: #{fno2d_forward.19} parent=0 // loop_footer_branch
    %12 = sbr.rel target = $region3
  $region8: #{fno2d_forward.19} parent=0 // loop_exit
    _

</llo_original>
